<compile_context>
chip_gen: v7x
topology: tpu7x:2x2x1
jax: 0.10.0
libtpu: 0.0.40
codegen_flags: <defaults>
</compile_context>

<pallas_src>
import jax
import jax.numpy as jnp
from jax.experimental import pallas as pl
from jax.experimental.pallas import tpu as pltpu


def _net_head_kernel(f_ref, w_ref, b_ref, logits_ref, logsm_ref, acc_ref):
    """One (n, k) grid step of: avg-pool + Linear(2048,2) + log_softmax.

    f_ref:      (N_t, K_t)  feature block (K = C*H*W), native dtype (e.g. bf16)
    w_ref:      (2,  K_t)   expanded weight block, f32 (W[o,c]/S repeated over S)
    b_ref:      (1,  2)     Linear bias
    logits_ref: (N_t, 2)    output block (written on last K step)
    logsm_ref:  (N_t, 2)    output block (written on last K step)
    acc_ref:    (N_t, 2)    f32 scratch: partial logits across the K grid axis
    """
    k = pl.program_id(1)

    @pl.when(k == 0)
    def _init():
        acc_ref[...] = jnp.zeros_like(acc_ref)

    # bf16 -> f32 after load (stream narrow, accumulate wide).
    f = f_ref[...].astype(jnp.float32)                        # (N_t, K_t)
    w = w_ref[...]                                            # (2,  K_t), lane-dense
    # Contract over K: f @ w.T  ->  (N_t, 2); MXU, f32 accumulate.
    acc_ref[...] += jax.lax.dot_general(
        f, w,
        dimension_numbers=(((1,), (1,)), ((), ())),
        preferred_element_type=jnp.float32)

    @pl.when(k == pl.num_programs(1) - 1)
    def _finalize():
        logits = acc_ref[...] + b_ref[...]                    # (N_t, 2)
        logits_ref[...] = logits
        # F.log_softmax(x, dim=1), numerically stable.
        m = jnp.max(logits, axis=-1, keepdims=True)
        z = logits - m
        lse = jnp.log(jnp.sum(jnp.exp(z), axis=-1, keepdims=True))
        logsm_ref[...] = z - lse


def _largest_dividing_tile(total, target, quantum=128):
    """Largest multiple of `quantum` that divides `total` and is <= target."""
    target = max(quantum, min(total, target))
    t = (target // quantum) * quantum
    while t > quantum and total % t != 0:
        t -= quantum
    if total % t != 0:   # safety net (never hit when quantum | total)
        t = total
    return t


def net_forward(features_nchw, weight, bias, *, target_block_bytes=2 * 1024 * 1024):
    """features_nchw: (N, 2048, H, W) backbone output, NCHW, native dtype (e.g. bf16).
    weight: (2, 2048) PyTorch-convention Linear weight.  bias: (2,).
    Returns (logits, log_softmax), each (N, 2) f32, matching Net.forward.
    """
    N, C, H, W = features_nchw.shape
    assert C == 2048, "Net.Linear_layer expects 2048 input features"
    S = H * W
    K = C * S

    # Free reshape (collapses contiguous trailing dims, no transpose / no HBM copy).
    f_flat = features_nchw.reshape(N, K)

    # Fold the average pool into the weight: w_exp[o, c*S + s] = W[o, c] / S,
    # matching the NCHW flattening order (channel-major, spatial within).
    w_exp = jnp.repeat(jnp.asarray(weight, jnp.float32), S, axis=1) * (1.0 / float(S))  # (2, K)
    b2d = jnp.asarray(bias, jnp.float32).reshape(1, 2)

    # Tile sizes.  Batch tile: full N (small batches) or 8 (8-sublane aligned).
    n_tile = N if (N <= 8 or N % 8 != 0) else 8
    itemsize = jnp.dtype(features_nchw.dtype).itemsize
    k_target = max(128, target_block_bytes // max(1, n_tile * itemsize))
    k_tile = _largest_dividing_tile(K, k_target)
    grid = (N // n_tile, K // k_tile)

    logits, logsm = pl.pallas_call(
        _net_head_kernel,
        out_shape=(
            jax.ShapeDtypeStruct((N, 2), jnp.float32),
            jax.ShapeDtypeStruct((N, 2), jnp.float32),
        ),
        grid_spec=pltpu.PrefetchScalarGridSpec(
            num_scalar_prefetch=0,
            grid=grid,
            in_specs=[
                pl.BlockSpec((n_tile, k_tile), lambda n, k: (n, k)),   # features
                pl.BlockSpec((2, k_tile), lambda n, k: (0, k)),        # expanded weight
                pl.BlockSpec((1, 2), lambda n, k: (0, 0)),             # bias
            ],
            out_specs=[
                pl.BlockSpec((n_tile, 2), lambda n, k: (n, 0)),        # logits
                pl.BlockSpec((n_tile, 2), lambda n, k: (n, 0)),        # log_softmax
            ],
            scratch_shapes=[pltpu.VMEM((n_tile, 2), jnp.float32)],     # logits accumulator
        ),
        compiler_params=pltpu.CompilerParams(
            dimension_semantics=("parallel", "arbitrary"),
            vmem_limit_bytes=32 * 1024 * 1024,
        ),
    )(f_flat, w_exp, b2d)
    return logits, logsm


def _reference(features_nchw, weight, bias):
    """Plain-JAX reference mirroring the PyTorch forward (in f32)."""
    f = features_nchw.astype(jnp.float32)
    pooled = jnp.mean(f, axis=(2, 3))               # AdaptiveAvgPool2d((1,1))
    flat = pooled.reshape(f.shape[0], -1)           # x.view(N, -1)
    logits = flat @ weight.T + bias                 # Linear(2048, 2)
    logsm = jax.nn.log_softmax(logits, axis=1)      # F.log_softmax(dim=1)
    return logits, logsm


if __name__ == "__main__":
    key = jax.random.PRNGKey(0)
    k_feat, k_w, k_b = jax.random.split(key, 3)

    # Small, deterministic stand-in for the ResNet backbone's pre-pool output,
    # streamed in its native bf16.
    N, C, H, W = 2, 2048, 4, 4
    features = jax.random.normal(k_feat, (N, C, H, W), jnp.float32).astype(jnp.bfloat16)

    # Deterministic Linear(2048, 2) init (PyTorch-style uniform bound 1/sqrt(fan_in)).
    bound = 1.0 / jnp.sqrt(2048.0)
    weight = jax.random.uniform(k_w, (2, 2048), jnp.float32, -bound, bound)
    bias = jax.random.uniform(k_b, (2,), jnp.float32, -bound, bound)

    # Small block target so the test exercises multi-step K accumulation
    # (init / accumulate / finalize across the reduction grid axis).
    logits, logsm = net_forward(features, weight, bias, target_block_bytes=32 * 1024)
    jax.block_until_ready((logits, logsm))

    ref_logits, ref_logsm = _reference(features, weight, bias)
    assert logits.shape == (N, 2) and logsm.shape == (N, 2)
    # bf16 feature streaming + different accumulation order => slightly looser tol.
    assert jnp.allclose(logits, ref_logits, atol=2e-3, rtol=2e-3)
    assert jnp.allclose(logsm, ref_logsm, atol=2e-3, rtol=2e-3)

    print("KERNEL_OK")
</pallas_src>

<mosaic_0001>
module attributes {stable_mosaic.version = 11 : i64} {
  func.func @_net_head_kernel(%arg0: i32, %arg1: i32, %arg2: memref<2x8192xbf16, #tpu.memory_space<vmem>>, %arg3: memref<2x8192xf32, #tpu.memory_space<vmem>>, %arg4: memref<1x2xf32, #tpu.memory_space<vmem>>, %arg5: memref<2x2xf32, #tpu.memory_space<vmem>>, %arg6: memref<2x2xf32, #tpu.memory_space<vmem>>, %arg7: memref<2x2xf32, #tpu.memory_space<vmem>>) attributes {dimension_semantics = [#tpu.dimension_semantics<parallel>, #tpu.dimension_semantics<arbitrary>], iteration_bounds = array<i64: 1, 4>, scalar_prefetch = 0 : i64, scratch_operands = 1 : i64, tpu.core_type = #tpu.core_type<tc>, window_params = [{transform_indices = @transform_0, window_bounds = array<i64: 2, 8192>}, {transform_indices = @transform_1, window_bounds = array<i64: 2, 8192>}, {pipeline_mode = #tpu.pipeline_mode<synchronous>, transform_indices = @transform_2, window_bounds = array<i64: 1, 2>}, {transform_indices = @transform_3, window_bounds = array<i64: 2, 2>}, {transform_indices = @transform_4, window_bounds = array<i64: 2, 2>}]} {
    %c0_i32 = arith.constant 0 : i32
    %0 = arith.cmpi eq, %arg1, %c0_i32 : i32
    %1 = arith.extui %0 : i1 to i32
    %c0_i32_0 = arith.constant 0 : i32
    %2 = arith.cmpi ne, %1, %c0_i32_0 : i32
    scf.if %2 {
      %cst_9 = arith.constant 0.000000e+00 : f32
      %13 = vector.broadcast %cst_9 : f32 to vector<2x2xf32>
      %c0_10 = arith.constant 0 : index
      %c0_11 = arith.constant 0 : index
      %14 = vector.load %arg7[%c0_10, %c0_11] : memref<2x2xf32, #tpu.memory_space<vmem>>, vector<2x2xf32>
      tpu.vector_store %arg7[%c0_10, %c0_11], %13 {strides = array<i32>} : memref<2x2xf32, #tpu.memory_space<vmem>>, vector<2x2xf32>,
    } else {
    }
    %c0 = arith.constant 0 : index
    %c0_1 = arith.constant 0 : index
    %3 = vector.load %arg2[%c0, %c0_1] : memref<2x8192xbf16, #tpu.memory_space<vmem>>, vector<2x8192xbf16>
    %4 = arith.extf %3 : vector<2x8192xbf16> to vector<2x8192xf32>
    %c0_2 = arith.constant 0 : index
    %c0_3 = arith.constant 0 : index
    %5 = vector.load %arg3[%c0_2, %c0_3] : memref<2x8192xf32, #tpu.memory_space<vmem>>, vector<2x8192xf32>
    %c0_4 = arith.constant 0 : index
    %c0_5 = arith.constant 0 : index
    %6 = vector.load %arg7[%c0_4, %c0_5] : memref<2x2xf32, #tpu.memory_space<vmem>>, vector<2x2xf32>
    %cst = arith.constant dense<0.000000e+00> : vector<2x2xf32>
    %7 = tpu.matmul %4, %5, %cst {dimension_numbers = #tpu.dot_dimension_numbers<[1], [1], [0], [0], [0, 0, 1, 0], [], []>} : vector<2x8192xf32>, vector<2x8192xf32>, vector<2x2xf32> -> vector<2x2xf32>
    %8 = arith.addf %6, %7 : vector<2x2xf32>
    %c0_6 = arith.constant 0 : index
    %c0_7 = arith.constant 0 : index
    %9 = vector.load %arg7[%c0_6, %c0_7] : memref<2x2xf32, #tpu.memory_space<vmem>>, vector<2x2xf32>
    tpu.vector_store %arg7[%c0_6, %c0_7], %8 {strides = array<i32>} : memref<2x2xf32, #tpu.memory_space<vmem>>, vector<2x2xf32>,
    %c3_i32 = arith.constant 3 : i32
    %10 = arith.cmpi eq, %arg1, %c3_i32 : i32
    %11 = arith.extui %10 : i1 to i32
    %c0_i32_8 = arith.constant 0 : i32
    %12 = arith.cmpi ne, %11, %c0_i32_8 : i32
    scf.if %12 {
      %c0_9 = arith.constant 0 : index
      %c0_10 = arith.constant 0 : index
      %13 = vector.load %arg7[%c0_9, %c0_10] : memref<2x2xf32, #tpu.memory_space<vmem>>, vector<2x2xf32>
      %c0_11 = arith.constant 0 : index
      %c0_12 = arith.constant 0 : index
      %14 = vector.load %arg4[%c0_11, %c0_12] : memref<1x2xf32, #tpu.memory_space<vmem>>, vector<1x2xf32>
      %15 = vector.broadcast %14 : vector<1x2xf32> to vector<2x2xf32>
      %16 = arith.addf %13, %15 : vector<2x2xf32>
      %c0_13 = arith.constant 0 : index
      %c0_14 = arith.constant 0 : index
      %17 = vector.load %arg5[%c0_13, %c0_14] : memref<2x2xf32, #tpu.memory_space<vmem>>, vector<2x2xf32>
      tpu.vector_store %arg5[%c0_13, %c0_14], %16 {strides = array<i32>} : memref<2x2xf32, #tpu.memory_space<vmem>>, vector<2x2xf32>,
      %cst_15 = arith.constant dense<0xFF800000> : vector<2xf32>
      %18 = vector.multi_reduction <maximumf>, %16, %cst_15 [1] : vector<2x2xf32> to vector<2xf32>
      %19 = vector.shape_cast %18 : vector<2xf32> to vector<2x1xf32>
      %20 = vector.broadcast %19 : vector<2x1xf32> to vector<2x2xf32>
      %21 = arith.subf %16, %20 : vector<2x2xf32>
      %22 = math.exp %21 : vector<2x2xf32>
      %cst_16 = arith.constant dense<0.000000e+00> : vector<2xf32>
      %23 = vector.multi_reduction <add>, %22, %cst_16 [1] : vector<2x2xf32> to vector<2xf32>
      %24 = vector.shape_cast %23 : vector<2xf32> to vector<2x1xf32>
      %25 = math.log %24 : vector<2x1xf32>
      %26 = vector.broadcast %25 : vector<2x1xf32> to vector<2x2xf32>
      %27 = arith.subf %21, %26 : vector<2x2xf32>
      %c0_17 = arith.constant 0 : index
      %c0_18 = arith.constant 0 : index
      %28 = vector.load %arg6[%c0_17, %c0_18] : memref<2x2xf32, #tpu.memory_space<vmem>>, vector<2x2xf32>
      tpu.vector_store %arg6[%c0_17, %c0_18], %27 {strides = array<i32>} : memref<2x2xf32, #tpu.memory_space<vmem>>, vector<2x2xf32>,
    } else {
    }
    return
  }
  func.func @transform_0(%arg0: i32, %arg1: i32) -> (i32, i32) {
    %c0_i32 = arith.constant 0 : i32
    return %arg0, %arg1 : i32, i32
  }
  func.func @transform_1(%arg0: i32, %arg1: i32) -> (i32, i32) {
    %c0_i32 = arith.constant 0 : i32
    %c0_i32_0 = arith.constant 0 : i32
    return %c0_i32, %arg1 : i32, i32
  }
  func.func @transform_2(%arg0: i32, %arg1: i32) -> (i32, i32) {
    %c0_i32 = arith.constant 0 : i32
    %c0_i32_0 = arith.constant 0 : i32
    %c0_i32_1 = arith.constant 0 : i32
    return %c0_i32, %c0_i32_0 : i32, i32
  }
  func.func @transform_3(%arg0: i32, %arg1: i32) -> (i32, i32) {
    %c0_i32 = arith.constant 0 : i32
    %c0_i32_0 = arith.constant 0 : i32
    return %arg0, %c0_i32 : i32, i32
  }
  func.func @transform_4(%arg0: i32, %arg1: i32) -> (i32, i32) {
    %c0_i32 = arith.constant 0 : i32
    %c0_i32_0 = arith.constant 0 : i32
    return %arg0, %c0_i32 : i32, i32
  }
}

</mosaic_0001>

<llo_original>
// kernel: tpu_custom_call.1
$region0: #{tpu_custom_call.1}
  #allocation0 [shape = 'u32[]', space=smem, size = 0x4, offset = 0x4, fixed_abs, tag = 'smem constant byte address 0x4 - core index']
  #allocation1 [shape = 'u32[144,128]{1,0:T(1,128)}', space=vmem, size = 0x12000, scoped, tag = 'internal scratch']
  #allocation2 [shape = 'f32[2,2]{1,0:T(2,128)}', space=vmem, size = 0x400, scoped, tag = 'scratch operand']
  %s0 = inlined_call_operand.hbm [shape: bf16[2,32768], index: 0, kind: input, shape index: {}]
  %s1 = inlined_call_operand.hbm [shape: f32[2,32768], index: 1, kind: input, shape index: {}]
  %s2 = inlined_call_operand.vmem [shape: f32[1,2], index: 2, kind: input, shape index: {}]
  %s3 = inlined_call_operand.hbm [shape: f32[2,2], index: 3, kind: output, shape index: {0}]
  %s4 = inlined_call_operand.hbm [shape: f32[2,2], index: 4, kind: output, shape index: {1}]
  %5 = xla_tuple %s3, %s4
  %s6 = sld [smem:[#allocation0]]
  $region69: #{tpu_custom_call.1} parent=0
    _
  %s8 = ssub.s32 1, %s6
  %s9 = scalar_select 0, %s8, %s6
  $region1: #{tpu_custom_call.1} parent=0
    #allocation3 [shape = 'u8[65536]{0}', space=vmem, size = 0x10000, scoped, tag = 'input window, operand 0']
    #allocation4 [shape = 's32[2]{0}', space=sflag, size = 0x8, scoped, tag = 'scoped memory for tpu_custom_call.1']
    #allocation5 [shape = 's32[2]{0}', space=sflag, size = 0x8, scoped, tag = 'scoped memory for tpu_custom_call.1']
    #allocation6 [shape = 'u8[131072]{0}', space=vmem, size = 0x20000, scoped, tag = 'input window, operand 1']
    #allocation7 [shape = 's32[2]{0}', space=sflag, size = 0x8, scoped, tag = 'scoped memory for tpu_custom_call.1']
    #allocation8 [shape = 'u8[1024]{0}', space=vmem, size = 0x400, scoped, tag = 'output window, operand 0, single buffered']
    #allocation9 [shape = 'u8[1024]{0}', space=vmem, size = 0x400, scoped, tag = 'output window, operand 1, single buffered']
    #allocation10 [shape = 's32[1]{0}', space=sflag, size = 0x4, scoped, tag = 'scoped memory for tpu_custom_call.1']
    %10 = vsyncpa [#allocation4], 0
    %s11 = scalar_lea.sflag [#allocation4], 1
    %12 = vsyncpa %s11, 0
    %13 = vsyncpa [#allocation7], 0
    %s14 = scalar_lea.sflag [#allocation7], 1
    %15 = vsyncpa %s14, 0
    %16 = vsyncpa [#allocation5], 0
    %17 = vsyncpa [#allocation10], 0
    loop: start=0, step=1, limit=6
    $region2: #{tpu_custom_call.1} parent=1 // loop_pre_header
      _
    $region3: #{tpu_custom_call.1} parent=1 // loop_header
      %s19 = sphi 0, %s23
      %p20 = scmp.ge.s32.totalorder %s19, 6
      %s26 = sphi 0, %s38
      %s27 = sphi 0, %s34
      %s28 = sphi 0, %s26
      %s29 = sphi 0, %s27
      %s30 = sphi 0, %s28
      %s31 = sphi 0, %s29
      %s43 = sphi 0, %s45
      %s46 = sphi 0, %s43
      %s47 = sphi 0, %s46
      %s63 = sphi 0, %s47
      %s69 = sphi 0, %s71
      %s72 = sphi 0, %s69
      %s73 = sphi 0, %s72
      %s89 = sphi 0, %s73
      %s93 = sphi 0, %s93
      %s95 = sphi 0, %s93
      %s96 = sphi 0, %s95
      %s110 = sphi 0, %s96
      %s116 = sphi 0, %s118
      %s119 = sphi 0, %s116
      %s120 = sphi 0, %s119
      %s136 = sphi 0, %s120
      %s142 = sphi 0, %s144
      %s145 = sphi 0, %s142
      %s146 = sphi 0, %s145
      %s162 = sphi 0, %s146
    $region4: #{tpu_custom_call.1} parent=1 // loop_header_branch
      %22 = sbr.rel (%p20) target = $region8
    $region5: #{tpu_custom_call.1} parent=1 // loop_body
      %s24 = ssub.s32 %s19, 1
      %s25 = ssub.s32 %s19, 2
      %s32 = sadd.s32 1, %s27
      %p33 = scmp.ge.s32.totalorder %s32, 4
      %s34 = scalar_select %p33, 0, %s32
      %s35 = sadd.s32 1, %s26
      %s36 = scalar_select %p33, %s35, %s26
      %p37 = scmp.ge.s32.totalorder %s36, 1
      %s38 = scalar_select %p37, 0, %s36
      %s39 = ssub.s32 %s26, %s38
      %s40 = ssub.s32 %s27, %s34
      %s41 = sor.u32 %s39, %s40
      %p42 = scmp.eq.s32.totalorder %s41, 0
      %s44 = sadd.s32 %s43, 1
      %s45 = scalar_select %p42, %s43, %s44
      %p48 = pneg %p42
      %p49 = scmp.eq.s32.totalorder %s19, 3
      %p50 = por %p48, %p49
      %p51 = scmp.ne.s32.totalorder %s43, %s46
      %p52 = scmp.eq.s32.totalorder %s19, 0
      %p53 = por %p51, %p52
      %p54 = scmp.ne.s32.totalorder %s43, %s46
      %p55 = scmp.eq.s32.totalorder %s24, 3
      %p56 = por %p54, %p55
      %p57 = scmp.ne.s32.totalorder %s46, %s47
      %p58 = scmp.eq.s32.totalorder %s24, 0
      %p59 = por %p57, %p58
      %p60 = scmp.ne.s32.totalorder %s46, %s47
      %p61 = scmp.eq.s32.totalorder %s25, 3
      %p62 = por %p60, %p61
      %p64 = scmp.ne.s32.totalorder %s47, %s63
      %p65 = scmp.eq.s32.totalorder %s25, 0
      %p66 = por %p64, %p65
      %s67 = ssub.s32 %s27, %s34
      %p68 = scmp.eq.s32.totalorder %s67, 0
      %s70 = sadd.s32 %s69, 1
      %s71 = scalar_select %p68, %s69, %s70
      %p74 = pneg %p68
      %p75 = scmp.eq.s32.totalorder %s19, 3
      %p76 = por %p74, %p75
      %p77 = scmp.ne.s32.totalorder %s69, %s72
      %p78 = scmp.eq.s32.totalorder %s19, 0
      %p79 = por %p77, %p78
      %p80 = scmp.ne.s32.totalorder %s69, %s72
      %p81 = scmp.eq.s32.totalorder %s24, 3
      %p82 = por %p80, %p81
      %p83 = scmp.ne.s32.totalorder %s72, %s73
      %p84 = scmp.eq.s32.totalorder %s24, 0
      %p85 = por %p83, %p84
      %p86 = scmp.ne.s32.totalorder %s72, %s73
      %p87 = scmp.eq.s32.totalorder %s25, 3
      %p88 = por %p86, %p87
      %p90 = scmp.ne.s32.totalorder %s73, %s89
      %p91 = scmp.eq.s32.totalorder %s25, 0
      %p92 = por %p90, %p91
      %s94 = sadd.s32 %s93, 1
      %p97 = scmp.eq.s32.totalorder %s19, 3
      %p98 = scmp.ne.s32.totalorder %s93, %s95
      %p99 = scmp.eq.s32.totalorder %s19, 0
      %p100 = por %p98, %p99
      %p101 = scmp.ne.s32.totalorder %s93, %s95
      %p102 = scmp.eq.s32.totalorder %s24, 3
      %p103 = por %p101, %p102
      %p104 = scmp.ne.s32.totalorder %s95, %s96
      %p105 = scmp.eq.s32.totalorder %s24, 0
      %p106 = por %p104, %p105
      %p107 = scmp.ne.s32.totalorder %s95, %s96
      %p108 = scmp.eq.s32.totalorder %s25, 3
      %p109 = por %p107, %p108
      %p111 = scmp.ne.s32.totalorder %s96, %s110
      %p112 = scmp.eq.s32.totalorder %s25, 0
      %p113 = por %p111, %p112
      %s114 = ssub.s32 %s26, %s38
      %p115 = scmp.eq.s32.totalorder %s114, 0
      %s117 = sadd.s32 %s116, 1
      %s118 = scalar_select %p115, %s116, %s117
      %p121 = pneg %p115
      %p122 = scmp.eq.s32.totalorder %s19, 3
      %p123 = por %p121, %p122
      %p124 = scmp.ne.s32.totalorder %s116, %s119
      %p125 = scmp.eq.s32.totalorder %s19, 0
      %p126 = por %p124, %p125
      %p127 = scmp.ne.s32.totalorder %s116, %s119
      %p128 = scmp.eq.s32.totalorder %s24, 3
      %p129 = por %p127, %p128
      %p130 = scmp.ne.s32.totalorder %s119, %s120
      %p131 = scmp.eq.s32.totalorder %s24, 0
      %p132 = por %p130, %p131
      %p133 = scmp.ne.s32.totalorder %s119, %s120
      %p134 = scmp.eq.s32.totalorder %s25, 3
      %p135 = por %p133, %p134
      %p137 = scmp.ne.s32.totalorder %s120, %s136
      %p138 = scmp.eq.s32.totalorder %s25, 0
      %p139 = por %p137, %p138
      %s140 = ssub.s32 %s26, %s38
      %p141 = scmp.eq.s32.totalorder %s140, 0
      %s143 = sadd.s32 %s142, 1
      %s144 = scalar_select %p141, %s142, %s143
      %p147 = pneg %p141
      %p148 = scmp.eq.s32.totalorder %s19, 3
      %p149 = por %p147, %p148
      %p150 = scmp.ne.s32.totalorder %s142, %s145
      %p151 = scmp.eq.s32.totalorder %s19, 0
      %p152 = por %p150, %p151
      %p153 = scmp.ne.s32.totalorder %s142, %s145
      %p154 = scmp.eq.s32.totalorder %s24, 3
      %p155 = por %p153, %p154
      %p156 = scmp.ne.s32.totalorder %s145, %s146
      %p157 = scmp.eq.s32.totalorder %s24, 0
      %p158 = por %p156, %p157
      %p159 = scmp.ne.s32.totalorder %s145, %s146
      %p160 = scmp.eq.s32.totalorder %s25, 3
      %p161 = por %p159, %p160
      %p163 = scmp.ne.s32.totalorder %s146, %s162
      %p164 = scmp.eq.s32.totalorder %s25, 0
      %p165 = por %p163, %p164
      %p166 = scmp.le.s32.totalorder 1, %s19
      %p167 = scmp.lt.s32.totalorder %s19, 5
      %p168 = pnand %p166, %p167
      %p169 = pneg %p168
      // Predicated region
      $region9: #{tpu_custom_call.1} parent=5 // pred_check
        _
      $region10: #{tpu_custom_call.1} parent=5 // pred_check_branch
        %171 = sbr.rel (%p168) target = $region12
      $region11: #{tpu_custom_call.1} parent=5 // pred_region
        %s172 = ssub.s32 %s19, 1
        // Predicated region
        $region13: #{tpu_custom_call.1} parent=11 // pred_check
          %p173 = pneg %p106
        $region14: #{tpu_custom_call.1} parent=11 // pred_check_branch
          %175 = sbr.rel (%p173) target = $region16
        $region15: #{tpu_custom_call.1} parent=11 // pred_region
          _
        $region16: #{tpu_custom_call.1} parent=11 // pred_fallthru
          _
      $region12: #{tpu_custom_call.1} parent=5 // pred_fallthru
        _
      %p176 = scmp.lt.s32.totalorder %s19, 4
      // Predicated region
      $region17: #{tpu_custom_call.1} parent=5 // pred_check
        %p177 = pneg %p176
      $region18: #{tpu_custom_call.1} parent=5 // pred_check_branch
        %179 = sbr.rel (%p177) target = $region20
      $region19: #{tpu_custom_call.1} parent=5 // pred_region
        // Predicated region
        $region21: #{tpu_custom_call.1} parent=19 // pred_check
          %p180 = pneg %p53
        $region22: #{tpu_custom_call.1} parent=19 // pred_check_branch
          %182 = sbr.rel (%p180) target = $region24
        $region23: #{tpu_custom_call.1} parent=19 // pred_region
          %s183 = sand.u32 %s43, 1
          %s184 = scalar_lea.sflag [#allocation4], %s183
          %s185 = sand.u32 %s43, 1
          %s186 = smul.addr %s185, 64
          %s187 = scalar_lea.vmem [#allocation3], %s186
          %s188 = smul.u32 64, %s27
          %s190 = ssub.s32 1024, 1024
          %191 = vsyncadd %s184, %s190
          %s192 = smul.addr %s26, 256
          %s193 = sadd.s32 %s188, %s192
          %s194 = smul.addr %s193, 16
          %s195 = scalar_lea.hbm %s0, %s194
          %s197 = sshll.u32 %s187, 4
          %s198 = int_to_ptr.vmem [resolvable:$true] %s197
          %200 = dma.hbm_to_vmem [thread:$0]  %s195, 1024, %s198, %s184
        $region24: #{tpu_custom_call.1} parent=19 // pred_fallthru
          _
        // Predicated region
        $region25: #{tpu_custom_call.1} parent=19 // pred_check
          %p201 = pneg %p79
        $region26: #{tpu_custom_call.1} parent=19 // pred_check_branch
          %203 = sbr.rel (%p201) target = $region28
        $region27: #{tpu_custom_call.1} parent=19 // pred_region
          %s204 = sand.u32 %s69, 1
          %s205 = scalar_lea.sflag [#allocation7], %s204
          %s206 = sand.u32 %s69, 1
          %s207 = smul.addr %s206, 128
          %s208 = scalar_lea.vmem [#allocation6], %s207
          %s209 = smul.u32 64, %s27
          %s211 = ssub.s32 2048, 2048
          %212 = vsyncadd %s205, %s211
          %s213 = smul.addr %s209, 32
          %s214 = scalar_lea.hbm %s1, %s213
          %s216 = sshll.u32 %s208, 4
          %s217 = int_to_ptr.vmem [resolvable:$true] %s216
          %219 = dma.hbm_to_vmem [thread:$0]  %s214, 2048, %s217, %s205
        $region28: #{tpu_custom_call.1} parent=19 // pred_fallthru
          _
      $region20: #{tpu_custom_call.1} parent=5 // pred_fallthru
        _
      %p220 = scmp.le.s32.totalorder 1, %s19
      %p221 = scmp.lt.s32.totalorder %s19, 5
      %p222 = pnand %p220, %p221
      %p223 = pneg %p222
      // Predicated region
      $region29: #{tpu_custom_call.1} parent=5 // pred_check
        _
      $region30: #{tpu_custom_call.1} parent=5 // pred_check_branch
        %225 = sbr.rel (%p222) target = $region32
      $region31: #{tpu_custom_call.1} parent=5 // pred_region
        %s226 = ssub.s32 %s19, 1
        %s227 = sand.u32 %s46, 1
        %s228 = scalar_lea.sflag [#allocation4], %s227
        %s229 = sand.u32 %s46, 1
        %s230 = smul.addr %s229, 64
        %s231 = scalar_lea.vmem [#allocation3], %s230
        // Predicated region
        $region33: #{tpu_custom_call.1} parent=31 // pred_check
          %p232 = pneg %p59
        $region34: #{tpu_custom_call.1} parent=31 // pred_check_branch
          %234 = sbr.rel (%p232) target = $region36
        $region35: #{tpu_custom_call.1} parent=31 // pred_region
          %235 = dma.done %s228, 1024
        $region36: #{tpu_custom_call.1} parent=31 // pred_fallthru
          _
        %s236 = sand.u32 %s72, 1
        %s237 = scalar_lea.sflag [#allocation7], %s236
        %s238 = sand.u32 %s72, 1
        %s239 = smul.addr %s238, 128
        %s240 = scalar_lea.vmem [#allocation6], %s239
        // Predicated region
        $region37: #{tpu_custom_call.1} parent=31 // pred_check
          %p241 = pneg %p85
        $region38: #{tpu_custom_call.1} parent=31 // pred_check_branch
          %243 = sbr.rel (%p241) target = $region40
        $region39: #{tpu_custom_call.1} parent=31 // pred_region
          %244 = dma.done %s237, 2048
        $region40: #{tpu_custom_call.1} parent=31 // pred_fallthru
          _
        %s245 = sand.u32 %s46, 1
        %s246 = scalar_lea.sflag [#allocation4], %s245
        %s247 = sand.u32 %s46, 1
        %s248 = smul.addr %s247, 64
        %s249 = scalar_lea.vmem [#allocation3], %s248
        %p250 = pneg %p59
        %p251 = pneg %p56
        %s252 = sand.u32 %s72, 1
        %s253 = scalar_lea.sflag [#allocation7], %s252
        %s254 = sand.u32 %s72, 1
        %s255 = smul.addr %s254, 128
        %s256 = scalar_lea.vmem [#allocation6], %s255
        %p257 = pneg %p85
        %p258 = pneg %p82
        %p259 = pneg %p106
        %p260 = pneg %p103
        %p261 = pneg %p132
        %p262 = pneg %p129
        %p263 = pneg %p158
        %p264 = pneg %p155
        %s265 = smul.u32 64, %s29
        %s266 = smul.u32 64, %s29
        %p267 = scmp.eq.s32.totalorder %s29, 0
        // Predicated region
        $region41: #{tpu_custom_call.1} parent=31 // pred_check
          %p268 = pneg %p267
        $region42: #{tpu_custom_call.1} parent=31 // pred_check_branch
          %270 = sbr.rel (%p268) target = $region44
        $region43: #{tpu_custom_call.1} parent=31 // pred_region
          %vm271 = vcmask 9216
          %272 = vst.msk [vmem:[#allocation2] sm:$0x3] %vm271, 0.0
        $region44: #{tpu_custom_call.1} parent=31 // pred_fallthru
          _
        %v273 = vld [vmem:[%s231] sm:$0xff]
        %v274 = vld [vmem:[%s231 + $0x8] sm:$0xff]
        %v275 = vld [vmem:[%s231 + $0x10] sm:$0xff]
        %v276 = vld [vmem:[%s231 + $0x18] sm:$0xff]
        %v277 = vld [vmem:[%s231 + $0x20] sm:$0xff]
        %v278 = vld [vmem:[%s231 + $0x28] sm:$0xff]
        %v279 = vld [vmem:[%s231 + $0x30] sm:$0xff]
        %v280 = vld [vmem:[%s231 + $0x38] sm:$0xff]
        %v281 = vunpack.c.l.bf16 %v273
        %v282 = vunpack.c.h.bf16 %v273
        %v283 = vunpack.c.l.bf16 %v274
        %v284 = vunpack.c.h.bf16 %v274
        %v285 = vunpack.c.l.bf16 %v275
        %v286 = vunpack.c.h.bf16 %v275
        %v287 = vunpack.c.l.bf16 %v276
        %v288 = vunpack.c.h.bf16 %v276
        %v289 = vunpack.c.l.bf16 %v277
        %v290 = vunpack.c.h.bf16 %v277
        %v291 = vunpack.c.l.bf16 %v278
        %v292 = vunpack.c.h.bf16 %v278
        %v293 = vunpack.c.l.bf16 %v279
        %v294 = vunpack.c.h.bf16 %v279
        %v295 = vunpack.c.l.bf16 %v280
        %v296 = vunpack.c.h.bf16 %v280
        %v297 = vld [vmem:[%s240] sm:$0xff]
        %v298 = vld [vmem:[%s240 + $0x8] sm:$0xff]
        %v299 = vld [vmem:[%s240 + $0x10] sm:$0xff]
        %v300 = vld [vmem:[%s240 + $0x18] sm:$0xff]
        %v301 = vld [vmem:[%s240 + $0x20] sm:$0xff]
        %v302 = vld [vmem:[%s240 + $0x28] sm:$0xff]
        %v303 = vld [vmem:[%s240 + $0x30] sm:$0xff]
        %v304 = vld [vmem:[%s240 + $0x38] sm:$0xff]
        %v305 = vld [vmem:[%s240 + $0x40] sm:$0xff]
        %v306 = vld [vmem:[%s240 + $0x48] sm:$0xff]
        %v307 = vld [vmem:[%s240 + $0x50] sm:$0xff]
        %v308 = vld [vmem:[%s240 + $0x58] sm:$0xff]
        %v309 = vld [vmem:[%s240 + $0x60] sm:$0xff]
        %v310 = vld [vmem:[%s240 + $0x68] sm:$0xff]
        %v311 = vld [vmem:[%s240 + $0x70] sm:$0xff]
        %v312 = vld [vmem:[%s240 + $0x78] sm:$0xff]
        %v313 = vld [vmem:[#allocation2] sm:$0x3]
        %v330 = vcombine.high %v281, %v281
        %v332 = vunpack.c.l.s4 1983009808
        %v333 = vunpack.c.0.s8 %v332
        %v334 = vlaneseq
        %v335 = vshrl.u32 %v334, 7
        %v336 = vsub.s32 %v333, %v335
        %v337 = vrot.slane %v281, %v336
        %v339 = vunpack.c.l.s4 1983009808
        %v340 = vunpack.c.0.s8 %v339
        %v341 = vlaneseq
        %v342 = vshrl.u32 %v341, 7
        %v343 = vsub.s32 %v340, %v342
        %v344 = vrot.slane %v330, %v343
        %v345 = vcombine.high %v337, %v337
        %v346 = vcombine.high %v344, %v344
        %v347 = vcombine.high %v282, %v282
        %v349 = vunpack.c.l.s4 1983009808
        %v350 = vunpack.c.0.s8 %v349
        %v351 = vlaneseq
        %v352 = vshrl.u32 %v351, 7
        %v353 = vsub.s32 %v350, %v352
        %v354 = vrot.slane %v282, %v353
        %v356 = vunpack.c.l.s4 1983009808
        %v357 = vunpack.c.0.s8 %v356
        %v358 = vlaneseq
        %v359 = vshrl.u32 %v358, 7
        %v360 = vsub.s32 %v357, %v359
        %v361 = vrot.slane %v347, %v360
        %v362 = vcombine.high %v354, %v354
        %v363 = vcombine.high %v361, %v361
        %v364 = vcombine.high %v283, %v283
        %v366 = vunpack.c.l.s4 1983009808
        %v367 = vunpack.c.0.s8 %v366
        %v368 = vlaneseq
        %v369 = vshrl.u32 %v368, 7
        %v370 = vsub.s32 %v367, %v369
        %v371 = vrot.slane %v283, %v370
        %v373 = vunpack.c.l.s4 1983009808
        %v374 = vunpack.c.0.s8 %v373
        %v375 = vlaneseq
        %v376 = vshrl.u32 %v375, 7
        %v377 = vsub.s32 %v374, %v376
        %v378 = vrot.slane %v364, %v377
        %v379 = vcombine.high %v371, %v371
        %v380 = vcombine.high %v378, %v378
        %v381 = vcombine.high %v284, %v284
        %v383 = vunpack.c.l.s4 1983009808
        %v384 = vunpack.c.0.s8 %v383
        %v385 = vlaneseq
        %v386 = vshrl.u32 %v385, 7
        %v387 = vsub.s32 %v384, %v386
        %v388 = vrot.slane %v284, %v387
        %v390 = vunpack.c.l.s4 1983009808
        %v391 = vunpack.c.0.s8 %v390
        %v392 = vlaneseq
        %v393 = vshrl.u32 %v392, 7
        %v394 = vsub.s32 %v391, %v393
        %v395 = vrot.slane %v381, %v394
        %v396 = vcombine.high %v388, %v388
        %v397 = vcombine.high %v395, %v395
        %v398 = vcombine.high %v285, %v285
        %v400 = vunpack.c.l.s4 1983009808
        %v401 = vunpack.c.0.s8 %v400
        %v402 = vlaneseq
        %v403 = vshrl.u32 %v402, 7
        %v404 = vsub.s32 %v401, %v403
        %v405 = vrot.slane %v285, %v404
        %v407 = vunpack.c.l.s4 1983009808
        %v408 = vunpack.c.0.s8 %v407
        %v409 = vlaneseq
        %v410 = vshrl.u32 %v409, 7
        %v411 = vsub.s32 %v408, %v410
        %v412 = vrot.slane %v398, %v411
        %v413 = vcombine.high %v405, %v405
        %v414 = vcombine.high %v412, %v412
        %v415 = vcombine.high %v286, %v286
        %v417 = vunpack.c.l.s4 1983009808
        %v418 = vunpack.c.0.s8 %v417
        %v419 = vlaneseq
        %v420 = vshrl.u32 %v419, 7
        %v421 = vsub.s32 %v418, %v420
        %v422 = vrot.slane %v286, %v421
        %v424 = vunpack.c.l.s4 1983009808
        %v425 = vunpack.c.0.s8 %v424
        %v426 = vlaneseq
        %v427 = vshrl.u32 %v426, 7
        %v428 = vsub.s32 %v425, %v427
        %v429 = vrot.slane %v415, %v428
        %v430 = vcombine.high %v422, %v422
        %v431 = vcombine.high %v429, %v429
        %v432 = vcombine.high %v287, %v287
        %v434 = vunpack.c.l.s4 1983009808
        %v435 = vunpack.c.0.s8 %v434
        %v436 = vlaneseq
        %v437 = vshrl.u32 %v436, 7
        %v438 = vsub.s32 %v435, %v437
        %v439 = vrot.slane %v287, %v438
        %v441 = vunpack.c.l.s4 1983009808
        %v442 = vunpack.c.0.s8 %v441
        %v443 = vlaneseq
        %v444 = vshrl.u32 %v443, 7
        %v445 = vsub.s32 %v442, %v444
        %v446 = vrot.slane %v432, %v445
        %v447 = vcombine.high %v439, %v439
        %v448 = vcombine.high %v446, %v446
        %v449 = vcombine.high %v288, %v288
        %v451 = vunpack.c.l.s4 1983009808
        %v452 = vunpack.c.0.s8 %v451
        %v453 = vlaneseq
        %v454 = vshrl.u32 %v453, 7
        %v455 = vsub.s32 %v452, %v454
        %v456 = vrot.slane %v288, %v455
        %v458 = vunpack.c.l.s4 1983009808
        %v459 = vunpack.c.0.s8 %v458
        %v460 = vlaneseq
        %v461 = vshrl.u32 %v460, 7
        %v462 = vsub.s32 %v459, %v461
        %v463 = vrot.slane %v449, %v462
        %v464 = vcombine.high %v456, %v456
        %v465 = vcombine.high %v463, %v463
        %v466 = vcombine.high %v289, %v289
        %v468 = vunpack.c.l.s4 1983009808
        %v469 = vunpack.c.0.s8 %v468
        %v470 = vlaneseq
        %v471 = vshrl.u32 %v470, 7
        %v472 = vsub.s32 %v469, %v471
        %v473 = vrot.slane %v289, %v472
        %v475 = vunpack.c.l.s4 1983009808
        %v476 = vunpack.c.0.s8 %v475
        %v477 = vlaneseq
        %v478 = vshrl.u32 %v477, 7
        %v479 = vsub.s32 %v476, %v478
        %v480 = vrot.slane %v466, %v479
        %v481 = vcombine.high %v473, %v473
        %v482 = vcombine.high %v480, %v480
        %v483 = vcombine.high %v290, %v290
        %v485 = vunpack.c.l.s4 1983009808
        %v486 = vunpack.c.0.s8 %v485
        %v487 = vlaneseq
        %v488 = vshrl.u32 %v487, 7
        %v489 = vsub.s32 %v486, %v488
        %v490 = vrot.slane %v290, %v489
        %v492 = vunpack.c.l.s4 1983009808
        %v493 = vunpack.c.0.s8 %v492
        %v494 = vlaneseq
        %v495 = vshrl.u32 %v494, 7
        %v496 = vsub.s32 %v493, %v495
        %v497 = vrot.slane %v483, %v496
        %v498 = vcombine.high %v490, %v490
        %v499 = vcombine.high %v497, %v497
        %v500 = vcombine.high %v291, %v291
        %v502 = vunpack.c.l.s4 1983009808
        %v503 = vunpack.c.0.s8 %v502
        %v504 = vlaneseq
        %v505 = vshrl.u32 %v504, 7
        %v506 = vsub.s32 %v503, %v505
        %v507 = vrot.slane %v291, %v506
        %v509 = vunpack.c.l.s4 1983009808
        %v510 = vunpack.c.0.s8 %v509
        %v511 = vlaneseq
        %v512 = vshrl.u32 %v511, 7
        %v513 = vsub.s32 %v510, %v512
        %v514 = vrot.slane %v500, %v513
        %v515 = vcombine.high %v507, %v507
        %v516 = vcombine.high %v514, %v514
        %v517 = vcombine.high %v292, %v292
        %v519 = vunpack.c.l.s4 1983009808
        %v520 = vunpack.c.0.s8 %v519
        %v521 = vlaneseq
        %v522 = vshrl.u32 %v521, 7
        %v523 = vsub.s32 %v520, %v522
        %v524 = vrot.slane %v292, %v523
        %v526 = vunpack.c.l.s4 1983009808
        %v527 = vunpack.c.0.s8 %v526
        %v528 = vlaneseq
        %v529 = vshrl.u32 %v528, 7
        %v530 = vsub.s32 %v527, %v529
        %v531 = vrot.slane %v517, %v530
        %v532 = vcombine.high %v524, %v524
        %v533 = vcombine.high %v531, %v531
        %v534 = vcombine.high %v293, %v293
        %v536 = vunpack.c.l.s4 1983009808
        %v537 = vunpack.c.0.s8 %v536
        %v538 = vlaneseq
        %v539 = vshrl.u32 %v538, 7
        %v540 = vsub.s32 %v537, %v539
        %v541 = vrot.slane %v293, %v540
        %v543 = vunpack.c.l.s4 1983009808
        %v544 = vunpack.c.0.s8 %v543
        %v545 = vlaneseq
        %v546 = vshrl.u32 %v545, 7
        %v547 = vsub.s32 %v544, %v546
        %v548 = vrot.slane %v534, %v547
        %v549 = vcombine.high %v541, %v541
        %v550 = vcombine.high %v548, %v548
        %v551 = vcombine.high %v294, %v294
        %v553 = vunpack.c.l.s4 1983009808
        %v554 = vunpack.c.0.s8 %v553
        %v555 = vlaneseq
        %v556 = vshrl.u32 %v555, 7
        %v557 = vsub.s32 %v554, %v556
        %v558 = vrot.slane %v294, %v557
        %v560 = vunpack.c.l.s4 1983009808
        %v561 = vunpack.c.0.s8 %v560
        %v562 = vlaneseq
        %v563 = vshrl.u32 %v562, 7
        %v564 = vsub.s32 %v561, %v563
        %v565 = vrot.slane %v551, %v564
        %v566 = vcombine.high %v558, %v558
        %v567 = vcombine.high %v565, %v565
        %v568 = vcombine.high %v295, %v295
        %v570 = vunpack.c.l.s4 1983009808
        %v571 = vunpack.c.0.s8 %v570
        %v572 = vlaneseq
        %v573 = vshrl.u32 %v572, 7
        %v574 = vsub.s32 %v571, %v573
        %v575 = vrot.slane %v295, %v574
        %v577 = vunpack.c.l.s4 1983009808
        %v578 = vunpack.c.0.s8 %v577
        %v579 = vlaneseq
        %v580 = vshrl.u32 %v579, 7
        %v581 = vsub.s32 %v578, %v580
        %v582 = vrot.slane %v568, %v581
        %v583 = vcombine.high %v575, %v575
        %v584 = vcombine.high %v582, %v582
        %v585 = vcombine.high %v296, %v296
        %v587 = vunpack.c.l.s4 1983009808
        %v588 = vunpack.c.0.s8 %v587
        %v589 = vlaneseq
        %v590 = vshrl.u32 %v589, 7
        %v591 = vsub.s32 %v588, %v590
        %v592 = vrot.slane %v296, %v591
        %v594 = vunpack.c.l.s4 1983009808
        %v595 = vunpack.c.0.s8 %v594
        %v596 = vlaneseq
        %v597 = vshrl.u32 %v596, 7
        %v598 = vsub.s32 %v595, %v597
        %v599 = vrot.slane %v585, %v598
        %v600 = vcombine.high %v592, %v592
        %v601 = vcombine.high %v599, %v599
        %v682 = vcombine.high %v297, %v297
        %v684 = vunpack.c.l.s4 1983009808
        %v685 = vunpack.c.0.s8 %v684
        %v686 = vlaneseq
        %v687 = vshrl.u32 %v686, 7
        %v688 = vsub.s32 %v685, %v687
        %v689 = vrot.slane %v297, %v688
        %v691 = vunpack.c.l.s4 1983009808
        %v692 = vunpack.c.0.s8 %v691
        %v693 = vlaneseq
        %v694 = vshrl.u32 %v693, 7
        %v695 = vsub.s32 %v692, %v694
        %v696 = vrot.slane %v682, %v695
        %v697 = vcombine.high %v689, %v689
        %v698 = vcombine.high %v696, %v696
        %v699 = vcombine.high %v298, %v298
        %v701 = vunpack.c.l.s4 1983009808
        %v702 = vunpack.c.0.s8 %v701
        %v703 = vlaneseq
        %v704 = vshrl.u32 %v703, 7
        %v705 = vsub.s32 %v702, %v704
        %v706 = vrot.slane %v298, %v705
        %v708 = vunpack.c.l.s4 1983009808
        %v709 = vunpack.c.0.s8 %v708
        %v710 = vlaneseq
        %v711 = vshrl.u32 %v710, 7
        %v712 = vsub.s32 %v709, %v711
        %v713 = vrot.slane %v699, %v712
        %v714 = vcombine.high %v706, %v706
        %v715 = vcombine.high %v713, %v713
        %v716 = vcombine.high %v299, %v299
        %v718 = vunpack.c.l.s4 1983009808
        %v719 = vunpack.c.0.s8 %v718
        %v720 = vlaneseq
        %v721 = vshrl.u32 %v720, 7
        %v722 = vsub.s32 %v719, %v721
        %v723 = vrot.slane %v299, %v722
        %v725 = vunpack.c.l.s4 1983009808
        %v726 = vunpack.c.0.s8 %v725
        %v727 = vlaneseq
        %v728 = vshrl.u32 %v727, 7
        %v729 = vsub.s32 %v726, %v728
        %v730 = vrot.slane %v716, %v729
        %v731 = vcombine.high %v723, %v723
        %v732 = vcombine.high %v730, %v730
        %v733 = vcombine.high %v300, %v300
        %v735 = vunpack.c.l.s4 1983009808
        %v736 = vunpack.c.0.s8 %v735
        %v737 = vlaneseq
        %v738 = vshrl.u32 %v737, 7
        %v739 = vsub.s32 %v736, %v738
        %v740 = vrot.slane %v300, %v739
        %v742 = vunpack.c.l.s4 1983009808
        %v743 = vunpack.c.0.s8 %v742
        %v744 = vlaneseq
        %v745 = vshrl.u32 %v744, 7
        %v746 = vsub.s32 %v743, %v745
        %v747 = vrot.slane %v733, %v746
        %v748 = vcombine.high %v740, %v740
        %v749 = vcombine.high %v747, %v747
        %v750 = vcombine.high %v301, %v301
        %v752 = vunpack.c.l.s4 1983009808
        %v753 = vunpack.c.0.s8 %v752
        %v754 = vlaneseq
        %v755 = vshrl.u32 %v754, 7
        %v756 = vsub.s32 %v753, %v755
        %v757 = vrot.slane %v301, %v756
        %v759 = vunpack.c.l.s4 1983009808
        %v760 = vunpack.c.0.s8 %v759
        %v761 = vlaneseq
        %v762 = vshrl.u32 %v761, 7
        %v763 = vsub.s32 %v760, %v762
        %v764 = vrot.slane %v750, %v763
        %v765 = vcombine.high %v757, %v757
        %v766 = vcombine.high %v764, %v764
        %v767 = vcombine.high %v302, %v302
        %v769 = vunpack.c.l.s4 1983009808
        %v770 = vunpack.c.0.s8 %v769
        %v771 = vlaneseq
        %v772 = vshrl.u32 %v771, 7
        %v773 = vsub.s32 %v770, %v772
        %v774 = vrot.slane %v302, %v773
        %v776 = vunpack.c.l.s4 1983009808
        %v777 = vunpack.c.0.s8 %v776
        %v778 = vlaneseq
        %v779 = vshrl.u32 %v778, 7
        %v780 = vsub.s32 %v777, %v779
        %v781 = vrot.slane %v767, %v780
        %v782 = vcombine.high %v774, %v774
        %v783 = vcombine.high %v781, %v781
        %v784 = vcombine.high %v303, %v303
        %v786 = vunpack.c.l.s4 1983009808
        %v787 = vunpack.c.0.s8 %v786
        %v788 = vlaneseq
        %v789 = vshrl.u32 %v788, 7
        %v790 = vsub.s32 %v787, %v789
        %v791 = vrot.slane %v303, %v790
        %v793 = vunpack.c.l.s4 1983009808
        %v794 = vunpack.c.0.s8 %v793
        %v795 = vlaneseq
        %v796 = vshrl.u32 %v795, 7
        %v797 = vsub.s32 %v794, %v796
        %v798 = vrot.slane %v784, %v797
        %v799 = vcombine.high %v791, %v791
        %v800 = vcombine.high %v798, %v798
        %v801 = vcombine.high %v304, %v304
        %v803 = vunpack.c.l.s4 1983009808
        %v804 = vunpack.c.0.s8 %v803
        %v805 = vlaneseq
        %v806 = vshrl.u32 %v805, 7
        %v807 = vsub.s32 %v804, %v806
        %v808 = vrot.slane %v304, %v807
        %v810 = vunpack.c.l.s4 1983009808
        %v811 = vunpack.c.0.s8 %v810
        %v812 = vlaneseq
        %v813 = vshrl.u32 %v812, 7
        %v814 = vsub.s32 %v811, %v813
        %v815 = vrot.slane %v801, %v814
        %v816 = vcombine.high %v808, %v808
        %v817 = vcombine.high %v815, %v815
        %v818 = vcombine.high %v305, %v305
        %v820 = vunpack.c.l.s4 1983009808
        %v821 = vunpack.c.0.s8 %v820
        %v822 = vlaneseq
        %v823 = vshrl.u32 %v822, 7
        %v824 = vsub.s32 %v821, %v823
        %v825 = vrot.slane %v305, %v824
        %v827 = vunpack.c.l.s4 1983009808
        %v828 = vunpack.c.0.s8 %v827
        %v829 = vlaneseq
        %v830 = vshrl.u32 %v829, 7
        %v831 = vsub.s32 %v828, %v830
        %v832 = vrot.slane %v818, %v831
        %v833 = vcombine.high %v825, %v825
        %v834 = vcombine.high %v832, %v832
        %v835 = vcombine.high %v306, %v306
        %v837 = vunpack.c.l.s4 1983009808
        %v838 = vunpack.c.0.s8 %v837
        %v839 = vlaneseq
        %v840 = vshrl.u32 %v839, 7
        %v841 = vsub.s32 %v838, %v840
        %v842 = vrot.slane %v306, %v841
        %v844 = vunpack.c.l.s4 1983009808
        %v845 = vunpack.c.0.s8 %v844
        %v846 = vlaneseq
        %v847 = vshrl.u32 %v846, 7
        %v848 = vsub.s32 %v845, %v847
        %v849 = vrot.slane %v835, %v848
        %v850 = vcombine.high %v842, %v842
        %v851 = vcombine.high %v849, %v849
        %v852 = vcombine.high %v307, %v307
        %v854 = vunpack.c.l.s4 1983009808
        %v855 = vunpack.c.0.s8 %v854
        %v856 = vlaneseq
        %v857 = vshrl.u32 %v856, 7
        %v858 = vsub.s32 %v855, %v857
        %v859 = vrot.slane %v307, %v858
        %v861 = vunpack.c.l.s4 1983009808
        %v862 = vunpack.c.0.s8 %v861
        %v863 = vlaneseq
        %v864 = vshrl.u32 %v863, 7
        %v865 = vsub.s32 %v862, %v864
        %v866 = vrot.slane %v852, %v865
        %v867 = vcombine.high %v859, %v859
        %v868 = vcombine.high %v866, %v866
        %v869 = vcombine.high %v308, %v308
        %v871 = vunpack.c.l.s4 1983009808
        %v872 = vunpack.c.0.s8 %v871
        %v873 = vlaneseq
        %v874 = vshrl.u32 %v873, 7
        %v875 = vsub.s32 %v872, %v874
        %v876 = vrot.slane %v308, %v875
        %v878 = vunpack.c.l.s4 1983009808
        %v879 = vunpack.c.0.s8 %v878
        %v880 = vlaneseq
        %v881 = vshrl.u32 %v880, 7
        %v882 = vsub.s32 %v879, %v881
        %v883 = vrot.slane %v869, %v882
        %v884 = vcombine.high %v876, %v876
        %v885 = vcombine.high %v883, %v883
        %v886 = vcombine.high %v309, %v309
        %v888 = vunpack.c.l.s4 1983009808
        %v889 = vunpack.c.0.s8 %v888
        %v890 = vlaneseq
        %v891 = vshrl.u32 %v890, 7
        %v892 = vsub.s32 %v889, %v891
        %v893 = vrot.slane %v309, %v892
        %v895 = vunpack.c.l.s4 1983009808
        %v896 = vunpack.c.0.s8 %v895
        %v897 = vlaneseq
        %v898 = vshrl.u32 %v897, 7
        %v899 = vsub.s32 %v896, %v898
        %v900 = vrot.slane %v886, %v899
        %v901 = vcombine.high %v893, %v893
        %v902 = vcombine.high %v900, %v900
        %v903 = vcombine.high %v310, %v310
        %v905 = vunpack.c.l.s4 1983009808
        %v906 = vunpack.c.0.s8 %v905
        %v907 = vlaneseq
        %v908 = vshrl.u32 %v907, 7
        %v909 = vsub.s32 %v906, %v908
        %v910 = vrot.slane %v310, %v909
        %v912 = vunpack.c.l.s4 1983009808
        %v913 = vunpack.c.0.s8 %v912
        %v914 = vlaneseq
        %v915 = vshrl.u32 %v914, 7
        %v916 = vsub.s32 %v913, %v915
        %v917 = vrot.slane %v903, %v916
        %v918 = vcombine.high %v910, %v910
        %v919 = vcombine.high %v917, %v917
        %v920 = vcombine.high %v311, %v311
        %v922 = vunpack.c.l.s4 1983009808
        %v923 = vunpack.c.0.s8 %v922
        %v924 = vlaneseq
        %v925 = vshrl.u32 %v924, 7
        %v926 = vsub.s32 %v923, %v925
        %v927 = vrot.slane %v311, %v926
        %v929 = vunpack.c.l.s4 1983009808
        %v930 = vunpack.c.0.s8 %v929
        %v931 = vlaneseq
        %v932 = vshrl.u32 %v931, 7
        %v933 = vsub.s32 %v930, %v932
        %v934 = vrot.slane %v920, %v933
        %v935 = vcombine.high %v927, %v927
        %v936 = vcombine.high %v934, %v934
        %v937 = vcombine.high %v312, %v312
        %v939 = vunpack.c.l.s4 1983009808
        %v940 = vunpack.c.0.s8 %v939
        %v941 = vlaneseq
        %v942 = vshrl.u32 %v941, 7
        %v943 = vsub.s32 %v940, %v942
        %v944 = vrot.slane %v312, %v943
        %v946 = vunpack.c.l.s4 1983009808
        %v947 = vunpack.c.0.s8 %v946
        %v948 = vlaneseq
        %v949 = vshrl.u32 %v948, 7
        %v950 = vsub.s32 %v947, %v949
        %v951 = vrot.slane %v937, %v950
        %v952 = vcombine.high %v944, %v944
        %v953 = vcombine.high %v951, %v951
        %1018 = vmatprep.subr.mxu0 %v697
        %1019 = vmatpush1.xpose.msra.mxu0 %v689
        %1020 = vmatprep.subr.mxu0 0.0
        %1021 = vmatpush1.xpose.msra.mxu0 0.0
        %1022 = vmatprep.subr.mxu0 0.0
        %1023 = vmatpush1.xpose.msra.mxu0 0.0
        %1024 = vmatprep.subr.mxu0 0.0
        %1025 = vmatpush1.xpose.msra.mxu0 0.0
        %1026 = vmatprep.subr.mxu0 0.0
        %1027 = vmatpush1.xpose.msra.mxu0 0.0
        %1028 = vmatprep.subr.mxu0 0.0
        %1029 = vmatpush1.xpose.msra.mxu0 0.0
        %1030 = vmatprep.subr.mxu0 0.0
        %1031 = vmatpush1.xpose.msra.mxu0 0.0
        %1032 = vmatprep.subr.mxu0 0.0
        %1033 = vmatpush1.xpose.msra.mxu0 0.0
        %1034 = vmatprep.subr.mxu0 0.0
        %1035 = vmatpush1.xpose.msra.mxu0 0.0
        %1036 = vmatprep.subr.mxu0 0.0
        %1037 = vmatpush1.xpose.msra.mxu0 0.0
        %1038 = vmatprep.subr.mxu0 0.0
        %1039 = vmatpush1.xpose.msra.mxu0 0.0
        %1040 = vmatprep.subr.mxu0 0.0
        %1041 = vmatpush1.xpose.msra.mxu0 0.0
        %1042 = vmatprep.subr.mxu0 0.0
        %1043 = vmatpush1.xpose.msra.mxu0 0.0
        %1044 = vmatprep.subr.mxu0 0.0
        %1045 = vmatpush1.xpose.msra.mxu0 0.0
        %1046 = vmatprep.subr.mxu0 0.0
        %1047 = vmatpush1.xpose.msra.mxu0 0.0
        %1048 = vmatprep.subr.mxu0 0.0
        %1049 = vmatpush1.xpose.msra.mxu0 0.0
        %1050 = vmatprep.subr.mxu0 0.0
        %1051 = vmatpush1.xpose.msra.mxu0 0.0
        %1052 = vmatprep.subr.mxu0 0.0
        %1053 = vmatpush1.xpose.msra.mxu0 0.0
        %1054 = vmatprep.subr.mxu0 0.0
        %1055 = vmatpush1.xpose.msra.mxu0 0.0
        %1056 = vmatprep.subr.mxu0 0.0
        %1057 = vmatpush1.xpose.msra.mxu0 0.0
        %1058 = vmatprep.subr.mxu0 0.0
        %1059 = vmatpush1.xpose.msra.mxu0 0.0
        %1060 = vmatprep.subr.mxu0 0.0
        %1061 = vmatpush1.xpose.msra.mxu0 0.0
        %1062 = vmatprep.subr.mxu0 0.0
        %1063 = vmatpush1.xpose.msra.mxu0 0.0
        %1064 = vmatprep.subr.mxu0 0.0
        %1065 = vmatpush1.xpose.msra.mxu0 0.0
        %1066 = vmatprep.subr.mxu0 0.0
        %1067 = vmatpush1.xpose.msra.mxu0 0.0
        %1068 = vmatprep.subr.mxu0 0.0
        %1069 = vmatpush1.xpose.msra.mxu0 0.0
        %1070 = vmatprep.subr.mxu0 0.0
        %1071 = vmatpush1.xpose.msra.mxu0 0.0
        %1072 = vmatprep.subr.mxu0 0.0
        %1073 = vmatpush1.xpose.msra.mxu0 0.0
        %1074 = vmatprep.subr.mxu0 0.0
        %1075 = vmatpush1.xpose.msra.mxu0 0.0
        %1076 = vmatprep.subr.mxu0 0.0
        %1077 = vmatpush1.xpose.msra.mxu0 0.0
        %1078 = vmatprep.subr.mxu0 0.0
        %1079 = vmatpush1.xpose.msra.mxu0 0.0
        %1080 = vmatprep.subr.mxu0 0.0
        %1081 = vmatpush1.xpose.msra.mxu0 0.0
        %1082 = vmatprep.mubr.f32.mxu0 %v345
        %1083 = vmatmul.mubr.f32.gmra.mrb[0].mxu0 %v337
        %v1084 = vpop.f32.mrb[0].mxu0
        %v1085 = vadd.f32 0.0, %v1084
        %v1086 = vpop.f32.mrb[0].mxu0
        %1087 = vdwg.mxu0
        %1088 = vmatprep.subr.mxu0 %v698
        %1089 = vmatpush1.xpose.msra.mxu0 %v696
        %1090 = vmatprep.subr.mxu0 0.0
        %1091 = vmatpush1.xpose.msra.mxu0 0.0
        %1092 = vmatprep.subr.mxu0 0.0
        %1093 = vmatpush1.xpose.msra.mxu0 0.0
        %1094 = vmatprep.subr.mxu0 0.0
        %1095 = vmatpush1.xpose.msra.mxu0 0.0
        %1096 = vmatprep.subr.mxu0 0.0
        %1097 = vmatpush1.xpose.msra.mxu0 0.0
        %1098 = vmatprep.subr.mxu0 0.0
        %1099 = vmatpush1.xpose.msra.mxu0 0.0
        %1100 = vmatprep.subr.mxu0 0.0
        %1101 = vmatpush1.xpose.msra.mxu0 0.0
        %1102 = vmatprep.subr.mxu0 0.0
        %1103 = vmatpush1.xpose.msra.mxu0 0.0
        %1104 = vmatprep.subr.mxu0 0.0
        %1105 = vmatpush1.xpose.msra.mxu0 0.0
        %1106 = vmatprep.subr.mxu0 0.0
        %1107 = vmatpush1.xpose.msra.mxu0 0.0
        %1108 = vmatprep.subr.mxu0 0.0
        %1109 = vmatpush1.xpose.msra.mxu0 0.0
        %1110 = vmatprep.subr.mxu0 0.0
        %1111 = vmatpush1.xpose.msra.mxu0 0.0
        %1112 = vmatprep.subr.mxu0 0.0
        %1113 = vmatpush1.xpose.msra.mxu0 0.0
        %1114 = vmatprep.subr.mxu0 0.0
        %1115 = vmatpush1.xpose.msra.mxu0 0.0
        %1116 = vmatprep.subr.mxu0 0.0
        %1117 = vmatpush1.xpose.msra.mxu0 0.0
        %1118 = vmatprep.subr.mxu0 0.0
        %1119 = vmatpush1.xpose.msra.mxu0 0.0
        %1120 = vmatprep.subr.mxu0 0.0
        %1121 = vmatpush1.xpose.msra.mxu0 0.0
        %1122 = vmatprep.subr.mxu0 0.0
        %1123 = vmatpush1.xpose.msra.mxu0 0.0
        %1124 = vmatprep.subr.mxu0 0.0
        %1125 = vmatpush1.xpose.msra.mxu0 0.0
        %1126 = vmatprep.subr.mxu0 0.0
        %1127 = vmatpush1.xpose.msra.mxu0 0.0
        %1128 = vmatprep.subr.mxu0 0.0
        %1129 = vmatpush1.xpose.msra.mxu0 0.0
        %1130 = vmatprep.subr.mxu0 0.0
        %1131 = vmatpush1.xpose.msra.mxu0 0.0
        %1132 = vmatprep.subr.mxu0 0.0
        %1133 = vmatpush1.xpose.msra.mxu0 0.0
        %1134 = vmatprep.subr.mxu0 0.0
        %1135 = vmatpush1.xpose.msra.mxu0 0.0
        %1136 = vmatprep.subr.mxu0 0.0
        %1137 = vmatpush1.xpose.msra.mxu0 0.0
        %1138 = vmatprep.subr.mxu0 0.0
        %1139 = vmatpush1.xpose.msra.mxu0 0.0
        %1140 = vmatprep.subr.mxu0 0.0
        %1141 = vmatpush1.xpose.msra.mxu0 0.0
        %1142 = vmatprep.subr.mxu0 0.0
        %1143 = vmatpush1.xpose.msra.mxu0 0.0
        %1144 = vmatprep.subr.mxu0 0.0
        %1145 = vmatpush1.xpose.msra.mxu0 0.0
        %1146 = vmatprep.subr.mxu0 0.0
        %1147 = vmatpush1.xpose.msra.mxu0 0.0
        %1148 = vmatprep.subr.mxu0 0.0
        %1149 = vmatpush1.xpose.msra.mxu0 0.0
        %1150 = vmatprep.subr.mxu0 0.0
        %1151 = vmatpush1.xpose.msra.mxu0 0.0
        %1152 = vmatprep.mubr.f32.mxu0 %v346
        %1153 = vmatmul.mubr.f32.gmra.mrb[0].mxu0 %v344
        %v1154 = vpop.f32.mrb[0].mxu0
        %v1155 = vadd.f32 %v1085, %v1154
        %v1156 = vpop.f32.mrb[0].mxu0
        %1157 = vdwg.mxu0
        %1158 = vmatprep.subr.mxu0 %v714
        %1159 = vmatpush1.xpose.msra.mxu0 %v706
        %1160 = vmatprep.subr.mxu0 0.0
        %1161 = vmatpush1.xpose.msra.mxu0 0.0
        %1162 = vmatprep.subr.mxu0 0.0
        %1163 = vmatpush1.xpose.msra.mxu0 0.0
        %1164 = vmatprep.subr.mxu0 0.0
        %1165 = vmatpush1.xpose.msra.mxu0 0.0
        %1166 = vmatprep.subr.mxu0 0.0
        %1167 = vmatpush1.xpose.msra.mxu0 0.0
        %1168 = vmatprep.subr.mxu0 0.0
        %1169 = vmatpush1.xpose.msra.mxu0 0.0
        %1170 = vmatprep.subr.mxu0 0.0
        %1171 = vmatpush1.xpose.msra.mxu0 0.0
        %1172 = vmatprep.subr.mxu0 0.0
        %1173 = vmatpush1.xpose.msra.mxu0 0.0
        %1174 = vmatprep.subr.mxu0 0.0
        %1175 = vmatpush1.xpose.msra.mxu0 0.0
        %1176 = vmatprep.subr.mxu0 0.0
        %1177 = vmatpush1.xpose.msra.mxu0 0.0
        %1178 = vmatprep.subr.mxu0 0.0
        %1179 = vmatpush1.xpose.msra.mxu0 0.0
        %1180 = vmatprep.subr.mxu0 0.0
        %1181 = vmatpush1.xpose.msra.mxu0 0.0
        %1182 = vmatprep.subr.mxu0 0.0
        %1183 = vmatpush1.xpose.msra.mxu0 0.0
        %1184 = vmatprep.subr.mxu0 0.0
        %1185 = vmatpush1.xpose.msra.mxu0 0.0
        %1186 = vmatprep.subr.mxu0 0.0
        %1187 = vmatpush1.xpose.msra.mxu0 0.0
        %1188 = vmatprep.subr.mxu0 0.0
        %1189 = vmatpush1.xpose.msra.mxu0 0.0
        %1190 = vmatprep.subr.mxu0 0.0
        %1191 = vmatpush1.xpose.msra.mxu0 0.0
        %1192 = vmatprep.subr.mxu0 0.0
        %1193 = vmatpush1.xpose.msra.mxu0 0.0
        %1194 = vmatprep.subr.mxu0 0.0
        %1195 = vmatpush1.xpose.msra.mxu0 0.0
        %1196 = vmatprep.subr.mxu0 0.0
        %1197 = vmatpush1.xpose.msra.mxu0 0.0
        %1198 = vmatprep.subr.mxu0 0.0
        %1199 = vmatpush1.xpose.msra.mxu0 0.0
        %1200 = vmatprep.subr.mxu0 0.0
        %1201 = vmatpush1.xpose.msra.mxu0 0.0
        %1202 = vmatprep.subr.mxu0 0.0
        %1203 = vmatpush1.xpose.msra.mxu0 0.0
        %1204 = vmatprep.subr.mxu0 0.0
        %1205 = vmatpush1.xpose.msra.mxu0 0.0
        %1206 = vmatprep.subr.mxu0 0.0
        %1207 = vmatpush1.xpose.msra.mxu0 0.0
        %1208 = vmatprep.subr.mxu0 0.0
        %1209 = vmatpush1.xpose.msra.mxu0 0.0
        %1210 = vmatprep.subr.mxu0 0.0
        %1211 = vmatpush1.xpose.msra.mxu0 0.0
        %1212 = vmatprep.subr.mxu0 0.0
        %1213 = vmatpush1.xpose.msra.mxu0 0.0
        %1214 = vmatprep.subr.mxu0 0.0
        %1215 = vmatpush1.xpose.msra.mxu0 0.0
        %1216 = vmatprep.subr.mxu0 0.0
        %1217 = vmatpush1.xpose.msra.mxu0 0.0
        %1218 = vmatprep.subr.mxu0 0.0
        %1219 = vmatpush1.xpose.msra.mxu0 0.0
        %1220 = vmatprep.subr.mxu0 0.0
        %1221 = vmatpush1.xpose.msra.mxu0 0.0
        %1222 = vmatprep.mubr.f32.mxu0 %v362
        %1223 = vmatmul.mubr.f32.gmra.mrb[0].mxu0 %v354
        %v1224 = vpop.f32.mrb[0].mxu0
        %v1225 = vadd.f32 %v1155, %v1224
        %v1226 = vpop.f32.mrb[0].mxu0
        %1227 = vdwg.mxu0
        %1228 = vmatprep.subr.mxu0 %v715
        %1229 = vmatpush1.xpose.msra.mxu0 %v713
        %1230 = vmatprep.subr.mxu0 0.0
        %1231 = vmatpush1.xpose.msra.mxu0 0.0
        %1232 = vmatprep.subr.mxu0 0.0
        %1233 = vmatpush1.xpose.msra.mxu0 0.0
        %1234 = vmatprep.subr.mxu0 0.0
        %1235 = vmatpush1.xpose.msra.mxu0 0.0
        %1236 = vmatprep.subr.mxu0 0.0
        %1237 = vmatpush1.xpose.msra.mxu0 0.0
        %1238 = vmatprep.subr.mxu0 0.0
        %1239 = vmatpush1.xpose.msra.mxu0 0.0
        %1240 = vmatprep.subr.mxu0 0.0
        %1241 = vmatpush1.xpose.msra.mxu0 0.0
        %1242 = vmatprep.subr.mxu0 0.0
        %1243 = vmatpush1.xpose.msra.mxu0 0.0
        %1244 = vmatprep.subr.mxu0 0.0
        %1245 = vmatpush1.xpose.msra.mxu0 0.0
        %1246 = vmatprep.subr.mxu0 0.0
        %1247 = vmatpush1.xpose.msra.mxu0 0.0
        %1248 = vmatprep.subr.mxu0 0.0
        %1249 = vmatpush1.xpose.msra.mxu0 0.0
        %1250 = vmatprep.subr.mxu0 0.0
        %1251 = vmatpush1.xpose.msra.mxu0 0.0
        %1252 = vmatprep.subr.mxu0 0.0
        %1253 = vmatpush1.xpose.msra.mxu0 0.0
        %1254 = vmatprep.subr.mxu0 0.0
        %1255 = vmatpush1.xpose.msra.mxu0 0.0
        %1256 = vmatprep.subr.mxu0 0.0
        %1257 = vmatpush1.xpose.msra.mxu0 0.0
        %1258 = vmatprep.subr.mxu0 0.0
        %1259 = vmatpush1.xpose.msra.mxu0 0.0
        %1260 = vmatprep.subr.mxu0 0.0
        %1261 = vmatpush1.xpose.msra.mxu0 0.0
        %1262 = vmatprep.subr.mxu0 0.0
        %1263 = vmatpush1.xpose.msra.mxu0 0.0
        %1264 = vmatprep.subr.mxu0 0.0
        %1265 = vmatpush1.xpose.msra.mxu0 0.0
        %1266 = vmatprep.subr.mxu0 0.0
        %1267 = vmatpush1.xpose.msra.mxu0 0.0
        %1268 = vmatprep.subr.mxu0 0.0
        %1269 = vmatpush1.xpose.msra.mxu0 0.0
        %1270 = vmatprep.subr.mxu0 0.0
        %1271 = vmatpush1.xpose.msra.mxu0 0.0
        %1272 = vmatprep.subr.mxu0 0.0
        %1273 = vmatpush1.xpose.msra.mxu0 0.0
        %1274 = vmatprep.subr.mxu0 0.0
        %1275 = vmatpush1.xpose.msra.mxu0 0.0
        %1276 = vmatprep.subr.mxu0 0.0
        %1277 = vmatpush1.xpose.msra.mxu0 0.0
        %1278 = vmatprep.subr.mxu0 0.0
        %1279 = vmatpush1.xpose.msra.mxu0 0.0
        %1280 = vmatprep.subr.mxu0 0.0
        %1281 = vmatpush1.xpose.msra.mxu0 0.0
        %1282 = vmatprep.subr.mxu0 0.0
        %1283 = vmatpush1.xpose.msra.mxu0 0.0
        %1284 = vmatprep.subr.mxu0 0.0
        %1285 = vmatpush1.xpose.msra.mxu0 0.0
        %1286 = vmatprep.subr.mxu0 0.0
        %1287 = vmatpush1.xpose.msra.mxu0 0.0
        %1288 = vmatprep.subr.mxu0 0.0
        %1289 = vmatpush1.xpose.msra.mxu0 0.0
        %1290 = vmatprep.subr.mxu0 0.0
        %1291 = vmatpush1.xpose.msra.mxu0 0.0
        %1292 = vmatprep.mubr.f32.mxu0 %v363
        %1293 = vmatmul.mubr.f32.gmra.mrb[0].mxu0 %v361
        %v1294 = vpop.f32.mrb[0].mxu0
        %v1295 = vadd.f32 %v1225, %v1294
        %v1296 = vpop.f32.mrb[0].mxu0
        %1297 = vdwg.mxu0
        %1298 = vmatprep.subr.mxu0 %v731
        %1299 = vmatpush1.xpose.msra.mxu0 %v723
        %1300 = vmatprep.subr.mxu0 0.0
        %1301 = vmatpush1.xpose.msra.mxu0 0.0
        %1302 = vmatprep.subr.mxu0 0.0
        %1303 = vmatpush1.xpose.msra.mxu0 0.0
        %1304 = vmatprep.subr.mxu0 0.0
        %1305 = vmatpush1.xpose.msra.mxu0 0.0
        %1306 = vmatprep.subr.mxu0 0.0
        %1307 = vmatpush1.xpose.msra.mxu0 0.0
        %1308 = vmatprep.subr.mxu0 0.0
        %1309 = vmatpush1.xpose.msra.mxu0 0.0
        %1310 = vmatprep.subr.mxu0 0.0
        %1311 = vmatpush1.xpose.msra.mxu0 0.0
        %1312 = vmatprep.subr.mxu0 0.0
        %1313 = vmatpush1.xpose.msra.mxu0 0.0
        %1314 = vmatprep.subr.mxu0 0.0
        %1315 = vmatpush1.xpose.msra.mxu0 0.0
        %1316 = vmatprep.subr.mxu0 0.0
        %1317 = vmatpush1.xpose.msra.mxu0 0.0
        %1318 = vmatprep.subr.mxu0 0.0
        %1319 = vmatpush1.xpose.msra.mxu0 0.0
        %1320 = vmatprep.subr.mxu0 0.0
        %1321 = vmatpush1.xpose.msra.mxu0 0.0
        %1322 = vmatprep.subr.mxu0 0.0
        %1323 = vmatpush1.xpose.msra.mxu0 0.0
        %1324 = vmatprep.subr.mxu0 0.0
        %1325 = vmatpush1.xpose.msra.mxu0 0.0
        %1326 = vmatprep.subr.mxu0 0.0
        %1327 = vmatpush1.xpose.msra.mxu0 0.0
        %1328 = vmatprep.subr.mxu0 0.0
        %1329 = vmatpush1.xpose.msra.mxu0 0.0
        %1330 = vmatprep.subr.mxu0 0.0
        %1331 = vmatpush1.xpose.msra.mxu0 0.0
        %1332 = vmatprep.subr.mxu0 0.0
        %1333 = vmatpush1.xpose.msra.mxu0 0.0
        %1334 = vmatprep.subr.mxu0 0.0
        %1335 = vmatpush1.xpose.msra.mxu0 0.0
        %1336 = vmatprep.subr.mxu0 0.0
        %1337 = vmatpush1.xpose.msra.mxu0 0.0
        %1338 = vmatprep.subr.mxu0 0.0
        %1339 = vmatpush1.xpose.msra.mxu0 0.0
        %1340 = vmatprep.subr.mxu0 0.0
        %1341 = vmatpush1.xpose.msra.mxu0 0.0
        %1342 = vmatprep.subr.mxu0 0.0
        %1343 = vmatpush1.xpose.msra.mxu0 0.0
        %1344 = vmatprep.subr.mxu0 0.0
        %1345 = vmatpush1.xpose.msra.mxu0 0.0
        %1346 = vmatprep.subr.mxu0 0.0
        %1347 = vmatpush1.xpose.msra.mxu0 0.0
        %1348 = vmatprep.subr.mxu0 0.0
        %1349 = vmatpush1.xpose.msra.mxu0 0.0
        %1350 = vmatprep.subr.mxu0 0.0
        %1351 = vmatpush1.xpose.msra.mxu0 0.0
        %1352 = vmatprep.subr.mxu0 0.0
        %1353 = vmatpush1.xpose.msra.mxu0 0.0
        %1354 = vmatprep.subr.mxu0 0.0
        %1355 = vmatpush1.xpose.msra.mxu0 0.0
        %1356 = vmatprep.subr.mxu0 0.0
        %1357 = vmatpush1.xpose.msra.mxu0 0.0
        %1358 = vmatprep.subr.mxu0 0.0
        %1359 = vmatpush1.xpose.msra.mxu0 0.0
        %1360 = vmatprep.subr.mxu0 0.0
        %1361 = vmatpush1.xpose.msra.mxu0 0.0
        %1362 = vmatprep.mubr.f32.mxu0 %v379
        %1363 = vmatmul.mubr.f32.gmra.mrb[0].mxu0 %v371
        %v1364 = vpop.f32.mrb[0].mxu0
        %v1365 = vadd.f32 %v1295, %v1364
        %v1366 = vpop.f32.mrb[0].mxu0
        %1367 = vdwg.mxu0
        %1368 = vmatprep.subr.mxu0 %v732
        %1369 = vmatpush1.xpose.msra.mxu0 %v730
        %1370 = vmatprep.subr.mxu0 0.0
        %1371 = vmatpush1.xpose.msra.mxu0 0.0
        %1372 = vmatprep.subr.mxu0 0.0
        %1373 = vmatpush1.xpose.msra.mxu0 0.0
        %1374 = vmatprep.subr.mxu0 0.0
        %1375 = vmatpush1.xpose.msra.mxu0 0.0
        %1376 = vmatprep.subr.mxu0 0.0
        %1377 = vmatpush1.xpose.msra.mxu0 0.0
        %1378 = vmatprep.subr.mxu0 0.0
        %1379 = vmatpush1.xpose.msra.mxu0 0.0
        %1380 = vmatprep.subr.mxu0 0.0
        %1381 = vmatpush1.xpose.msra.mxu0 0.0
        %1382 = vmatprep.subr.mxu0 0.0
        %1383 = vmatpush1.xpose.msra.mxu0 0.0
        %1384 = vmatprep.subr.mxu0 0.0
        %1385 = vmatpush1.xpose.msra.mxu0 0.0
        %1386 = vmatprep.subr.mxu0 0.0
        %1387 = vmatpush1.xpose.msra.mxu0 0.0
        %1388 = vmatprep.subr.mxu0 0.0
        %1389 = vmatpush1.xpose.msra.mxu0 0.0
        %1390 = vmatprep.subr.mxu0 0.0
        %1391 = vmatpush1.xpose.msra.mxu0 0.0
        %1392 = vmatprep.subr.mxu0 0.0
        %1393 = vmatpush1.xpose.msra.mxu0 0.0
        %1394 = vmatprep.subr.mxu0 0.0
        %1395 = vmatpush1.xpose.msra.mxu0 0.0
        %1396 = vmatprep.subr.mxu0 0.0
        %1397 = vmatpush1.xpose.msra.mxu0 0.0
        %1398 = vmatprep.subr.mxu0 0.0
        %1399 = vmatpush1.xpose.msra.mxu0 0.0
        %1400 = vmatprep.subr.mxu0 0.0
        %1401 = vmatpush1.xpose.msra.mxu0 0.0
        %1402 = vmatprep.subr.mxu0 0.0
        %1403 = vmatpush1.xpose.msra.mxu0 0.0
        %1404 = vmatprep.subr.mxu0 0.0
        %1405 = vmatpush1.xpose.msra.mxu0 0.0
        %1406 = vmatprep.subr.mxu0 0.0
        %1407 = vmatpush1.xpose.msra.mxu0 0.0
        %1408 = vmatprep.subr.mxu0 0.0
        %1409 = vmatpush1.xpose.msra.mxu0 0.0
        %1410 = vmatprep.subr.mxu0 0.0
        %1411 = vmatpush1.xpose.msra.mxu0 0.0
        %1412 = vmatprep.subr.mxu0 0.0
        %1413 = vmatpush1.xpose.msra.mxu0 0.0
        %1414 = vmatprep.subr.mxu0 0.0
        %1415 = vmatpush1.xpose.msra.mxu0 0.0
        %1416 = vmatprep.subr.mxu0 0.0
        %1417 = vmatpush1.xpose.msra.mxu0 0.0
        %1418 = vmatprep.subr.mxu0 0.0
        %1419 = vmatpush1.xpose.msra.mxu0 0.0
        %1420 = vmatprep.subr.mxu0 0.0
        %1421 = vmatpush1.xpose.msra.mxu0 0.0
        %1422 = vmatprep.subr.mxu0 0.0
        %1423 = vmatpush1.xpose.msra.mxu0 0.0
        %1424 = vmatprep.subr.mxu0 0.0
        %1425 = vmatpush1.xpose.msra.mxu0 0.0
        %1426 = vmatprep.subr.mxu0 0.0
        %1427 = vmatpush1.xpose.msra.mxu0 0.0
        %1428 = vmatprep.subr.mxu0 0.0
        %1429 = vmatpush1.xpose.msra.mxu0 0.0
        %1430 = vmatprep.subr.mxu0 0.0
        %1431 = vmatpush1.xpose.msra.mxu0 0.0
        %1432 = vmatprep.mubr.f32.mxu0 %v380
        %1433 = vmatmul.mubr.f32.gmra.mrb[0].mxu0 %v378
        %v1434 = vpop.f32.mrb[0].mxu0
        %v1435 = vadd.f32 %v1365, %v1434
        %v1436 = vpop.f32.mrb[0].mxu0
        %1437 = vdwg.mxu0
        %1438 = vmatprep.subr.mxu0 %v748
        %1439 = vmatpush1.xpose.msra.mxu0 %v740
        %1440 = vmatprep.subr.mxu0 0.0
        %1441 = vmatpush1.xpose.msra.mxu0 0.0
        %1442 = vmatprep.subr.mxu0 0.0
        %1443 = vmatpush1.xpose.msra.mxu0 0.0
        %1444 = vmatprep.subr.mxu0 0.0
        %1445 = vmatpush1.xpose.msra.mxu0 0.0
        %1446 = vmatprep.subr.mxu0 0.0
        %1447 = vmatpush1.xpose.msra.mxu0 0.0
        %1448 = vmatprep.subr.mxu0 0.0
        %1449 = vmatpush1.xpose.msra.mxu0 0.0
        %1450 = vmatprep.subr.mxu0 0.0
        %1451 = vmatpush1.xpose.msra.mxu0 0.0
        %1452 = vmatprep.subr.mxu0 0.0
        %1453 = vmatpush1.xpose.msra.mxu0 0.0
        %1454 = vmatprep.subr.mxu0 0.0
        %1455 = vmatpush1.xpose.msra.mxu0 0.0
        %1456 = vmatprep.subr.mxu0 0.0
        %1457 = vmatpush1.xpose.msra.mxu0 0.0
        %1458 = vmatprep.subr.mxu0 0.0
        %1459 = vmatpush1.xpose.msra.mxu0 0.0
        %1460 = vmatprep.subr.mxu0 0.0
        %1461 = vmatpush1.xpose.msra.mxu0 0.0
        %1462 = vmatprep.subr.mxu0 0.0
        %1463 = vmatpush1.xpose.msra.mxu0 0.0
        %1464 = vmatprep.subr.mxu0 0.0
        %1465 = vmatpush1.xpose.msra.mxu0 0.0
        %1466 = vmatprep.subr.mxu0 0.0
        %1467 = vmatpush1.xpose.msra.mxu0 0.0
        %1468 = vmatprep.subr.mxu0 0.0
        %1469 = vmatpush1.xpose.msra.mxu0 0.0
        %1470 = vmatprep.subr.mxu0 0.0
        %1471 = vmatpush1.xpose.msra.mxu0 0.0
        %1472 = vmatprep.subr.mxu0 0.0
        %1473 = vmatpush1.xpose.msra.mxu0 0.0
        %1474 = vmatprep.subr.mxu0 0.0
        %1475 = vmatpush1.xpose.msra.mxu0 0.0
        %1476 = vmatprep.subr.mxu0 0.0
        %1477 = vmatpush1.xpose.msra.mxu0 0.0
        %1478 = vmatprep.subr.mxu0 0.0
        %1479 = vmatpush1.xpose.msra.mxu0 0.0
        %1480 = vmatprep.subr.mxu0 0.0
        %1481 = vmatpush1.xpose.msra.mxu0 0.0
        %1482 = vmatprep.subr.mxu0 0.0
        %1483 = vmatpush1.xpose.msra.mxu0 0.0
        %1484 = vmatprep.subr.mxu0 0.0
        %1485 = vmatpush1.xpose.msra.mxu0 0.0
        %1486 = vmatprep.subr.mxu0 0.0
        %1487 = vmatpush1.xpose.msra.mxu0 0.0
        %1488 = vmatprep.subr.mxu0 0.0
        %1489 = vmatpush1.xpose.msra.mxu0 0.0
        %1490 = vmatprep.subr.mxu0 0.0
        %1491 = vmatpush1.xpose.msra.mxu0 0.0
        %1492 = vmatprep.subr.mxu0 0.0
        %1493 = vmatpush1.xpose.msra.mxu0 0.0
        %1494 = vmatprep.subr.mxu0 0.0
        %1495 = vmatpush1.xpose.msra.mxu0 0.0
        %1496 = vmatprep.subr.mxu0 0.0
        %1497 = vmatpush1.xpose.msra.mxu0 0.0
        %1498 = vmatprep.subr.mxu0 0.0
        %1499 = vmatpush1.xpose.msra.mxu0 0.0
        %1500 = vmatprep.subr.mxu0 0.0
        %1501 = vmatpush1.xpose.msra.mxu0 0.0
        %1502 = vmatprep.mubr.f32.mxu0 %v396
        %1503 = vmatmul.mubr.f32.gmra.mrb[0].mxu0 %v388
        %v1504 = vpop.f32.mrb[0].mxu0
        %v1505 = vadd.f32 %v1435, %v1504
        %v1506 = vpop.f32.mrb[0].mxu0
        %1507 = vdwg.mxu0
        %1508 = vmatprep.subr.mxu0 %v749
        %1509 = vmatpush1.xpose.msra.mxu0 %v747
        %1510 = vmatprep.subr.mxu0 0.0
        %1511 = vmatpush1.xpose.msra.mxu0 0.0
        %1512 = vmatprep.subr.mxu0 0.0
        %1513 = vmatpush1.xpose.msra.mxu0 0.0
        %1514 = vmatprep.subr.mxu0 0.0
        %1515 = vmatpush1.xpose.msra.mxu0 0.0
        %1516 = vmatprep.subr.mxu0 0.0
        %1517 = vmatpush1.xpose.msra.mxu0 0.0
        %1518 = vmatprep.subr.mxu0 0.0
        %1519 = vmatpush1.xpose.msra.mxu0 0.0
        %1520 = vmatprep.subr.mxu0 0.0
        %1521 = vmatpush1.xpose.msra.mxu0 0.0
        %1522 = vmatprep.subr.mxu0 0.0
        %1523 = vmatpush1.xpose.msra.mxu0 0.0
        %1524 = vmatprep.subr.mxu0 0.0
        %1525 = vmatpush1.xpose.msra.mxu0 0.0
        %1526 = vmatprep.subr.mxu0 0.0
        %1527 = vmatpush1.xpose.msra.mxu0 0.0
        %1528 = vmatprep.subr.mxu0 0.0
        %1529 = vmatpush1.xpose.msra.mxu0 0.0
        %1530 = vmatprep.subr.mxu0 0.0
        %1531 = vmatpush1.xpose.msra.mxu0 0.0
        %1532 = vmatprep.subr.mxu0 0.0
        %1533 = vmatpush1.xpose.msra.mxu0 0.0
        %1534 = vmatprep.subr.mxu0 0.0
        %1535 = vmatpush1.xpose.msra.mxu0 0.0
        %1536 = vmatprep.subr.mxu0 0.0
        %1537 = vmatpush1.xpose.msra.mxu0 0.0
        %1538 = vmatprep.subr.mxu0 0.0
        %1539 = vmatpush1.xpose.msra.mxu0 0.0
        %1540 = vmatprep.subr.mxu0 0.0
        %1541 = vmatpush1.xpose.msra.mxu0 0.0
        %1542 = vmatprep.subr.mxu0 0.0
        %1543 = vmatpush1.xpose.msra.mxu0 0.0
        %1544 = vmatprep.subr.mxu0 0.0
        %1545 = vmatpush1.xpose.msra.mxu0 0.0
        %1546 = vmatprep.subr.mxu0 0.0
        %1547 = vmatpush1.xpose.msra.mxu0 0.0
        %1548 = vmatprep.subr.mxu0 0.0
        %1549 = vmatpush1.xpose.msra.mxu0 0.0
        %1550 = vmatprep.subr.mxu0 0.0
        %1551 = vmatpush1.xpose.msra.mxu0 0.0
        %1552 = vmatprep.subr.mxu0 0.0
        %1553 = vmatpush1.xpose.msra.mxu0 0.0
        %1554 = vmatprep.subr.mxu0 0.0
        %1555 = vmatpush1.xpose.msra.mxu0 0.0
        %1556 = vmatprep.subr.mxu0 0.0
        %1557 = vmatpush1.xpose.msra.mxu0 0.0
        %1558 = vmatprep.subr.mxu0 0.0
        %1559 = vmatpush1.xpose.msra.mxu0 0.0
        %1560 = vmatprep.subr.mxu0 0.0
        %1561 = vmatpush1.xpose.msra.mxu0 0.0
        %1562 = vmatprep.subr.mxu0 0.0
        %1563 = vmatpush1.xpose.msra.mxu0 0.0
        %1564 = vmatprep.subr.mxu0 0.0
        %1565 = vmatpush1.xpose.msra.mxu0 0.0
        %1566 = vmatprep.subr.mxu0 0.0
        %1567 = vmatpush1.xpose.msra.mxu0 0.0
        %1568 = vmatprep.subr.mxu0 0.0
        %1569 = vmatpush1.xpose.msra.mxu0 0.0
        %1570 = vmatprep.subr.mxu0 0.0
        %1571 = vmatpush1.xpose.msra.mxu0 0.0
        %1572 = vmatprep.mubr.f32.mxu0 %v397
        %1573 = vmatmul.mubr.f32.gmra.mrb[0].mxu0 %v395
        %v1574 = vpop.f32.mrb[0].mxu0
        %v1575 = vadd.f32 %v1505, %v1574
        %v1576 = vpop.f32.mrb[0].mxu0
        %1577 = vdwg.mxu0
        %1578 = vmatprep.subr.mxu0 %v765
        %1579 = vmatpush1.xpose.msra.mxu0 %v757
        %1580 = vmatprep.subr.mxu0 0.0
        %1581 = vmatpush1.xpose.msra.mxu0 0.0
        %1582 = vmatprep.subr.mxu0 0.0
        %1583 = vmatpush1.xpose.msra.mxu0 0.0
        %1584 = vmatprep.subr.mxu0 0.0
        %1585 = vmatpush1.xpose.msra.mxu0 0.0
        %1586 = vmatprep.subr.mxu0 0.0
        %1587 = vmatpush1.xpose.msra.mxu0 0.0
        %1588 = vmatprep.subr.mxu0 0.0
        %1589 = vmatpush1.xpose.msra.mxu0 0.0
        %1590 = vmatprep.subr.mxu0 0.0
        %1591 = vmatpush1.xpose.msra.mxu0 0.0
        %1592 = vmatprep.subr.mxu0 0.0
        %1593 = vmatpush1.xpose.msra.mxu0 0.0
        %1594 = vmatprep.subr.mxu0 0.0
        %1595 = vmatpush1.xpose.msra.mxu0 0.0
        %1596 = vmatprep.subr.mxu0 0.0
        %1597 = vmatpush1.xpose.msra.mxu0 0.0
        %1598 = vmatprep.subr.mxu0 0.0
        %1599 = vmatpush1.xpose.msra.mxu0 0.0
        %1600 = vmatprep.subr.mxu0 0.0
        %1601 = vmatpush1.xpose.msra.mxu0 0.0
        %1602 = vmatprep.subr.mxu0 0.0
        %1603 = vmatpush1.xpose.msra.mxu0 0.0
        %1604 = vmatprep.subr.mxu0 0.0
        %1605 = vmatpush1.xpose.msra.mxu0 0.0
        %1606 = vmatprep.subr.mxu0 0.0
        %1607 = vmatpush1.xpose.msra.mxu0 0.0
        %1608 = vmatprep.subr.mxu0 0.0
        %1609 = vmatpush1.xpose.msra.mxu0 0.0
        %1610 = vmatprep.subr.mxu0 0.0
        %1611 = vmatpush1.xpose.msra.mxu0 0.0
        %1612 = vmatprep.subr.mxu0 0.0
        %1613 = vmatpush1.xpose.msra.mxu0 0.0
        %1614 = vmatprep.subr.mxu0 0.0
        %1615 = vmatpush1.xpose.msra.mxu0 0.0
        %1616 = vmatprep.subr.mxu0 0.0
        %1617 = vmatpush1.xpose.msra.mxu0 0.0
        %1618 = vmatprep.subr.mxu0 0.0
        %1619 = vmatpush1.xpose.msra.mxu0 0.0
        %1620 = vmatprep.subr.mxu0 0.0
        %1621 = vmatpush1.xpose.msra.mxu0 0.0
        %1622 = vmatprep.subr.mxu0 0.0
        %1623 = vmatpush1.xpose.msra.mxu0 0.0
        %1624 = vmatprep.subr.mxu0 0.0
        %1625 = vmatpush1.xpose.msra.mxu0 0.0
        %1626 = vmatprep.subr.mxu0 0.0
        %1627 = vmatpush1.xpose.msra.mxu0 0.0
        %1628 = vmatprep.subr.mxu0 0.0
        %1629 = vmatpush1.xpose.msra.mxu0 0.0
        %1630 = vmatprep.subr.mxu0 0.0
        %1631 = vmatpush1.xpose.msra.mxu0 0.0
        %1632 = vmatprep.subr.mxu0 0.0
        %1633 = vmatpush1.xpose.msra.mxu0 0.0
        %1634 = vmatprep.subr.mxu0 0.0
        %1635 = vmatpush1.xpose.msra.mxu0 0.0
        %1636 = vmatprep.subr.mxu0 0.0
        %1637 = vmatpush1.xpose.msra.mxu0 0.0
        %1638 = vmatprep.subr.mxu0 0.0
        %1639 = vmatpush1.xpose.msra.mxu0 0.0
        %1640 = vmatprep.subr.mxu0 0.0
        %1641 = vmatpush1.xpose.msra.mxu0 0.0
        %1642 = vmatprep.mubr.f32.mxu0 %v413
        %1643 = vmatmul.mubr.f32.gmra.mrb[0].mxu0 %v405
        %v1644 = vpop.f32.mrb[0].mxu0
        %v1645 = vadd.f32 %v1575, %v1644
        %v1646 = vpop.f32.mrb[0].mxu0
        %1647 = vdwg.mxu0
        %1648 = vmatprep.subr.mxu0 %v766
        %1649 = vmatpush1.xpose.msra.mxu0 %v764
        %1650 = vmatprep.subr.mxu0 0.0
        %1651 = vmatpush1.xpose.msra.mxu0 0.0
        %1652 = vmatprep.subr.mxu0 0.0
        %1653 = vmatpush1.xpose.msra.mxu0 0.0
        %1654 = vmatprep.subr.mxu0 0.0
        %1655 = vmatpush1.xpose.msra.mxu0 0.0
        %1656 = vmatprep.subr.mxu0 0.0
        %1657 = vmatpush1.xpose.msra.mxu0 0.0
        %1658 = vmatprep.subr.mxu0 0.0
        %1659 = vmatpush1.xpose.msra.mxu0 0.0
        %1660 = vmatprep.subr.mxu0 0.0
        %1661 = vmatpush1.xpose.msra.mxu0 0.0
        %1662 = vmatprep.subr.mxu0 0.0
        %1663 = vmatpush1.xpose.msra.mxu0 0.0
        %1664 = vmatprep.subr.mxu0 0.0
        %1665 = vmatpush1.xpose.msra.mxu0 0.0
        %1666 = vmatprep.subr.mxu0 0.0
        %1667 = vmatpush1.xpose.msra.mxu0 0.0
        %1668 = vmatprep.subr.mxu0 0.0
        %1669 = vmatpush1.xpose.msra.mxu0 0.0
        %1670 = vmatprep.subr.mxu0 0.0
        %1671 = vmatpush1.xpose.msra.mxu0 0.0
        %1672 = vmatprep.subr.mxu0 0.0
        %1673 = vmatpush1.xpose.msra.mxu0 0.0
        %1674 = vmatprep.subr.mxu0 0.0
        %1675 = vmatpush1.xpose.msra.mxu0 0.0
        %1676 = vmatprep.subr.mxu0 0.0
        %1677 = vmatpush1.xpose.msra.mxu0 0.0
        %1678 = vmatprep.subr.mxu0 0.0
        %1679 = vmatpush1.xpose.msra.mxu0 0.0
        %1680 = vmatprep.subr.mxu0 0.0
        %1681 = vmatpush1.xpose.msra.mxu0 0.0
        %1682 = vmatprep.subr.mxu0 0.0
        %1683 = vmatpush1.xpose.msra.mxu0 0.0
        %1684 = vmatprep.subr.mxu0 0.0
        %1685 = vmatpush1.xpose.msra.mxu0 0.0
        %1686 = vmatprep.subr.mxu0 0.0
        %1687 = vmatpush1.xpose.msra.mxu0 0.0
        %1688 = vmatprep.subr.mxu0 0.0
        %1689 = vmatpush1.xpose.msra.mxu0 0.0
        %1690 = vmatprep.subr.mxu0 0.0
        %1691 = vmatpush1.xpose.msra.mxu0 0.0
        %1692 = vmatprep.subr.mxu0 0.0
        %1693 = vmatpush1.xpose.msra.mxu0 0.0
        %1694 = vmatprep.subr.mxu0 0.0
        %1695 = vmatpush1.xpose.msra.mxu0 0.0
        %1696 = vmatprep.subr.mxu0 0.0
        %1697 = vmatpush1.xpose.msra.mxu0 0.0
        %1698 = vmatprep.subr.mxu0 0.0
        %1699 = vmatpush1.xpose.msra.mxu0 0.0
        %1700 = vmatprep.subr.mxu0 0.0
        %1701 = vmatpush1.xpose.msra.mxu0 0.0
        %1702 = vmatprep.subr.mxu0 0.0
        %1703 = vmatpush1.xpose.msra.mxu0 0.0
        %1704 = vmatprep.subr.mxu0 0.0
        %1705 = vmatpush1.xpose.msra.mxu0 0.0
        %1706 = vmatprep.subr.mxu0 0.0
        %1707 = vmatpush1.xpose.msra.mxu0 0.0
        %1708 = vmatprep.subr.mxu0 0.0
        %1709 = vmatpush1.xpose.msra.mxu0 0.0
        %1710 = vmatprep.subr.mxu0 0.0
        %1711 = vmatpush1.xpose.msra.mxu0 0.0
        %1712 = vmatprep.mubr.f32.mxu0 %v414
        %1713 = vmatmul.mubr.f32.gmra.mrb[0].mxu0 %v412
        %v1714 = vpop.f32.mrb[0].mxu0
        %v1715 = vadd.f32 %v1645, %v1714
        %v1716 = vpop.f32.mrb[0].mxu0
        %1717 = vdwg.mxu0
        %1718 = vmatprep.subr.mxu0 %v782
        %1719 = vmatpush1.xpose.msra.mxu0 %v774
        %1720 = vmatprep.subr.mxu0 0.0
        %1721 = vmatpush1.xpose.msra.mxu0 0.0
        %1722 = vmatprep.subr.mxu0 0.0
        %1723 = vmatpush1.xpose.msra.mxu0 0.0
        %1724 = vmatprep.subr.mxu0 0.0
        %1725 = vmatpush1.xpose.msra.mxu0 0.0
        %1726 = vmatprep.subr.mxu0 0.0
        %1727 = vmatpush1.xpose.msra.mxu0 0.0
        %1728 = vmatprep.subr.mxu0 0.0
        %1729 = vmatpush1.xpose.msra.mxu0 0.0
        %1730 = vmatprep.subr.mxu0 0.0
        %1731 = vmatpush1.xpose.msra.mxu0 0.0
        %1732 = vmatprep.subr.mxu0 0.0
        %1733 = vmatpush1.xpose.msra.mxu0 0.0
        %1734 = vmatprep.subr.mxu0 0.0
        %1735 = vmatpush1.xpose.msra.mxu0 0.0
        %1736 = vmatprep.subr.mxu0 0.0
        %1737 = vmatpush1.xpose.msra.mxu0 0.0
        %1738 = vmatprep.subr.mxu0 0.0
        %1739 = vmatpush1.xpose.msra.mxu0 0.0
        %1740 = vmatprep.subr.mxu0 0.0
        %1741 = vmatpush1.xpose.msra.mxu0 0.0
        %1742 = vmatprep.subr.mxu0 0.0
        %1743 = vmatpush1.xpose.msra.mxu0 0.0
        %1744 = vmatprep.subr.mxu0 0.0
        %1745 = vmatpush1.xpose.msra.mxu0 0.0
        %1746 = vmatprep.subr.mxu0 0.0
        %1747 = vmatpush1.xpose.msra.mxu0 0.0
        %1748 = vmatprep.subr.mxu0 0.0
        %1749 = vmatpush1.xpose.msra.mxu0 0.0
        %1750 = vmatprep.subr.mxu0 0.0
        %1751 = vmatpush1.xpose.msra.mxu0 0.0
        %1752 = vmatprep.subr.mxu0 0.0
        %1753 = vmatpush1.xpose.msra.mxu0 0.0
        %1754 = vmatprep.subr.mxu0 0.0
        %1755 = vmatpush1.xpose.msra.mxu0 0.0
        %1756 = vmatprep.subr.mxu0 0.0
        %1757 = vmatpush1.xpose.msra.mxu0 0.0
        %1758 = vmatprep.subr.mxu0 0.0
        %1759 = vmatpush1.xpose.msra.mxu0 0.0
        %1760 = vmatprep.subr.mxu0 0.0
        %1761 = vmatpush1.xpose.msra.mxu0 0.0
        %1762 = vmatprep.subr.mxu0 0.0
        %1763 = vmatpush1.xpose.msra.mxu0 0.0
        %1764 = vmatprep.subr.mxu0 0.0
        %1765 = vmatpush1.xpose.msra.mxu0 0.0
        %1766 = vmatprep.subr.mxu0 0.0
        %1767 = vmatpush1.xpose.msra.mxu0 0.0
        %1768 = vmatprep.subr.mxu0 0.0
        %1769 = vmatpush1.xpose.msra.mxu0 0.0
        %1770 = vmatprep.subr.mxu0 0.0
        %1771 = vmatpush1.xpose.msra.mxu0 0.0
        %1772 = vmatprep.subr.mxu0 0.0
        %1773 = vmatpush1.xpose.msra.mxu0 0.0
        %1774 = vmatprep.subr.mxu0 0.0
        %1775 = vmatpush1.xpose.msra.mxu0 0.0
        %1776 = vmatprep.subr.mxu0 0.0
        %1777 = vmatpush1.xpose.msra.mxu0 0.0
        %1778 = vmatprep.subr.mxu0 0.0
        %1779 = vmatpush1.xpose.msra.mxu0 0.0
        %1780 = vmatprep.subr.mxu0 0.0
        %1781 = vmatpush1.xpose.msra.mxu0 0.0
        %1782 = vmatprep.mubr.f32.mxu0 %v430
        %1783 = vmatmul.mubr.f32.gmra.mrb[0].mxu0 %v422
        %v1784 = vpop.f32.mrb[0].mxu0
        %v1785 = vadd.f32 %v1715, %v1784
        %v1786 = vpop.f32.mrb[0].mxu0
        %1787 = vdwg.mxu0
        %1788 = vmatprep.subr.mxu0 %v783
        %1789 = vmatpush1.xpose.msra.mxu0 %v781
        %1790 = vmatprep.subr.mxu0 0.0
        %1791 = vmatpush1.xpose.msra.mxu0 0.0
        %1792 = vmatprep.subr.mxu0 0.0
        %1793 = vmatpush1.xpose.msra.mxu0 0.0
        %1794 = vmatprep.subr.mxu0 0.0
        %1795 = vmatpush1.xpose.msra.mxu0 0.0
        %1796 = vmatprep.subr.mxu0 0.0
        %1797 = vmatpush1.xpose.msra.mxu0 0.0
        %1798 = vmatprep.subr.mxu0 0.0
        %1799 = vmatpush1.xpose.msra.mxu0 0.0
        %1800 = vmatprep.subr.mxu0 0.0
        %1801 = vmatpush1.xpose.msra.mxu0 0.0
        %1802 = vmatprep.subr.mxu0 0.0
        %1803 = vmatpush1.xpose.msra.mxu0 0.0
        %1804 = vmatprep.subr.mxu0 0.0
        %1805 = vmatpush1.xpose.msra.mxu0 0.0
        %1806 = vmatprep.subr.mxu0 0.0
        %1807 = vmatpush1.xpose.msra.mxu0 0.0
        %1808 = vmatprep.subr.mxu0 0.0
        %1809 = vmatpush1.xpose.msra.mxu0 0.0
        %1810 = vmatprep.subr.mxu0 0.0
        %1811 = vmatpush1.xpose.msra.mxu0 0.0
        %1812 = vmatprep.subr.mxu0 0.0
        %1813 = vmatpush1.xpose.msra.mxu0 0.0
        %1814 = vmatprep.subr.mxu0 0.0
        %1815 = vmatpush1.xpose.msra.mxu0 0.0
        %1816 = vmatprep.subr.mxu0 0.0
        %1817 = vmatpush1.xpose.msra.mxu0 0.0
        %1818 = vmatprep.subr.mxu0 0.0
        %1819 = vmatpush1.xpose.msra.mxu0 0.0
        %1820 = vmatprep.subr.mxu0 0.0
        %1821 = vmatpush1.xpose.msra.mxu0 0.0
        %1822 = vmatprep.subr.mxu0 0.0
        %1823 = vmatpush1.xpose.msra.mxu0 0.0
        %1824 = vmatprep.subr.mxu0 0.0
        %1825 = vmatpush1.xpose.msra.mxu0 0.0
        %1826 = vmatprep.subr.mxu0 0.0
        %1827 = vmatpush1.xpose.msra.mxu0 0.0
        %1828 = vmatprep.subr.mxu0 0.0
        %1829 = vmatpush1.xpose.msra.mxu0 0.0
        %1830 = vmatprep.subr.mxu0 0.0
        %1831 = vmatpush1.xpose.msra.mxu0 0.0
        %1832 = vmatprep.subr.mxu0 0.0
        %1833 = vmatpush1.xpose.msra.mxu0 0.0
        %1834 = vmatprep.subr.mxu0 0.0
        %1835 = vmatpush1.xpose.msra.mxu0 0.0
        %1836 = vmatprep.subr.mxu0 0.0
        %1837 = vmatpush1.xpose.msra.mxu0 0.0
        %1838 = vmatprep.subr.mxu0 0.0
        %1839 = vmatpush1.xpose.msra.mxu0 0.0
        %1840 = vmatprep.subr.mxu0 0.0
        %1841 = vmatpush1.xpose.msra.mxu0 0.0
        %1842 = vmatprep.subr.mxu0 0.0
        %1843 = vmatpush1.xpose.msra.mxu0 0.0
        %1844 = vmatprep.subr.mxu0 0.0
        %1845 = vmatpush1.xpose.msra.mxu0 0.0
        %1846 = vmatprep.subr.mxu0 0.0
        %1847 = vmatpush1.xpose.msra.mxu0 0.0
        %1848 = vmatprep.subr.mxu0 0.0
        %1849 = vmatpush1.xpose.msra.mxu0 0.0
        %1850 = vmatprep.subr.mxu0 0.0
        %1851 = vmatpush1.xpose.msra.mxu0 0.0
        %1852 = vmatprep.mubr.f32.mxu0 %v431
        %1853 = vmatmul.mubr.f32.gmra.mrb[0].mxu0 %v429
        %v1854 = vpop.f32.mrb[0].mxu0
        %v1855 = vadd.f32 %v1785, %v1854
        %v1856 = vpop.f32.mrb[0].mxu0
        %1857 = vdwg.mxu0
        %1858 = vmatprep.subr.mxu0 %v799
        %1859 = vmatpush1.xpose.msra.mxu0 %v791
        %1860 = vmatprep.subr.mxu0 0.0
        %1861 = vmatpush1.xpose.msra.mxu0 0.0
        %1862 = vmatprep.subr.mxu0 0.0
        %1863 = vmatpush1.xpose.msra.mxu0 0.0
        %1864 = vmatprep.subr.mxu0 0.0
        %1865 = vmatpush1.xpose.msra.mxu0 0.0
        %1866 = vmatprep.subr.mxu0 0.0
        %1867 = vmatpush1.xpose.msra.mxu0 0.0
        %1868 = vmatprep.subr.mxu0 0.0
        %1869 = vmatpush1.xpose.msra.mxu0 0.0
        %1870 = vmatprep.subr.mxu0 0.0
        %1871 = vmatpush1.xpose.msra.mxu0 0.0
        %1872 = vmatprep.subr.mxu0 0.0
        %1873 = vmatpush1.xpose.msra.mxu0 0.0
        %1874 = vmatprep.subr.mxu0 0.0
        %1875 = vmatpush1.xpose.msra.mxu0 0.0
        %1876 = vmatprep.subr.mxu0 0.0
        %1877 = vmatpush1.xpose.msra.mxu0 0.0
        %1878 = vmatprep.subr.mxu0 0.0
        %1879 = vmatpush1.xpose.msra.mxu0 0.0
        %1880 = vmatprep.subr.mxu0 0.0
        %1881 = vmatpush1.xpose.msra.mxu0 0.0
        %1882 = vmatprep.subr.mxu0 0.0
        %1883 = vmatpush1.xpose.msra.mxu0 0.0
        %1884 = vmatprep.subr.mxu0 0.0
        %1885 = vmatpush1.xpose.msra.mxu0 0.0
        %1886 = vmatprep.subr.mxu0 0.0
        %1887 = vmatpush1.xpose.msra.mxu0 0.0
        %1888 = vmatprep.subr.mxu0 0.0
        %1889 = vmatpush1.xpose.msra.mxu0 0.0
        %1890 = vmatprep.subr.mxu0 0.0
        %1891 = vmatpush1.xpose.msra.mxu0 0.0
        %1892 = vmatprep.subr.mxu0 0.0
        %1893 = vmatpush1.xpose.msra.mxu0 0.0
        %1894 = vmatprep.subr.mxu0 0.0
        %1895 = vmatpush1.xpose.msra.mxu0 0.0
        %1896 = vmatprep.subr.mxu0 0.0
        %1897 = vmatpush1.xpose.msra.mxu0 0.0
        %1898 = vmatprep.subr.mxu0 0.0
        %1899 = vmatpush1.xpose.msra.mxu0 0.0
        %1900 = vmatprep.subr.mxu0 0.0
        %1901 = vmatpush1.xpose.msra.mxu0 0.0
        %1902 = vmatprep.subr.mxu0 0.0
        %1903 = vmatpush1.xpose.msra.mxu0 0.0
        %1904 = vmatprep.subr.mxu0 0.0
        %1905 = vmatpush1.xpose.msra.mxu0 0.0
        %1906 = vmatprep.subr.mxu0 0.0
        %1907 = vmatpush1.xpose.msra.mxu0 0.0
        %1908 = vmatprep.subr.mxu0 0.0
        %1909 = vmatpush1.xpose.msra.mxu0 0.0
        %1910 = vmatprep.subr.mxu0 0.0
        %1911 = vmatpush1.xpose.msra.mxu0 0.0
        %1912 = vmatprep.subr.mxu0 0.0
        %1913 = vmatpush1.xpose.msra.mxu0 0.0
        %1914 = vmatprep.subr.mxu0 0.0
        %1915 = vmatpush1.xpose.msra.mxu0 0.0
        %1916 = vmatprep.subr.mxu0 0.0
        %1917 = vmatpush1.xpose.msra.mxu0 0.0
        %1918 = vmatprep.subr.mxu0 0.0
        %1919 = vmatpush1.xpose.msra.mxu0 0.0
        %1920 = vmatprep.subr.mxu0 0.0
        %1921 = vmatpush1.xpose.msra.mxu0 0.0
        %1922 = vmatprep.mubr.f32.mxu0 %v447
        %1923 = vmatmul.mubr.f32.gmra.mrb[0].mxu0 %v439
        %v1924 = vpop.f32.mrb[0].mxu0
        %v1925 = vadd.f32 %v1855, %v1924
        %v1926 = vpop.f32.mrb[0].mxu0
        %1927 = vdwg.mxu0
        %1928 = vmatprep.subr.mxu0 %v800
        %1929 = vmatpush1.xpose.msra.mxu0 %v798
        %1930 = vmatprep.subr.mxu0 0.0
        %1931 = vmatpush1.xpose.msra.mxu0 0.0
        %1932 = vmatprep.subr.mxu0 0.0
        %1933 = vmatpush1.xpose.msra.mxu0 0.0
        %1934 = vmatprep.subr.mxu0 0.0
        %1935 = vmatpush1.xpose.msra.mxu0 0.0
        %1936 = vmatprep.subr.mxu0 0.0
        %1937 = vmatpush1.xpose.msra.mxu0 0.0
        %1938 = vmatprep.subr.mxu0 0.0
        %1939 = vmatpush1.xpose.msra.mxu0 0.0
        %1940 = vmatprep.subr.mxu0 0.0
        %1941 = vmatpush1.xpose.msra.mxu0 0.0
        %1942 = vmatprep.subr.mxu0 0.0
        %1943 = vmatpush1.xpose.msra.mxu0 0.0
        %1944 = vmatprep.subr.mxu0 0.0
        %1945 = vmatpush1.xpose.msra.mxu0 0.0
        %1946 = vmatprep.subr.mxu0 0.0
        %1947 = vmatpush1.xpose.msra.mxu0 0.0
        %1948 = vmatprep.subr.mxu0 0.0
        %1949 = vmatpush1.xpose.msra.mxu0 0.0
        %1950 = vmatprep.subr.mxu0 0.0
        %1951 = vmatpush1.xpose.msra.mxu0 0.0
        %1952 = vmatprep.subr.mxu0 0.0
        %1953 = vmatpush1.xpose.msra.mxu0 0.0
        %1954 = vmatprep.subr.mxu0 0.0
        %1955 = vmatpush1.xpose.msra.mxu0 0.0
        %1956 = vmatprep.subr.mxu0 0.0
        %1957 = vmatpush1.xpose.msra.mxu0 0.0
        %1958 = vmatprep.subr.mxu0 0.0
        %1959 = vmatpush1.xpose.msra.mxu0 0.0
        %1960 = vmatprep.subr.mxu0 0.0
        %1961 = vmatpush1.xpose.msra.mxu0 0.0
        %1962 = vmatprep.subr.mxu0 0.0
        %1963 = vmatpush1.xpose.msra.mxu0 0.0
        %1964 = vmatprep.subr.mxu0 0.0
        %1965 = vmatpush1.xpose.msra.mxu0 0.0
        %1966 = vmatprep.subr.mxu0 0.0
        %1967 = vmatpush1.xpose.msra.mxu0 0.0
        %1968 = vmatprep.subr.mxu0 0.0
        %1969 = vmatpush1.xpose.msra.mxu0 0.0
        %1970 = vmatprep.subr.mxu0 0.0
        %1971 = vmatpush1.xpose.msra.mxu0 0.0
        %1972 = vmatprep.subr.mxu0 0.0
        %1973 = vmatpush1.xpose.msra.mxu0 0.0
        %1974 = vmatprep.subr.mxu0 0.0
        %1975 = vmatpush1.xpose.msra.mxu0 0.0
        %1976 = vmatprep.subr.mxu0 0.0
        %1977 = vmatpush1.xpose.msra.mxu0 0.0
        %1978 = vmatprep.subr.mxu0 0.0
        %1979 = vmatpush1.xpose.msra.mxu0 0.0
        %1980 = vmatprep.subr.mxu0 0.0
        %1981 = vmatpush1.xpose.msra.mxu0 0.0
        %1982 = vmatprep.subr.mxu0 0.0
        %1983 = vmatpush1.xpose.msra.mxu0 0.0
        %1984 = vmatprep.subr.mxu0 0.0
        %1985 = vmatpush1.xpose.msra.mxu0 0.0
        %1986 = vmatprep.subr.mxu0 0.0
        %1987 = vmatpush1.xpose.msra.mxu0 0.0
        %1988 = vmatprep.subr.mxu0 0.0
        %1989 = vmatpush1.xpose.msra.mxu0 0.0
        %1990 = vmatprep.subr.mxu0 0.0
        %1991 = vmatpush1.xpose.msra.mxu0 0.0
        %1992 = vmatprep.mubr.f32.mxu0 %v448
        %1993 = vmatmul.mubr.f32.gmra.mrb[0].mxu0 %v446
        %v1994 = vpop.f32.mrb[0].mxu0
        %v1995 = vadd.f32 %v1925, %v1994
        %v1996 = vpop.f32.mrb[0].mxu0
        %1997 = vdwg.mxu0
        %1998 = vmatprep.subr.mxu0 %v816
        %1999 = vmatpush1.xpose.msra.mxu0 %v808
        %2000 = vmatprep.subr.mxu0 0.0
        %2001 = vmatpush1.xpose.msra.mxu0 0.0
        %2002 = vmatprep.subr.mxu0 0.0
        %2003 = vmatpush1.xpose.msra.mxu0 0.0
        %2004 = vmatprep.subr.mxu0 0.0
        %2005 = vmatpush1.xpose.msra.mxu0 0.0
        %2006 = vmatprep.subr.mxu0 0.0
        %2007 = vmatpush1.xpose.msra.mxu0 0.0
        %2008 = vmatprep.subr.mxu0 0.0
        %2009 = vmatpush1.xpose.msra.mxu0 0.0
        %2010 = vmatprep.subr.mxu0 0.0
        %2011 = vmatpush1.xpose.msra.mxu0 0.0
        %2012 = vmatprep.subr.mxu0 0.0
        %2013 = vmatpush1.xpose.msra.mxu0 0.0
        %2014 = vmatprep.subr.mxu0 0.0
        %2015 = vmatpush1.xpose.msra.mxu0 0.0
        %2016 = vmatprep.subr.mxu0 0.0
        %2017 = vmatpush1.xpose.msra.mxu0 0.0
        %2018 = vmatprep.subr.mxu0 0.0
        %2019 = vmatpush1.xpose.msra.mxu0 0.0
        %2020 = vmatprep.subr.mxu0 0.0
        %2021 = vmatpush1.xpose.msra.mxu0 0.0
        %2022 = vmatprep.subr.mxu0 0.0
        %2023 = vmatpush1.xpose.msra.mxu0 0.0
        %2024 = vmatprep.subr.mxu0 0.0
        %2025 = vmatpush1.xpose.msra.mxu0 0.0
        %2026 = vmatprep.subr.mxu0 0.0
        %2027 = vmatpush1.xpose.msra.mxu0 0.0
        %2028 = vmatprep.subr.mxu0 0.0
        %2029 = vmatpush1.xpose.msra.mxu0 0.0
        %2030 = vmatprep.subr.mxu0 0.0
        %2031 = vmatpush1.xpose.msra.mxu0 0.0
        %2032 = vmatprep.subr.mxu0 0.0
        %2033 = vmatpush1.xpose.msra.mxu0 0.0
        %2034 = vmatprep.subr.mxu0 0.0
        %2035 = vmatpush1.xpose.msra.mxu0 0.0
        %2036 = vmatprep.subr.mxu0 0.0
        %2037 = vmatpush1.xpose.msra.mxu0 0.0
        %2038 = vmatprep.subr.mxu0 0.0
        %2039 = vmatpush1.xpose.msra.mxu0 0.0
        %2040 = vmatprep.subr.mxu0 0.0
        %2041 = vmatpush1.xpose.msra.mxu0 0.0
        %2042 = vmatprep.subr.mxu0 0.0
        %2043 = vmatpush1.xpose.msra.mxu0 0.0
        %2044 = vmatprep.subr.mxu0 0.0
        %2045 = vmatpush1.xpose.msra.mxu0 0.0
        %2046 = vmatprep.subr.mxu0 0.0
        %2047 = vmatpush1.xpose.msra.mxu0 0.0
        %2048 = vmatprep.subr.mxu0 0.0
        %2049 = vmatpush1.xpose.msra.mxu0 0.0
        %2050 = vmatprep.subr.mxu0 0.0
        %2051 = vmatpush1.xpose.msra.mxu0 0.0
        %2052 = vmatprep.subr.mxu0 0.0
        %2053 = vmatpush1.xpose.msra.mxu0 0.0
        %2054 = vmatprep.subr.mxu0 0.0
        %2055 = vmatpush1.xpose.msra.mxu0 0.0
        %2056 = vmatprep.subr.mxu0 0.0
        %2057 = vmatpush1.xpose.msra.mxu0 0.0
        %2058 = vmatprep.subr.mxu0 0.0
        %2059 = vmatpush1.xpose.msra.mxu0 0.0
        %2060 = vmatprep.subr.mxu0 0.0
        %2061 = vmatpush1.xpose.msra.mxu0 0.0
        %2062 = vmatprep.mubr.f32.mxu0 %v464
        %2063 = vmatmul.mubr.f32.gmra.mrb[0].mxu0 %v456
        %v2064 = vpop.f32.mrb[0].mxu0
        %v2065 = vadd.f32 %v1995, %v2064
        %v2066 = vpop.f32.mrb[0].mxu0
        %2067 = vdwg.mxu0
        %2068 = vmatprep.subr.mxu0 %v817
        %2069 = vmatpush1.xpose.msra.mxu0 %v815
        %2070 = vmatprep.subr.mxu0 0.0
        %2071 = vmatpush1.xpose.msra.mxu0 0.0
        %2072 = vmatprep.subr.mxu0 0.0
        %2073 = vmatpush1.xpose.msra.mxu0 0.0
        %2074 = vmatprep.subr.mxu0 0.0
        %2075 = vmatpush1.xpose.msra.mxu0 0.0
        %2076 = vmatprep.subr.mxu0 0.0
        %2077 = vmatpush1.xpose.msra.mxu0 0.0
        %2078 = vmatprep.subr.mxu0 0.0
        %2079 = vmatpush1.xpose.msra.mxu0 0.0
        %2080 = vmatprep.subr.mxu0 0.0
        %2081 = vmatpush1.xpose.msra.mxu0 0.0
        %2082 = vmatprep.subr.mxu0 0.0
        %2083 = vmatpush1.xpose.msra.mxu0 0.0
        %2084 = vmatprep.subr.mxu0 0.0
        %2085 = vmatpush1.xpose.msra.mxu0 0.0
        %2086 = vmatprep.subr.mxu0 0.0
        %2087 = vmatpush1.xpose.msra.mxu0 0.0
        %2088 = vmatprep.subr.mxu0 0.0
        %2089 = vmatpush1.xpose.msra.mxu0 0.0
        %2090 = vmatprep.subr.mxu0 0.0
        %2091 = vmatpush1.xpose.msra.mxu0 0.0
        %2092 = vmatprep.subr.mxu0 0.0
        %2093 = vmatpush1.xpose.msra.mxu0 0.0
        %2094 = vmatprep.subr.mxu0 0.0
        %2095 = vmatpush1.xpose.msra.mxu0 0.0
        %2096 = vmatprep.subr.mxu0 0.0
        %2097 = vmatpush1.xpose.msra.mxu0 0.0
        %2098 = vmatprep.subr.mxu0 0.0
        %2099 = vmatpush1.xpose.msra.mxu0 0.0
        %2100 = vmatprep.subr.mxu0 0.0
        %2101 = vmatpush1.xpose.msra.mxu0 0.0
        %2102 = vmatprep.subr.mxu0 0.0
        %2103 = vmatpush1.xpose.msra.mxu0 0.0
        %2104 = vmatprep.subr.mxu0 0.0
        %2105 = vmatpush1.xpose.msra.mxu0 0.0
        %2106 = vmatprep.subr.mxu0 0.0
        %2107 = vmatpush1.xpose.msra.mxu0 0.0
        %2108 = vmatprep.subr.mxu0 0.0
        %2109 = vmatpush1.xpose.msra.mxu0 0.0
        %2110 = vmatprep.subr.mxu0 0.0
        %2111 = vmatpush1.xpose.msra.mxu0 0.0
        %2112 = vmatprep.subr.mxu0 0.0
        %2113 = vmatpush1.xpose.msra.mxu0 0.0
        %2114 = vmatprep.subr.mxu0 0.0
        %2115 = vmatpush1.xpose.msra.mxu0 0.0
        %2116 = vmatprep.subr.mxu0 0.0
        %2117 = vmatpush1.xpose.msra.mxu0 0.0
        %2118 = vmatprep.subr.mxu0 0.0
        %2119 = vmatpush1.xpose.msra.mxu0 0.0
        %2120 = vmatprep.subr.mxu0 0.0
        %2121 = vmatpush1.xpose.msra.mxu0 0.0
        %2122 = vmatprep.subr.mxu0 0.0
        %2123 = vmatpush1.xpose.msra.mxu0 0.0
        %2124 = vmatprep.subr.mxu0 0.0
        %2125 = vmatpush1.xpose.msra.mxu0 0.0
        %2126 = vmatprep.subr.mxu0 0.0
        %2127 = vmatpush1.xpose.msra.mxu0 0.0
        %2128 = vmatprep.subr.mxu0 0.0
        %2129 = vmatpush1.xpose.msra.mxu0 0.0
        %2130 = vmatprep.subr.mxu0 0.0
        %2131 = vmatpush1.xpose.msra.mxu0 0.0
        %2132 = vmatprep.mubr.f32.mxu0 %v465
        %2133 = vmatmul.mubr.f32.gmra.mrb[0].mxu0 %v463
        %v2134 = vpop.f32.mrb[0].mxu0
        %v2135 = vadd.f32 %v2065, %v2134
        %v2136 = vpop.f32.mrb[0].mxu0
        %2137 = vdwg.mxu0
        %2138 = vmatprep.subr.mxu0 %v833
        %2139 = vmatpush1.xpose.msra.mxu0 %v825
        %2140 = vmatprep.subr.mxu0 0.0
        %2141 = vmatpush1.xpose.msra.mxu0 0.0
        %2142 = vmatprep.subr.mxu0 0.0
        %2143 = vmatpush1.xpose.msra.mxu0 0.0
        %2144 = vmatprep.subr.mxu0 0.0
        %2145 = vmatpush1.xpose.msra.mxu0 0.0
        %2146 = vmatprep.subr.mxu0 0.0
        %2147 = vmatpush1.xpose.msra.mxu0 0.0
        %2148 = vmatprep.subr.mxu0 0.0
        %2149 = vmatpush1.xpose.msra.mxu0 0.0
        %2150 = vmatprep.subr.mxu0 0.0
        %2151 = vmatpush1.xpose.msra.mxu0 0.0
        %2152 = vmatprep.subr.mxu0 0.0
        %2153 = vmatpush1.xpose.msra.mxu0 0.0
        %2154 = vmatprep.subr.mxu0 0.0
        %2155 = vmatpush1.xpose.msra.mxu0 0.0
        %2156 = vmatprep.subr.mxu0 0.0
        %2157 = vmatpush1.xpose.msra.mxu0 0.0
        %2158 = vmatprep.subr.mxu0 0.0
        %2159 = vmatpush1.xpose.msra.mxu0 0.0
        %2160 = vmatprep.subr.mxu0 0.0
        %2161 = vmatpush1.xpose.msra.mxu0 0.0
        %2162 = vmatprep.subr.mxu0 0.0
        %2163 = vmatpush1.xpose.msra.mxu0 0.0
        %2164 = vmatprep.subr.mxu0 0.0
        %2165 = vmatpush1.xpose.msra.mxu0 0.0
        %2166 = vmatprep.subr.mxu0 0.0
        %2167 = vmatpush1.xpose.msra.mxu0 0.0
        %2168 = vmatprep.subr.mxu0 0.0
        %2169 = vmatpush1.xpose.msra.mxu0 0.0
        %2170 = vmatprep.subr.mxu0 0.0
        %2171 = vmatpush1.xpose.msra.mxu0 0.0
        %2172 = vmatprep.subr.mxu0 0.0
        %2173 = vmatpush1.xpose.msra.mxu0 0.0
        %2174 = vmatprep.subr.mxu0 0.0
        %2175 = vmatpush1.xpose.msra.mxu0 0.0
        %2176 = vmatprep.subr.mxu0 0.0
        %2177 = vmatpush1.xpose.msra.mxu0 0.0
        %2178 = vmatprep.subr.mxu0 0.0
        %2179 = vmatpush1.xpose.msra.mxu0 0.0
        %2180 = vmatprep.subr.mxu0 0.0
        %2181 = vmatpush1.xpose.msra.mxu0 0.0
        %2182 = vmatprep.subr.mxu0 0.0
        %2183 = vmatpush1.xpose.msra.mxu0 0.0
        %2184 = vmatprep.subr.mxu0 0.0
        %2185 = vmatpush1.xpose.msra.mxu0 0.0
        %2186 = vmatprep.subr.mxu0 0.0
        %2187 = vmatpush1.xpose.msra.mxu0 0.0
        %2188 = vmatprep.subr.mxu0 0.0
        %2189 = vmatpush1.xpose.msra.mxu0 0.0
        %2190 = vmatprep.subr.mxu0 0.0
        %2191 = vmatpush1.xpose.msra.mxu0 0.0
        %2192 = vmatprep.subr.mxu0 0.0
        %2193 = vmatpush1.xpose.msra.mxu0 0.0
        %2194 = vmatprep.subr.mxu0 0.0
        %2195 = vmatpush1.xpose.msra.mxu0 0.0
        %2196 = vmatprep.subr.mxu0 0.0
        %2197 = vmatpush1.xpose.msra.mxu0 0.0
        %2198 = vmatprep.subr.mxu0 0.0
        %2199 = vmatpush1.xpose.msra.mxu0 0.0
        %2200 = vmatprep.subr.mxu0 0.0
        %2201 = vmatpush1.xpose.msra.mxu0 0.0
        %2202 = vmatprep.mubr.f32.mxu0 %v481
        %2203 = vmatmul.mubr.f32.gmra.mrb[0].mxu0 %v473
        %v2204 = vpop.f32.mrb[0].mxu0
        %v2205 = vadd.f32 %v2135, %v2204
        %v2206 = vpop.f32.mrb[0].mxu0
        %2207 = vdwg.mxu0
        %2208 = vmatprep.subr.mxu0 %v834
        %2209 = vmatpush1.xpose.msra.mxu0 %v832
        %2210 = vmatprep.subr.mxu0 0.0
        %2211 = vmatpush1.xpose.msra.mxu0 0.0
        %2212 = vmatprep.subr.mxu0 0.0
        %2213 = vmatpush1.xpose.msra.mxu0 0.0
        %2214 = vmatprep.subr.mxu0 0.0
        %2215 = vmatpush1.xpose.msra.mxu0 0.0
        %2216 = vmatprep.subr.mxu0 0.0
        %2217 = vmatpush1.xpose.msra.mxu0 0.0
        %2218 = vmatprep.subr.mxu0 0.0
        %2219 = vmatpush1.xpose.msra.mxu0 0.0
        %2220 = vmatprep.subr.mxu0 0.0
        %2221 = vmatpush1.xpose.msra.mxu0 0.0
        %2222 = vmatprep.subr.mxu0 0.0
        %2223 = vmatpush1.xpose.msra.mxu0 0.0
        %2224 = vmatprep.subr.mxu0 0.0
        %2225 = vmatpush1.xpose.msra.mxu0 0.0
        %2226 = vmatprep.subr.mxu0 0.0
        %2227 = vmatpush1.xpose.msra.mxu0 0.0
        %2228 = vmatprep.subr.mxu0 0.0
        %2229 = vmatpush1.xpose.msra.mxu0 0.0
        %2230 = vmatprep.subr.mxu0 0.0
        %2231 = vmatpush1.xpose.msra.mxu0 0.0
        %2232 = vmatprep.subr.mxu0 0.0
        %2233 = vmatpush1.xpose.msra.mxu0 0.0
        %2234 = vmatprep.subr.mxu0 0.0
        %2235 = vmatpush1.xpose.msra.mxu0 0.0
        %2236 = vmatprep.subr.mxu0 0.0
        %2237 = vmatpush1.xpose.msra.mxu0 0.0
        %2238 = vmatprep.subr.mxu0 0.0
        %2239 = vmatpush1.xpose.msra.mxu0 0.0
        %2240 = vmatprep.subr.mxu0 0.0
        %2241 = vmatpush1.xpose.msra.mxu0 0.0
        %2242 = vmatprep.subr.mxu0 0.0
        %2243 = vmatpush1.xpose.msra.mxu0 0.0
        %2244 = vmatprep.subr.mxu0 0.0
        %2245 = vmatpush1.xpose.msra.mxu0 0.0
        %2246 = vmatprep.subr.mxu0 0.0
        %2247 = vmatpush1.xpose.msra.mxu0 0.0
        %2248 = vmatprep.subr.mxu0 0.0
        %2249 = vmatpush1.xpose.msra.mxu0 0.0
        %2250 = vmatprep.subr.mxu0 0.0
        %2251 = vmatpush1.xpose.msra.mxu0 0.0
        %2252 = vmatprep.subr.mxu0 0.0
        %2253 = vmatpush1.xpose.msra.mxu0 0.0
        %2254 = vmatprep.subr.mxu0 0.0
        %2255 = vmatpush1.xpose.msra.mxu0 0.0
        %2256 = vmatprep.subr.mxu0 0.0
        %2257 = vmatpush1.xpose.msra.mxu0 0.0
        %2258 = vmatprep.subr.mxu0 0.0
        %2259 = vmatpush1.xpose.msra.mxu0 0.0
        %2260 = vmatprep.subr.mxu0 0.0
        %2261 = vmatpush1.xpose.msra.mxu0 0.0
        %2262 = vmatprep.subr.mxu0 0.0
        %2263 = vmatpush1.xpose.msra.mxu0 0.0
        %2264 = vmatprep.subr.mxu0 0.0
        %2265 = vmatpush1.xpose.msra.mxu0 0.0
        %2266 = vmatprep.subr.mxu0 0.0
        %2267 = vmatpush1.xpose.msra.mxu0 0.0
        %2268 = vmatprep.subr.mxu0 0.0
        %2269 = vmatpush1.xpose.msra.mxu0 0.0
        %2270 = vmatprep.subr.mxu0 0.0
        %2271 = vmatpush1.xpose.msra.mxu0 0.0
        %2272 = vmatprep.mubr.f32.mxu0 %v482
        %2273 = vmatmul.mubr.f32.gmra.mrb[0].mxu0 %v480
        %v2274 = vpop.f32.mrb[0].mxu0
        %v2275 = vadd.f32 %v2205, %v2274
        %v2276 = vpop.f32.mrb[0].mxu0
        %2277 = vdwg.mxu0
        %2278 = vmatprep.subr.mxu0 %v850
        %2279 = vmatpush1.xpose.msra.mxu0 %v842
        %2280 = vmatprep.subr.mxu0 0.0
        %2281 = vmatpush1.xpose.msra.mxu0 0.0
        %2282 = vmatprep.subr.mxu0 0.0
        %2283 = vmatpush1.xpose.msra.mxu0 0.0
        %2284 = vmatprep.subr.mxu0 0.0
        %2285 = vmatpush1.xpose.msra.mxu0 0.0
        %2286 = vmatprep.subr.mxu0 0.0
        %2287 = vmatpush1.xpose.msra.mxu0 0.0
        %2288 = vmatprep.subr.mxu0 0.0
        %2289 = vmatpush1.xpose.msra.mxu0 0.0
        %2290 = vmatprep.subr.mxu0 0.0
        %2291 = vmatpush1.xpose.msra.mxu0 0.0
        %2292 = vmatprep.subr.mxu0 0.0
        %2293 = vmatpush1.xpose.msra.mxu0 0.0
        %2294 = vmatprep.subr.mxu0 0.0
        %2295 = vmatpush1.xpose.msra.mxu0 0.0
        %2296 = vmatprep.subr.mxu0 0.0
        %2297 = vmatpush1.xpose.msra.mxu0 0.0
        %2298 = vmatprep.subr.mxu0 0.0
        %2299 = vmatpush1.xpose.msra.mxu0 0.0
        %2300 = vmatprep.subr.mxu0 0.0
        %2301 = vmatpush1.xpose.msra.mxu0 0.0
        %2302 = vmatprep.subr.mxu0 0.0
        %2303 = vmatpush1.xpose.msra.mxu0 0.0
        %2304 = vmatprep.subr.mxu0 0.0
        %2305 = vmatpush1.xpose.msra.mxu0 0.0
        %2306 = vmatprep.subr.mxu0 0.0
        %2307 = vmatpush1.xpose.msra.mxu0 0.0
        %2308 = vmatprep.subr.mxu0 0.0
        %2309 = vmatpush1.xpose.msra.mxu0 0.0
        %2310 = vmatprep.subr.mxu0 0.0
        %2311 = vmatpush1.xpose.msra.mxu0 0.0
        %2312 = vmatprep.subr.mxu0 0.0
        %2313 = vmatpush1.xpose.msra.mxu0 0.0
        %2314 = vmatprep.subr.mxu0 0.0
        %2315 = vmatpush1.xpose.msra.mxu0 0.0
        %2316 = vmatprep.subr.mxu0 0.0
        %2317 = vmatpush1.xpose.msra.mxu0 0.0
        %2318 = vmatprep.subr.mxu0 0.0
        %2319 = vmatpush1.xpose.msra.mxu0 0.0
        %2320 = vmatprep.subr.mxu0 0.0
        %2321 = vmatpush1.xpose.msra.mxu0 0.0
        %2322 = vmatprep.subr.mxu0 0.0
        %2323 = vmatpush1.xpose.msra.mxu0 0.0
        %2324 = vmatprep.subr.mxu0 0.0
        %2325 = vmatpush1.xpose.msra.mxu0 0.0
        %2326 = vmatprep.subr.mxu0 0.0
        %2327 = vmatpush1.xpose.msra.mxu0 0.0
        %2328 = vmatprep.subr.mxu0 0.0
        %2329 = vmatpush1.xpose.msra.mxu0 0.0
        %2330 = vmatprep.subr.mxu0 0.0
        %2331 = vmatpush1.xpose.msra.mxu0 0.0
        %2332 = vmatprep.subr.mxu0 0.0
        %2333 = vmatpush1.xpose.msra.mxu0 0.0
        %2334 = vmatprep.subr.mxu0 0.0
        %2335 = vmatpush1.xpose.msra.mxu0 0.0
        %2336 = vmatprep.subr.mxu0 0.0
        %2337 = vmatpush1.xpose.msra.mxu0 0.0
        %2338 = vmatprep.subr.mxu0 0.0
        %2339 = vmatpush1.xpose.msra.mxu0 0.0
        %2340 = vmatprep.subr.mxu0 0.0
        %2341 = vmatpush1.xpose.msra.mxu0 0.0
        %2342 = vmatprep.mubr.f32.mxu0 %v498
        %2343 = vmatmul.mubr.f32.gmra.mrb[0].mxu0 %v490
        %v2344 = vpop.f32.mrb[0].mxu0
        %v2345 = vadd.f32 %v2275, %v2344
        %v2346 = vpop.f32.mrb[0].mxu0
        %2347 = vdwg.mxu0
        %2348 = vmatprep.subr.mxu0 %v851
        %2349 = vmatpush1.xpose.msra.mxu0 %v849
        %2350 = vmatprep.subr.mxu0 0.0
        %2351 = vmatpush1.xpose.msra.mxu0 0.0
        %2352 = vmatprep.subr.mxu0 0.0
        %2353 = vmatpush1.xpose.msra.mxu0 0.0
        %2354 = vmatprep.subr.mxu0 0.0
        %2355 = vmatpush1.xpose.msra.mxu0 0.0
        %2356 = vmatprep.subr.mxu0 0.0
        %2357 = vmatpush1.xpose.msra.mxu0 0.0
        %2358 = vmatprep.subr.mxu0 0.0
        %2359 = vmatpush1.xpose.msra.mxu0 0.0
        %2360 = vmatprep.subr.mxu0 0.0
        %2361 = vmatpush1.xpose.msra.mxu0 0.0
        %2362 = vmatprep.subr.mxu0 0.0
        %2363 = vmatpush1.xpose.msra.mxu0 0.0
        %2364 = vmatprep.subr.mxu0 0.0
        %2365 = vmatpush1.xpose.msra.mxu0 0.0
        %2366 = vmatprep.subr.mxu0 0.0
        %2367 = vmatpush1.xpose.msra.mxu0 0.0
        %2368 = vmatprep.subr.mxu0 0.0
        %2369 = vmatpush1.xpose.msra.mxu0 0.0
        %2370 = vmatprep.subr.mxu0 0.0
        %2371 = vmatpush1.xpose.msra.mxu0 0.0
        %2372 = vmatprep.subr.mxu0 0.0
        %2373 = vmatpush1.xpose.msra.mxu0 0.0
        %2374 = vmatprep.subr.mxu0 0.0
        %2375 = vmatpush1.xpose.msra.mxu0 0.0
        %2376 = vmatprep.subr.mxu0 0.0
        %2377 = vmatpush1.xpose.msra.mxu0 0.0
        %2378 = vmatprep.subr.mxu0 0.0
        %2379 = vmatpush1.xpose.msra.mxu0 0.0
        %2380 = vmatprep.subr.mxu0 0.0
        %2381 = vmatpush1.xpose.msra.mxu0 0.0
        %2382 = vmatprep.subr.mxu0 0.0
        %2383 = vmatpush1.xpose.msra.mxu0 0.0
        %2384 = vmatprep.subr.mxu0 0.0
        %2385 = vmatpush1.xpose.msra.mxu0 0.0
        %2386 = vmatprep.subr.mxu0 0.0
        %2387 = vmatpush1.xpose.msra.mxu0 0.0
        %2388 = vmatprep.subr.mxu0 0.0
        %2389 = vmatpush1.xpose.msra.mxu0 0.0
        %2390 = vmatprep.subr.mxu0 0.0
        %2391 = vmatpush1.xpose.msra.mxu0 0.0
        %2392 = vmatprep.subr.mxu0 0.0
        %2393 = vmatpush1.xpose.msra.mxu0 0.0
        %2394 = vmatprep.subr.mxu0 0.0
        %2395 = vmatpush1.xpose.msra.mxu0 0.0
        %2396 = vmatprep.subr.mxu0 0.0
        %2397 = vmatpush1.xpose.msra.mxu0 0.0
        %2398 = vmatprep.subr.mxu0 0.0
        %2399 = vmatpush1.xpose.msra.mxu0 0.0
        %2400 = vmatprep.subr.mxu0 0.0
        %2401 = vmatpush1.xpose.msra.mxu0 0.0
        %2402 = vmatprep.subr.mxu0 0.0
        %2403 = vmatpush1.xpose.msra.mxu0 0.0
        %2404 = vmatprep.subr.mxu0 0.0
        %2405 = vmatpush1.xpose.msra.mxu0 0.0
        %2406 = vmatprep.subr.mxu0 0.0
        %2407 = vmatpush1.xpose.msra.mxu0 0.0
        %2408 = vmatprep.subr.mxu0 0.0
        %2409 = vmatpush1.xpose.msra.mxu0 0.0
        %2410 = vmatprep.subr.mxu0 0.0
        %2411 = vmatpush1.xpose.msra.mxu0 0.0
        %2412 = vmatprep.mubr.f32.mxu0 %v499
        %2413 = vmatmul.mubr.f32.gmra.mrb[0].mxu0 %v497
        %v2414 = vpop.f32.mrb[0].mxu0
        %v2415 = vadd.f32 %v2345, %v2414
        %v2416 = vpop.f32.mrb[0].mxu0
        %2417 = vdwg.mxu0
        %2418 = vmatprep.subr.mxu0 %v867
        %2419 = vmatpush1.xpose.msra.mxu0 %v859
        %2420 = vmatprep.subr.mxu0 0.0
        %2421 = vmatpush1.xpose.msra.mxu0 0.0
        %2422 = vmatprep.subr.mxu0 0.0
        %2423 = vmatpush1.xpose.msra.mxu0 0.0
        %2424 = vmatprep.subr.mxu0 0.0
        %2425 = vmatpush1.xpose.msra.mxu0 0.0
        %2426 = vmatprep.subr.mxu0 0.0
        %2427 = vmatpush1.xpose.msra.mxu0 0.0
        %2428 = vmatprep.subr.mxu0 0.0
        %2429 = vmatpush1.xpose.msra.mxu0 0.0
        %2430 = vmatprep.subr.mxu0 0.0
        %2431 = vmatpush1.xpose.msra.mxu0 0.0
        %2432 = vmatprep.subr.mxu0 0.0
        %2433 = vmatpush1.xpose.msra.mxu0 0.0
        %2434 = vmatprep.subr.mxu0 0.0
        %2435 = vmatpush1.xpose.msra.mxu0 0.0
        %2436 = vmatprep.subr.mxu0 0.0
        %2437 = vmatpush1.xpose.msra.mxu0 0.0
        %2438 = vmatprep.subr.mxu0 0.0
        %2439 = vmatpush1.xpose.msra.mxu0 0.0
        %2440 = vmatprep.subr.mxu0 0.0
        %2441 = vmatpush1.xpose.msra.mxu0 0.0
        %2442 = vmatprep.subr.mxu0 0.0
        %2443 = vmatpush1.xpose.msra.mxu0 0.0
        %2444 = vmatprep.subr.mxu0 0.0
        %2445 = vmatpush1.xpose.msra.mxu0 0.0
        %2446 = vmatprep.subr.mxu0 0.0
        %2447 = vmatpush1.xpose.msra.mxu0 0.0
        %2448 = vmatprep.subr.mxu0 0.0
        %2449 = vmatpush1.xpose.msra.mxu0 0.0
        %2450 = vmatprep.subr.mxu0 0.0
        %2451 = vmatpush1.xpose.msra.mxu0 0.0
        %2452 = vmatprep.subr.mxu0 0.0
        %2453 = vmatpush1.xpose.msra.mxu0 0.0
        %2454 = vmatprep.subr.mxu0 0.0
        %2455 = vmatpush1.xpose.msra.mxu0 0.0
        %2456 = vmatprep.subr.mxu0 0.0
        %2457 = vmatpush1.xpose.msra.mxu0 0.0
        %2458 = vmatprep.subr.mxu0 0.0
        %2459 = vmatpush1.xpose.msra.mxu0 0.0
        %2460 = vmatprep.subr.mxu0 0.0
        %2461 = vmatpush1.xpose.msra.mxu0 0.0
        %2462 = vmatprep.subr.mxu0 0.0
        %2463 = vmatpush1.xpose.msra.mxu0 0.0
        %2464 = vmatprep.subr.mxu0 0.0
        %2465 = vmatpush1.xpose.msra.mxu0 0.0
        %2466 = vmatprep.subr.mxu0 0.0
        %2467 = vmatpush1.xpose.msra.mxu0 0.0
        %2468 = vmatprep.subr.mxu0 0.0
        %2469 = vmatpush1.xpose.msra.mxu0 0.0
        %2470 = vmatprep.subr.mxu0 0.0
        %2471 = vmatpush1.xpose.msra.mxu0 0.0
        %2472 = vmatprep.subr.mxu0 0.0
        %2473 = vmatpush1.xpose.msra.mxu0 0.0
        %2474 = vmatprep.subr.mxu0 0.0
        %2475 = vmatpush1.xpose.msra.mxu0 0.0
        %2476 = vmatprep.subr.mxu0 0.0
        %2477 = vmatpush1.xpose.msra.mxu0 0.0
        %2478 = vmatprep.subr.mxu0 0.0
        %2479 = vmatpush1.xpose.msra.mxu0 0.0
        %2480 = vmatprep.subr.mxu0 0.0
        %2481 = vmatpush1.xpose.msra.mxu0 0.0
        %2482 = vmatprep.mubr.f32.mxu0 %v515
        %2483 = vmatmul.mubr.f32.gmra.mrb[0].mxu0 %v507
        %v2484 = vpop.f32.mrb[0].mxu0
        %v2485 = vadd.f32 %v2415, %v2484
        %v2486 = vpop.f32.mrb[0].mxu0
        %2487 = vdwg.mxu0
        %2488 = vmatprep.subr.mxu0 %v868
        %2489 = vmatpush1.xpose.msra.mxu0 %v866
        %2490 = vmatprep.subr.mxu0 0.0
        %2491 = vmatpush1.xpose.msra.mxu0 0.0
        %2492 = vmatprep.subr.mxu0 0.0
        %2493 = vmatpush1.xpose.msra.mxu0 0.0
        %2494 = vmatprep.subr.mxu0 0.0
        %2495 = vmatpush1.xpose.msra.mxu0 0.0
        %2496 = vmatprep.subr.mxu0 0.0
        %2497 = vmatpush1.xpose.msra.mxu0 0.0
        %2498 = vmatprep.subr.mxu0 0.0
        %2499 = vmatpush1.xpose.msra.mxu0 0.0
        %2500 = vmatprep.subr.mxu0 0.0
        %2501 = vmatpush1.xpose.msra.mxu0 0.0
        %2502 = vmatprep.subr.mxu0 0.0
        %2503 = vmatpush1.xpose.msra.mxu0 0.0
        %2504 = vmatprep.subr.mxu0 0.0
        %2505 = vmatpush1.xpose.msra.mxu0 0.0
        %2506 = vmatprep.subr.mxu0 0.0
        %2507 = vmatpush1.xpose.msra.mxu0 0.0
        %2508 = vmatprep.subr.mxu0 0.0
        %2509 = vmatpush1.xpose.msra.mxu0 0.0
        %2510 = vmatprep.subr.mxu0 0.0
        %2511 = vmatpush1.xpose.msra.mxu0 0.0
        %2512 = vmatprep.subr.mxu0 0.0
        %2513 = vmatpush1.xpose.msra.mxu0 0.0
        %2514 = vmatprep.subr.mxu0 0.0
        %2515 = vmatpush1.xpose.msra.mxu0 0.0
        %2516 = vmatprep.subr.mxu0 0.0
        %2517 = vmatpush1.xpose.msra.mxu0 0.0
        %2518 = vmatprep.subr.mxu0 0.0
        %2519 = vmatpush1.xpose.msra.mxu0 0.0
        %2520 = vmatprep.subr.mxu0 0.0
        %2521 = vmatpush1.xpose.msra.mxu0 0.0
        %2522 = vmatprep.subr.mxu0 0.0
        %2523 = vmatpush1.xpose.msra.mxu0 0.0
        %2524 = vmatprep.subr.mxu0 0.0
        %2525 = vmatpush1.xpose.msra.mxu0 0.0
        %2526 = vmatprep.subr.mxu0 0.0
        %2527 = vmatpush1.xpose.msra.mxu0 0.0
        %2528 = vmatprep.subr.mxu0 0.0
        %2529 = vmatpush1.xpose.msra.mxu0 0.0
        %2530 = vmatprep.subr.mxu0 0.0
        %2531 = vmatpush1.xpose.msra.mxu0 0.0
        %2532 = vmatprep.subr.mxu0 0.0
        %2533 = vmatpush1.xpose.msra.mxu0 0.0
        %2534 = vmatprep.subr.mxu0 0.0
        %2535 = vmatpush1.xpose.msra.mxu0 0.0
        %2536 = vmatprep.subr.mxu0 0.0
        %2537 = vmatpush1.xpose.msra.mxu0 0.0
        %2538 = vmatprep.subr.mxu0 0.0
        %2539 = vmatpush1.xpose.msra.mxu0 0.0
        %2540 = vmatprep.subr.mxu0 0.0
        %2541 = vmatpush1.xpose.msra.mxu0 0.0
        %2542 = vmatprep.subr.mxu0 0.0
        %2543 = vmatpush1.xpose.msra.mxu0 0.0
        %2544 = vmatprep.subr.mxu0 0.0
        %2545 = vmatpush1.xpose.msra.mxu0 0.0
        %2546 = vmatprep.subr.mxu0 0.0
        %2547 = vmatpush1.xpose.msra.mxu0 0.0
        %2548 = vmatprep.subr.mxu0 0.0
        %2549 = vmatpush1.xpose.msra.mxu0 0.0
        %2550 = vmatprep.subr.mxu0 0.0
        %2551 = vmatpush1.xpose.msra.mxu0 0.0
        %2552 = vmatprep.mubr.f32.mxu0 %v516
        %2553 = vmatmul.mubr.f32.gmra.mrb[0].mxu0 %v514
        %v2554 = vpop.f32.mrb[0].mxu0
        %v2555 = vadd.f32 %v2485, %v2554
        %v2556 = vpop.f32.mrb[0].mxu0
        %2557 = vdwg.mxu0
        %2558 = vmatprep.subr.mxu0 %v884
        %2559 = vmatpush1.xpose.msra.mxu0 %v876
        %2560 = vmatprep.subr.mxu0 0.0
        %2561 = vmatpush1.xpose.msra.mxu0 0.0
        %2562 = vmatprep.subr.mxu0 0.0
        %2563 = vmatpush1.xpose.msra.mxu0 0.0
        %2564 = vmatprep.subr.mxu0 0.0
        %2565 = vmatpush1.xpose.msra.mxu0 0.0
        %2566 = vmatprep.subr.mxu0 0.0
        %2567 = vmatpush1.xpose.msra.mxu0 0.0
        %2568 = vmatprep.subr.mxu0 0.0
        %2569 = vmatpush1.xpose.msra.mxu0 0.0
        %2570 = vmatprep.subr.mxu0 0.0
        %2571 = vmatpush1.xpose.msra.mxu0 0.0
        %2572 = vmatprep.subr.mxu0 0.0
        %2573 = vmatpush1.xpose.msra.mxu0 0.0
        %2574 = vmatprep.subr.mxu0 0.0
        %2575 = vmatpush1.xpose.msra.mxu0 0.0
        %2576 = vmatprep.subr.mxu0 0.0
        %2577 = vmatpush1.xpose.msra.mxu0 0.0
        %2578 = vmatprep.subr.mxu0 0.0
        %2579 = vmatpush1.xpose.msra.mxu0 0.0
        %2580 = vmatprep.subr.mxu0 0.0
        %2581 = vmatpush1.xpose.msra.mxu0 0.0
        %2582 = vmatprep.subr.mxu0 0.0
        %2583 = vmatpush1.xpose.msra.mxu0 0.0
        %2584 = vmatprep.subr.mxu0 0.0
        %2585 = vmatpush1.xpose.msra.mxu0 0.0
        %2586 = vmatprep.subr.mxu0 0.0
        %2587 = vmatpush1.xpose.msra.mxu0 0.0
        %2588 = vmatprep.subr.mxu0 0.0
        %2589 = vmatpush1.xpose.msra.mxu0 0.0
        %2590 = vmatprep.subr.mxu0 0.0
        %2591 = vmatpush1.xpose.msra.mxu0 0.0
        %2592 = vmatprep.subr.mxu0 0.0
        %2593 = vmatpush1.xpose.msra.mxu0 0.0
        %2594 = vmatprep.subr.mxu0 0.0
        %2595 = vmatpush1.xpose.msra.mxu0 0.0
        %2596 = vmatprep.subr.mxu0 0.0
        %2597 = vmatpush1.xpose.msra.mxu0 0.0
        %2598 = vmatprep.subr.mxu0 0.0
        %2599 = vmatpush1.xpose.msra.mxu0 0.0
        %2600 = vmatprep.subr.mxu0 0.0
        %2601 = vmatpush1.xpose.msra.mxu0 0.0
        %2602 = vmatprep.subr.mxu0 0.0
        %2603 = vmatpush1.xpose.msra.mxu0 0.0
        %2604 = vmatprep.subr.mxu0 0.0
        %2605 = vmatpush1.xpose.msra.mxu0 0.0
        %2606 = vmatprep.subr.mxu0 0.0
        %2607 = vmatpush1.xpose.msra.mxu0 0.0
        %2608 = vmatprep.subr.mxu0 0.0
        %2609 = vmatpush1.xpose.msra.mxu0 0.0
        %2610 = vmatprep.subr.mxu0 0.0
        %2611 = vmatpush1.xpose.msra.mxu0 0.0
        %2612 = vmatprep.subr.mxu0 0.0
        %2613 = vmatpush1.xpose.msra.mxu0 0.0
        %2614 = vmatprep.subr.mxu0 0.0
        %2615 = vmatpush1.xpose.msra.mxu0 0.0
        %2616 = vmatprep.subr.mxu0 0.0
        %2617 = vmatpush1.xpose.msra.mxu0 0.0
        %2618 = vmatprep.subr.mxu0 0.0
        %2619 = vmatpush1.xpose.msra.mxu0 0.0
        %2620 = vmatprep.subr.mxu0 0.0
        %2621 = vmatpush1.xpose.msra.mxu0 0.0
        %2622 = vmatprep.mubr.f32.mxu0 %v532
        %2623 = vmatmul.mubr.f32.gmra.mrb[0].mxu0 %v524
        %v2624 = vpop.f32.mrb[0].mxu0
        %v2625 = vadd.f32 %v2555, %v2624
        %v2626 = vpop.f32.mrb[0].mxu0
        %2627 = vdwg.mxu0
        %2628 = vmatprep.subr.mxu0 %v885
        %2629 = vmatpush1.xpose.msra.mxu0 %v883
        %2630 = vmatprep.subr.mxu0 0.0
        %2631 = vmatpush1.xpose.msra.mxu0 0.0
        %2632 = vmatprep.subr.mxu0 0.0
        %2633 = vmatpush1.xpose.msra.mxu0 0.0
        %2634 = vmatprep.subr.mxu0 0.0
        %2635 = vmatpush1.xpose.msra.mxu0 0.0
        %2636 = vmatprep.subr.mxu0 0.0
        %2637 = vmatpush1.xpose.msra.mxu0 0.0
        %2638 = vmatprep.subr.mxu0 0.0
        %2639 = vmatpush1.xpose.msra.mxu0 0.0
        %2640 = vmatprep.subr.mxu0 0.0
        %2641 = vmatpush1.xpose.msra.mxu0 0.0
        %2642 = vmatprep.subr.mxu0 0.0
        %2643 = vmatpush1.xpose.msra.mxu0 0.0
        %2644 = vmatprep.subr.mxu0 0.0
        %2645 = vmatpush1.xpose.msra.mxu0 0.0
        %2646 = vmatprep.subr.mxu0 0.0
        %2647 = vmatpush1.xpose.msra.mxu0 0.0
        %2648 = vmatprep.subr.mxu0 0.0
        %2649 = vmatpush1.xpose.msra.mxu0 0.0
        %2650 = vmatprep.subr.mxu0 0.0
        %2651 = vmatpush1.xpose.msra.mxu0 0.0
        %2652 = vmatprep.subr.mxu0 0.0
        %2653 = vmatpush1.xpose.msra.mxu0 0.0
        %2654 = vmatprep.subr.mxu0 0.0
        %2655 = vmatpush1.xpose.msra.mxu0 0.0
        %2656 = vmatprep.subr.mxu0 0.0
        %2657 = vmatpush1.xpose.msra.mxu0 0.0
        %2658 = vmatprep.subr.mxu0 0.0
        %2659 = vmatpush1.xpose.msra.mxu0 0.0
        %2660 = vmatprep.subr.mxu0 0.0
        %2661 = vmatpush1.xpose.msra.mxu0 0.0
        %2662 = vmatprep.subr.mxu0 0.0
        %2663 = vmatpush1.xpose.msra.mxu0 0.0
        %2664 = vmatprep.subr.mxu0 0.0
        %2665 = vmatpush1.xpose.msra.mxu0 0.0
        %2666 = vmatprep.subr.mxu0 0.0
        %2667 = vmatpush1.xpose.msra.mxu0 0.0
        %2668 = vmatprep.subr.mxu0 0.0
        %2669 = vmatpush1.xpose.msra.mxu0 0.0
        %2670 = vmatprep.subr.mxu0 0.0
        %2671 = vmatpush1.xpose.msra.mxu0 0.0
        %2672 = vmatprep.subr.mxu0 0.0
        %2673 = vmatpush1.xpose.msra.mxu0 0.0
        %2674 = vmatprep.subr.mxu0 0.0
        %2675 = vmatpush1.xpose.msra.mxu0 0.0
        %2676 = vmatprep.subr.mxu0 0.0
        %2677 = vmatpush1.xpose.msra.mxu0 0.0
        %2678 = vmatprep.subr.mxu0 0.0
        %2679 = vmatpush1.xpose.msra.mxu0 0.0
        %2680 = vmatprep.subr.mxu0 0.0
        %2681 = vmatpush1.xpose.msra.mxu0 0.0
        %2682 = vmatprep.subr.mxu0 0.0
        %2683 = vmatpush1.xpose.msra.mxu0 0.0
        %2684 = vmatprep.subr.mxu0 0.0
        %2685 = vmatpush1.xpose.msra.mxu0 0.0
        %2686 = vmatprep.subr.mxu0 0.0
        %2687 = vmatpush1.xpose.msra.mxu0 0.0
        %2688 = vmatprep.subr.mxu0 0.0
        %2689 = vmatpush1.xpose.msra.mxu0 0.0
        %2690 = vmatprep.subr.mxu0 0.0
        %2691 = vmatpush1.xpose.msra.mxu0 0.0
        %2692 = vmatprep.mubr.f32.mxu0 %v533
        %2693 = vmatmul.mubr.f32.gmra.mrb[0].mxu0 %v531
        %v2694 = vpop.f32.mrb[0].mxu0
        %v2695 = vadd.f32 %v2625, %v2694
        %v2696 = vpop.f32.mrb[0].mxu0
        %2697 = vdwg.mxu0
        %2698 = vmatprep.subr.mxu0 %v901
        %2699 = vmatpush1.xpose.msra.mxu0 %v893
        %2700 = vmatprep.subr.mxu0 0.0
        %2701 = vmatpush1.xpose.msra.mxu0 0.0
        %2702 = vmatprep.subr.mxu0 0.0
        %2703 = vmatpush1.xpose.msra.mxu0 0.0
        %2704 = vmatprep.subr.mxu0 0.0
        %2705 = vmatpush1.xpose.msra.mxu0 0.0
        %2706 = vmatprep.subr.mxu0 0.0
        %2707 = vmatpush1.xpose.msra.mxu0 0.0
        %2708 = vmatprep.subr.mxu0 0.0
        %2709 = vmatpush1.xpose.msra.mxu0 0.0
        %2710 = vmatprep.subr.mxu0 0.0
        %2711 = vmatpush1.xpose.msra.mxu0 0.0
        %2712 = vmatprep.subr.mxu0 0.0
        %2713 = vmatpush1.xpose.msra.mxu0 0.0
        %2714 = vmatprep.subr.mxu0 0.0
        %2715 = vmatpush1.xpose.msra.mxu0 0.0
        %2716 = vmatprep.subr.mxu0 0.0
        %2717 = vmatpush1.xpose.msra.mxu0 0.0
        %2718 = vmatprep.subr.mxu0 0.0
        %2719 = vmatpush1.xpose.msra.mxu0 0.0
        %2720 = vmatprep.subr.mxu0 0.0
        %2721 = vmatpush1.xpose.msra.mxu0 0.0
        %2722 = vmatprep.subr.mxu0 0.0
        %2723 = vmatpush1.xpose.msra.mxu0 0.0
        %2724 = vmatprep.subr.mxu0 0.0
        %2725 = vmatpush1.xpose.msra.mxu0 0.0
        %2726 = vmatprep.subr.mxu0 0.0
        %2727 = vmatpush1.xpose.msra.mxu0 0.0
        %2728 = vmatprep.subr.mxu0 0.0
        %2729 = vmatpush1.xpose.msra.mxu0 0.0
        %2730 = vmatprep.subr.mxu0 0.0
        %2731 = vmatpush1.xpose.msra.mxu0 0.0
        %2732 = vmatprep.subr.mxu0 0.0
        %2733 = vmatpush1.xpose.msra.mxu0 0.0
        %2734 = vmatprep.subr.mxu0 0.0
        %2735 = vmatpush1.xpose.msra.mxu0 0.0
        %2736 = vmatprep.subr.mxu0 0.0
        %2737 = vmatpush1.xpose.msra.mxu0 0.0
        %2738 = vmatprep.subr.mxu0 0.0
        %2739 = vmatpush1.xpose.msra.mxu0 0.0
        %2740 = vmatprep.subr.mxu0 0.0
        %2741 = vmatpush1.xpose.msra.mxu0 0.0
        %2742 = vmatprep.subr.mxu0 0.0
        %2743 = vmatpush1.xpose.msra.mxu0 0.0
        %2744 = vmatprep.subr.mxu0 0.0
        %2745 = vmatpush1.xpose.msra.mxu0 0.0
        %2746 = vmatprep.subr.mxu0 0.0
        %2747 = vmatpush1.xpose.msra.mxu0 0.0
        %2748 = vmatprep.subr.mxu0 0.0
        %2749 = vmatpush1.xpose.msra.mxu0 0.0
        %2750 = vmatprep.subr.mxu0 0.0
        %2751 = vmatpush1.xpose.msra.mxu0 0.0
        %2752 = vmatprep.subr.mxu0 0.0
        %2753 = vmatpush1.xpose.msra.mxu0 0.0
        %2754 = vmatprep.subr.mxu0 0.0
        %2755 = vmatpush1.xpose.msra.mxu0 0.0
        %2756 = vmatprep.subr.mxu0 0.0
        %2757 = vmatpush1.xpose.msra.mxu0 0.0
        %2758 = vmatprep.subr.mxu0 0.0
        %2759 = vmatpush1.xpose.msra.mxu0 0.0
        %2760 = vmatprep.subr.mxu0 0.0
        %2761 = vmatpush1.xpose.msra.mxu0 0.0
        %2762 = vmatprep.mubr.f32.mxu0 %v549
        %2763 = vmatmul.mubr.f32.gmra.mrb[0].mxu0 %v541
        %v2764 = vpop.f32.mrb[0].mxu0
        %v2765 = vadd.f32 %v2695, %v2764
        %v2766 = vpop.f32.mrb[0].mxu0
        %2767 = vdwg.mxu0
        %2768 = vmatprep.subr.mxu0 %v902
        %2769 = vmatpush1.xpose.msra.mxu0 %v900
        %2770 = vmatprep.subr.mxu0 0.0
        %2771 = vmatpush1.xpose.msra.mxu0 0.0
        %2772 = vmatprep.subr.mxu0 0.0
        %2773 = vmatpush1.xpose.msra.mxu0 0.0
        %2774 = vmatprep.subr.mxu0 0.0
        %2775 = vmatpush1.xpose.msra.mxu0 0.0
        %2776 = vmatprep.subr.mxu0 0.0
        %2777 = vmatpush1.xpose.msra.mxu0 0.0
        %2778 = vmatprep.subr.mxu0 0.0
        %2779 = vmatpush1.xpose.msra.mxu0 0.0
        %2780 = vmatprep.subr.mxu0 0.0
        %2781 = vmatpush1.xpose.msra.mxu0 0.0
        %2782 = vmatprep.subr.mxu0 0.0
        %2783 = vmatpush1.xpose.msra.mxu0 0.0
        %2784 = vmatprep.subr.mxu0 0.0
        %2785 = vmatpush1.xpose.msra.mxu0 0.0
        %2786 = vmatprep.subr.mxu0 0.0
        %2787 = vmatpush1.xpose.msra.mxu0 0.0
        %2788 = vmatprep.subr.mxu0 0.0
        %2789 = vmatpush1.xpose.msra.mxu0 0.0
        %2790 = vmatprep.subr.mxu0 0.0
        %2791 = vmatpush1.xpose.msra.mxu0 0.0
        %2792 = vmatprep.subr.mxu0 0.0
        %2793 = vmatpush1.xpose.msra.mxu0 0.0
        %2794 = vmatprep.subr.mxu0 0.0
        %2795 = vmatpush1.xpose.msra.mxu0 0.0
        %2796 = vmatprep.subr.mxu0 0.0
        %2797 = vmatpush1.xpose.msra.mxu0 0.0
        %2798 = vmatprep.subr.mxu0 0.0
        %2799 = vmatpush1.xpose.msra.mxu0 0.0
        %2800 = vmatprep.subr.mxu0 0.0
        %2801 = vmatpush1.xpose.msra.mxu0 0.0
        %2802 = vmatprep.subr.mxu0 0.0
        %2803 = vmatpush1.xpose.msra.mxu0 0.0
        %2804 = vmatprep.subr.mxu0 0.0
        %2805 = vmatpush1.xpose.msra.mxu0 0.0
        %2806 = vmatprep.subr.mxu0 0.0
        %2807 = vmatpush1.xpose.msra.mxu0 0.0
        %2808 = vmatprep.subr.mxu0 0.0
        %2809 = vmatpush1.xpose.msra.mxu0 0.0
        %2810 = vmatprep.subr.mxu0 0.0
        %2811 = vmatpush1.xpose.msra.mxu0 0.0
        %2812 = vmatprep.subr.mxu0 0.0
        %2813 = vmatpush1.xpose.msra.mxu0 0.0
        %2814 = vmatprep.subr.mxu0 0.0
        %2815 = vmatpush1.xpose.msra.mxu0 0.0
        %2816 = vmatprep.subr.mxu0 0.0
        %2817 = vmatpush1.xpose.msra.mxu0 0.0
        %2818 = vmatprep.subr.mxu0 0.0
        %2819 = vmatpush1.xpose.msra.mxu0 0.0
        %2820 = vmatprep.subr.mxu0 0.0
        %2821 = vmatpush1.xpose.msra.mxu0 0.0
        %2822 = vmatprep.subr.mxu0 0.0
        %2823 = vmatpush1.xpose.msra.mxu0 0.0
        %2824 = vmatprep.subr.mxu0 0.0
        %2825 = vmatpush1.xpose.msra.mxu0 0.0
        %2826 = vmatprep.subr.mxu0 0.0
        %2827 = vmatpush1.xpose.msra.mxu0 0.0
        %2828 = vmatprep.subr.mxu0 0.0
        %2829 = vmatpush1.xpose.msra.mxu0 0.0
        %2830 = vmatprep.subr.mxu0 0.0
        %2831 = vmatpush1.xpose.msra.mxu0 0.0
        %2832 = vmatprep.mubr.f32.mxu0 %v550
        %2833 = vmatmul.mubr.f32.gmra.mrb[0].mxu0 %v548
        %v2834 = vpop.f32.mrb[0].mxu0
        %v2835 = vadd.f32 %v2765, %v2834
        %v2836 = vpop.f32.mrb[0].mxu0
        %2837 = vdwg.mxu0
        %2838 = vmatprep.subr.mxu0 %v918
        %2839 = vmatpush1.xpose.msra.mxu0 %v910
        %2840 = vmatprep.subr.mxu0 0.0
        %2841 = vmatpush1.xpose.msra.mxu0 0.0
        %2842 = vmatprep.subr.mxu0 0.0
        %2843 = vmatpush1.xpose.msra.mxu0 0.0
        %2844 = vmatprep.subr.mxu0 0.0
        %2845 = vmatpush1.xpose.msra.mxu0 0.0
        %2846 = vmatprep.subr.mxu0 0.0
        %2847 = vmatpush1.xpose.msra.mxu0 0.0
        %2848 = vmatprep.subr.mxu0 0.0
        %2849 = vmatpush1.xpose.msra.mxu0 0.0
        %2850 = vmatprep.subr.mxu0 0.0
        %2851 = vmatpush1.xpose.msra.mxu0 0.0
        %2852 = vmatprep.subr.mxu0 0.0
        %2853 = vmatpush1.xpose.msra.mxu0 0.0
        %2854 = vmatprep.subr.mxu0 0.0
        %2855 = vmatpush1.xpose.msra.mxu0 0.0
        %2856 = vmatprep.subr.mxu0 0.0
        %2857 = vmatpush1.xpose.msra.mxu0 0.0
        %2858 = vmatprep.subr.mxu0 0.0
        %2859 = vmatpush1.xpose.msra.mxu0 0.0
        %2860 = vmatprep.subr.mxu0 0.0
        %2861 = vmatpush1.xpose.msra.mxu0 0.0
        %2862 = vmatprep.subr.mxu0 0.0
        %2863 = vmatpush1.xpose.msra.mxu0 0.0
        %2864 = vmatprep.subr.mxu0 0.0
        %2865 = vmatpush1.xpose.msra.mxu0 0.0
        %2866 = vmatprep.subr.mxu0 0.0
        %2867 = vmatpush1.xpose.msra.mxu0 0.0
        %2868 = vmatprep.subr.mxu0 0.0
        %2869 = vmatpush1.xpose.msra.mxu0 0.0
        %2870 = vmatprep.subr.mxu0 0.0
        %2871 = vmatpush1.xpose.msra.mxu0 0.0
        %2872 = vmatprep.subr.mxu0 0.0
        %2873 = vmatpush1.xpose.msra.mxu0 0.0
        %2874 = vmatprep.subr.mxu0 0.0
        %2875 = vmatpush1.xpose.msra.mxu0 0.0
        %2876 = vmatprep.subr.mxu0 0.0
        %2877 = vmatpush1.xpose.msra.mxu0 0.0
        %2878 = vmatprep.subr.mxu0 0.0
        %2879 = vmatpush1.xpose.msra.mxu0 0.0
        %2880 = vmatprep.subr.mxu0 0.0
        %2881 = vmatpush1.xpose.msra.mxu0 0.0
        %2882 = vmatprep.subr.mxu0 0.0
        %2883 = vmatpush1.xpose.msra.mxu0 0.0
        %2884 = vmatprep.subr.mxu0 0.0
        %2885 = vmatpush1.xpose.msra.mxu0 0.0
        %2886 = vmatprep.subr.mxu0 0.0
        %2887 = vmatpush1.xpose.msra.mxu0 0.0
        %2888 = vmatprep.subr.mxu0 0.0
        %2889 = vmatpush1.xpose.msra.mxu0 0.0
        %2890 = vmatprep.subr.mxu0 0.0
        %2891 = vmatpush1.xpose.msra.mxu0 0.0
        %2892 = vmatprep.subr.mxu0 0.0
        %2893 = vmatpush1.xpose.msra.mxu0 0.0
        %2894 = vmatprep.subr.mxu0 0.0
        %2895 = vmatpush1.xpose.msra.mxu0 0.0
        %2896 = vmatprep.subr.mxu0 0.0
        %2897 = vmatpush1.xpose.msra.mxu0 0.0
        %2898 = vmatprep.subr.mxu0 0.0
        %2899 = vmatpush1.xpose.msra.mxu0 0.0
        %2900 = vmatprep.subr.mxu0 0.0
        %2901 = vmatpush1.xpose.msra.mxu0 0.0
        %2902 = vmatprep.mubr.f32.mxu0 %v566
        %2903 = vmatmul.mubr.f32.gmra.mrb[0].mxu0 %v558
        %v2904 = vpop.f32.mrb[0].mxu0
        %v2905 = vadd.f32 %v2835, %v2904
        %v2906 = vpop.f32.mrb[0].mxu0
        %2907 = vdwg.mxu0
        %2908 = vmatprep.subr.mxu0 %v919
        %2909 = vmatpush1.xpose.msra.mxu0 %v917
        %2910 = vmatprep.subr.mxu0 0.0
        %2911 = vmatpush1.xpose.msra.mxu0 0.0
        %2912 = vmatprep.subr.mxu0 0.0
        %2913 = vmatpush1.xpose.msra.mxu0 0.0
        %2914 = vmatprep.subr.mxu0 0.0
        %2915 = vmatpush1.xpose.msra.mxu0 0.0
        %2916 = vmatprep.subr.mxu0 0.0
        %2917 = vmatpush1.xpose.msra.mxu0 0.0
        %2918 = vmatprep.subr.mxu0 0.0
        %2919 = vmatpush1.xpose.msra.mxu0 0.0
        %2920 = vmatprep.subr.mxu0 0.0
        %2921 = vmatpush1.xpose.msra.mxu0 0.0
        %2922 = vmatprep.subr.mxu0 0.0
        %2923 = vmatpush1.xpose.msra.mxu0 0.0
        %2924 = vmatprep.subr.mxu0 0.0
        %2925 = vmatpush1.xpose.msra.mxu0 0.0
        %2926 = vmatprep.subr.mxu0 0.0
        %2927 = vmatpush1.xpose.msra.mxu0 0.0
        %2928 = vmatprep.subr.mxu0 0.0
        %2929 = vmatpush1.xpose.msra.mxu0 0.0
        %2930 = vmatprep.subr.mxu0 0.0
        %2931 = vmatpush1.xpose.msra.mxu0 0.0
        %2932 = vmatprep.subr.mxu0 0.0
        %2933 = vmatpush1.xpose.msra.mxu0 0.0
        %2934 = vmatprep.subr.mxu0 0.0
        %2935 = vmatpush1.xpose.msra.mxu0 0.0
        %2936 = vmatprep.subr.mxu0 0.0
        %2937 = vmatpush1.xpose.msra.mxu0 0.0
        %2938 = vmatprep.subr.mxu0 0.0
        %2939 = vmatpush1.xpose.msra.mxu0 0.0
        %2940 = vmatprep.subr.mxu0 0.0
        %2941 = vmatpush1.xpose.msra.mxu0 0.0
        %2942 = vmatprep.subr.mxu0 0.0
        %2943 = vmatpush1.xpose.msra.mxu0 0.0
        %2944 = vmatprep.subr.mxu0 0.0
        %2945 = vmatpush1.xpose.msra.mxu0 0.0
        %2946 = vmatprep.subr.mxu0 0.0
        %2947 = vmatpush1.xpose.msra.mxu0 0.0
        %2948 = vmatprep.subr.mxu0 0.0
        %2949 = vmatpush1.xpose.msra.mxu0 0.0
        %2950 = vmatprep.subr.mxu0 0.0
        %2951 = vmatpush1.xpose.msra.mxu0 0.0
        %2952 = vmatprep.subr.mxu0 0.0
        %2953 = vmatpush1.xpose.msra.mxu0 0.0
        %2954 = vmatprep.subr.mxu0 0.0
        %2955 = vmatpush1.xpose.msra.mxu0 0.0
        %2956 = vmatprep.subr.mxu0 0.0
        %2957 = vmatpush1.xpose.msra.mxu0 0.0
        %2958 = vmatprep.subr.mxu0 0.0
        %2959 = vmatpush1.xpose.msra.mxu0 0.0
        %2960 = vmatprep.subr.mxu0 0.0
        %2961 = vmatpush1.xpose.msra.mxu0 0.0
        %2962 = vmatprep.subr.mxu0 0.0
        %2963 = vmatpush1.xpose.msra.mxu0 0.0
        %2964 = vmatprep.subr.mxu0 0.0
        %2965 = vmatpush1.xpose.msra.mxu0 0.0
        %2966 = vmatprep.subr.mxu0 0.0
        %2967 = vmatpush1.xpose.msra.mxu0 0.0
        %2968 = vmatprep.subr.mxu0 0.0
        %2969 = vmatpush1.xpose.msra.mxu0 0.0
        %2970 = vmatprep.subr.mxu0 0.0
        %2971 = vmatpush1.xpose.msra.mxu0 0.0
        %2972 = vmatprep.mubr.f32.mxu0 %v567
        %2973 = vmatmul.mubr.f32.gmra.mrb[0].mxu0 %v565
        %v2974 = vpop.f32.mrb[0].mxu0
        %v2975 = vadd.f32 %v2905, %v2974
        %v2976 = vpop.f32.mrb[0].mxu0
        %2977 = vdwg.mxu0
        %2978 = vmatprep.subr.mxu0 %v935
        %2979 = vmatpush1.xpose.msra.mxu0 %v927
        %2980 = vmatprep.subr.mxu0 0.0
        %2981 = vmatpush1.xpose.msra.mxu0 0.0
        %2982 = vmatprep.subr.mxu0 0.0
        %2983 = vmatpush1.xpose.msra.mxu0 0.0
        %2984 = vmatprep.subr.mxu0 0.0
        %2985 = vmatpush1.xpose.msra.mxu0 0.0
        %2986 = vmatprep.subr.mxu0 0.0
        %2987 = vmatpush1.xpose.msra.mxu0 0.0
        %2988 = vmatprep.subr.mxu0 0.0
        %2989 = vmatpush1.xpose.msra.mxu0 0.0
        %2990 = vmatprep.subr.mxu0 0.0
        %2991 = vmatpush1.xpose.msra.mxu0 0.0
        %2992 = vmatprep.subr.mxu0 0.0
        %2993 = vmatpush1.xpose.msra.mxu0 0.0
        %2994 = vmatprep.subr.mxu0 0.0
        %2995 = vmatpush1.xpose.msra.mxu0 0.0
        %2996 = vmatprep.subr.mxu0 0.0
        %2997 = vmatpush1.xpose.msra.mxu0 0.0
        %2998 = vmatprep.subr.mxu0 0.0
        %2999 = vmatpush1.xpose.msra.mxu0 0.0
        %3000 = vmatprep.subr.mxu0 0.0
        %3001 = vmatpush1.xpose.msra.mxu0 0.0
        %3002 = vmatprep.subr.mxu0 0.0
        %3003 = vmatpush1.xpose.msra.mxu0 0.0
        %3004 = vmatprep.subr.mxu0 0.0
        %3005 = vmatpush1.xpose.msra.mxu0 0.0
        %3006 = vmatprep.subr.mxu0 0.0
        %3007 = vmatpush1.xpose.msra.mxu0 0.0
        %3008 = vmatprep.subr.mxu0 0.0
        %3009 = vmatpush1.xpose.msra.mxu0 0.0
        %3010 = vmatprep.subr.mxu0 0.0
        %3011 = vmatpush1.xpose.msra.mxu0 0.0
        %3012 = vmatprep.subr.mxu0 0.0
        %3013 = vmatpush1.xpose.msra.mxu0 0.0
        %3014 = vmatprep.subr.mxu0 0.0
        %3015 = vmatpush1.xpose.msra.mxu0 0.0
        %3016 = vmatprep.subr.mxu0 0.0
        %3017 = vmatpush1.xpose.msra.mxu0 0.0
        %3018 = vmatprep.subr.mxu0 0.0
        %3019 = vmatpush1.xpose.msra.mxu0 0.0
        %3020 = vmatprep.subr.mxu0 0.0
        %3021 = vmatpush1.xpose.msra.mxu0 0.0
        %3022 = vmatprep.subr.mxu0 0.0
        %3023 = vmatpush1.xpose.msra.mxu0 0.0
        %3024 = vmatprep.subr.mxu0 0.0
        %3025 = vmatpush1.xpose.msra.mxu0 0.0
        %3026 = vmatprep.subr.mxu0 0.0
        %3027 = vmatpush1.xpose.msra.mxu0 0.0
        %3028 = vmatprep.subr.mxu0 0.0
        %3029 = vmatpush1.xpose.msra.mxu0 0.0
        %3030 = vmatprep.subr.mxu0 0.0
        %3031 = vmatpush1.xpose.msra.mxu0 0.0
        %3032 = vmatprep.subr.mxu0 0.0
        %3033 = vmatpush1.xpose.msra.mxu0 0.0
        %3034 = vmatprep.subr.mxu0 0.0
        %3035 = vmatpush1.xpose.msra.mxu0 0.0
        %3036 = vmatprep.subr.mxu0 0.0
        %3037 = vmatpush1.xpose.msra.mxu0 0.0
        %3038 = vmatprep.subr.mxu0 0.0
        %3039 = vmatpush1.xpose.msra.mxu0 0.0
        %3040 = vmatprep.subr.mxu0 0.0
        %3041 = vmatpush1.xpose.msra.mxu0 0.0
        %3042 = vmatprep.mubr.f32.mxu0 %v583
        %3043 = vmatmul.mubr.f32.gmra.mrb[0].mxu0 %v575
        %v3044 = vpop.f32.mrb[0].mxu0
        %v3045 = vadd.f32 %v2975, %v3044
        %v3046 = vpop.f32.mrb[0].mxu0
        %3047 = vdwg.mxu0
        %3048 = vmatprep.subr.mxu0 %v936
        %3049 = vmatpush1.xpose.msra.mxu0 %v934
        %3050 = vmatprep.subr.mxu0 0.0
        %3051 = vmatpush1.xpose.msra.mxu0 0.0
        %3052 = vmatprep.subr.mxu0 0.0
        %3053 = vmatpush1.xpose.msra.mxu0 0.0
        %3054 = vmatprep.subr.mxu0 0.0
        %3055 = vmatpush1.xpose.msra.mxu0 0.0
        %3056 = vmatprep.subr.mxu0 0.0
        %3057 = vmatpush1.xpose.msra.mxu0 0.0
        %3058 = vmatprep.subr.mxu0 0.0
        %3059 = vmatpush1.xpose.msra.mxu0 0.0
        %3060 = vmatprep.subr.mxu0 0.0
        %3061 = vmatpush1.xpose.msra.mxu0 0.0
        %3062 = vmatprep.subr.mxu0 0.0
        %3063 = vmatpush1.xpose.msra.mxu0 0.0
        %3064 = vmatprep.subr.mxu0 0.0
        %3065 = vmatpush1.xpose.msra.mxu0 0.0
        %3066 = vmatprep.subr.mxu0 0.0
        %3067 = vmatpush1.xpose.msra.mxu0 0.0
        %3068 = vmatprep.subr.mxu0 0.0
        %3069 = vmatpush1.xpose.msra.mxu0 0.0
        %3070 = vmatprep.subr.mxu0 0.0
        %3071 = vmatpush1.xpose.msra.mxu0 0.0
        %3072 = vmatprep.subr.mxu0 0.0
        %3073 = vmatpush1.xpose.msra.mxu0 0.0
        %3074 = vmatprep.subr.mxu0 0.0
        %3075 = vmatpush1.xpose.msra.mxu0 0.0
        %3076 = vmatprep.subr.mxu0 0.0
        %3077 = vmatpush1.xpose.msra.mxu0 0.0
        %3078 = vmatprep.subr.mxu0 0.0
        %3079 = vmatpush1.xpose.msra.mxu0 0.0
        %3080 = vmatprep.subr.mxu0 0.0
        %3081 = vmatpush1.xpose.msra.mxu0 0.0
        %3082 = vmatprep.subr.mxu0 0.0
        %3083 = vmatpush1.xpose.msra.mxu0 0.0
        %3084 = vmatprep.subr.mxu0 0.0
        %3085 = vmatpush1.xpose.msra.mxu0 0.0
        %3086 = vmatprep.subr.mxu0 0.0
        %3087 = vmatpush1.xpose.msra.mxu0 0.0
        %3088 = vmatprep.subr.mxu0 0.0
        %3089 = vmatpush1.xpose.msra.mxu0 0.0
        %3090 = vmatprep.subr.mxu0 0.0
        %3091 = vmatpush1.xpose.msra.mxu0 0.0
        %3092 = vmatprep.subr.mxu0 0.0
        %3093 = vmatpush1.xpose.msra.mxu0 0.0
        %3094 = vmatprep.subr.mxu0 0.0
        %3095 = vmatpush1.xpose.msra.mxu0 0.0
        %3096 = vmatprep.subr.mxu0 0.0
        %3097 = vmatpush1.xpose.msra.mxu0 0.0
        %3098 = vmatprep.subr.mxu0 0.0
        %3099 = vmatpush1.xpose.msra.mxu0 0.0
        %3100 = vmatprep.subr.mxu0 0.0
        %3101 = vmatpush1.xpose.msra.mxu0 0.0
        %3102 = vmatprep.subr.mxu0 0.0
        %3103 = vmatpush1.xpose.msra.mxu0 0.0
        %3104 = vmatprep.subr.mxu0 0.0
        %3105 = vmatpush1.xpose.msra.mxu0 0.0
        %3106 = vmatprep.subr.mxu0 0.0
        %3107 = vmatpush1.xpose.msra.mxu0 0.0
        %3108 = vmatprep.subr.mxu0 0.0
        %3109 = vmatpush1.xpose.msra.mxu0 0.0
        %3110 = vmatprep.subr.mxu0 0.0
        %3111 = vmatpush1.xpose.msra.mxu0 0.0
        %3112 = vmatprep.mubr.f32.mxu0 %v584
        %3113 = vmatmul.mubr.f32.gmra.mrb[0].mxu0 %v582
        %v3114 = vpop.f32.mrb[0].mxu0
        %v3115 = vadd.f32 %v3045, %v3114
        %v3116 = vpop.f32.mrb[0].mxu0
        %3117 = vdwg.mxu0
        %3118 = vmatprep.subr.mxu0 %v952
        %3119 = vmatpush1.xpose.msra.mxu0 %v944
        %3120 = vmatprep.subr.mxu0 0.0
        %3121 = vmatpush1.xpose.msra.mxu0 0.0
        %3122 = vmatprep.subr.mxu0 0.0
        %3123 = vmatpush1.xpose.msra.mxu0 0.0
        %3124 = vmatprep.subr.mxu0 0.0
        %3125 = vmatpush1.xpose.msra.mxu0 0.0
        %3126 = vmatprep.subr.mxu0 0.0
        %3127 = vmatpush1.xpose.msra.mxu0 0.0
        %3128 = vmatprep.subr.mxu0 0.0
        %3129 = vmatpush1.xpose.msra.mxu0 0.0
        %3130 = vmatprep.subr.mxu0 0.0
        %3131 = vmatpush1.xpose.msra.mxu0 0.0
        %3132 = vmatprep.subr.mxu0 0.0
        %3133 = vmatpush1.xpose.msra.mxu0 0.0
        %3134 = vmatprep.subr.mxu0 0.0
        %3135 = vmatpush1.xpose.msra.mxu0 0.0
        %3136 = vmatprep.subr.mxu0 0.0
        %3137 = vmatpush1.xpose.msra.mxu0 0.0
        %3138 = vmatprep.subr.mxu0 0.0
        %3139 = vmatpush1.xpose.msra.mxu0 0.0
        %3140 = vmatprep.subr.mxu0 0.0
        %3141 = vmatpush1.xpose.msra.mxu0 0.0
        %3142 = vmatprep.subr.mxu0 0.0
        %3143 = vmatpush1.xpose.msra.mxu0 0.0
        %3144 = vmatprep.subr.mxu0 0.0
        %3145 = vmatpush1.xpose.msra.mxu0 0.0
        %3146 = vmatprep.subr.mxu0 0.0
        %3147 = vmatpush1.xpose.msra.mxu0 0.0
        %3148 = vmatprep.subr.mxu0 0.0
        %3149 = vmatpush1.xpose.msra.mxu0 0.0
        %3150 = vmatprep.subr.mxu0 0.0
        %3151 = vmatpush1.xpose.msra.mxu0 0.0
        %3152 = vmatprep.subr.mxu0 0.0
        %3153 = vmatpush1.xpose.msra.mxu0 0.0
        %3154 = vmatprep.subr.mxu0 0.0
        %3155 = vmatpush1.xpose.msra.mxu0 0.0
        %3156 = vmatprep.subr.mxu0 0.0
        %3157 = vmatpush1.xpose.msra.mxu0 0.0
        %3158 = vmatprep.subr.mxu0 0.0
        %3159 = vmatpush1.xpose.msra.mxu0 0.0
        %3160 = vmatprep.subr.mxu0 0.0
        %3161 = vmatpush1.xpose.msra.mxu0 0.0
        %3162 = vmatprep.subr.mxu0 0.0
        %3163 = vmatpush1.xpose.msra.mxu0 0.0
        %3164 = vmatprep.subr.mxu0 0.0
        %3165 = vmatpush1.xpose.msra.mxu0 0.0
        %3166 = vmatprep.subr.mxu0 0.0
        %3167 = vmatpush1.xpose.msra.mxu0 0.0
        %3168 = vmatprep.subr.mxu0 0.0
        %3169 = vmatpush1.xpose.msra.mxu0 0.0
        %3170 = vmatprep.subr.mxu0 0.0
        %3171 = vmatpush1.xpose.msra.mxu0 0.0
        %3172 = vmatprep.subr.mxu0 0.0
        %3173 = vmatpush1.xpose.msra.mxu0 0.0
        %3174 = vmatprep.subr.mxu0 0.0
        %3175 = vmatpush1.xpose.msra.mxu0 0.0
        %3176 = vmatprep.subr.mxu0 0.0
        %3177 = vmatpush1.xpose.msra.mxu0 0.0
        %3178 = vmatprep.subr.mxu0 0.0
        %3179 = vmatpush1.xpose.msra.mxu0 0.0
        %3180 = vmatprep.subr.mxu0 0.0
        %3181 = vmatpush1.xpose.msra.mxu0 0.0
        %3182 = vmatprep.mubr.f32.mxu0 %v600
        %3183 = vmatmul.mubr.f32.gmra.mrb[0].mxu0 %v592
        %v3184 = vpop.f32.mrb[0].mxu0
        %v3185 = vadd.f32 %v3115, %v3184
        %v3186 = vpop.f32.mrb[0].mxu0
        %3187 = vdwg.mxu0
        %3188 = vmatprep.subr.mxu0 %v953
        %3189 = vmatpush1.xpose.msra.mxu0 %v951
        %3190 = vmatprep.subr.mxu0 0.0
        %3191 = vmatpush1.xpose.msra.mxu0 0.0
        %3192 = vmatprep.subr.mxu0 0.0
        %3193 = vmatpush1.xpose.msra.mxu0 0.0
        %3194 = vmatprep.subr.mxu0 0.0
        %3195 = vmatpush1.xpose.msra.mxu0 0.0
        %3196 = vmatprep.subr.mxu0 0.0
        %3197 = vmatpush1.xpose.msra.mxu0 0.0
        %3198 = vmatprep.subr.mxu0 0.0
        %3199 = vmatpush1.xpose.msra.mxu0 0.0
        %3200 = vmatprep.subr.mxu0 0.0
        %3201 = vmatpush1.xpose.msra.mxu0 0.0
        %3202 = vmatprep.subr.mxu0 0.0
        %3203 = vmatpush1.xpose.msra.mxu0 0.0
        %3204 = vmatprep.subr.mxu0 0.0
        %3205 = vmatpush1.xpose.msra.mxu0 0.0
        %3206 = vmatprep.subr.mxu0 0.0
        %3207 = vmatpush1.xpose.msra.mxu0 0.0
        %3208 = vmatprep.subr.mxu0 0.0
        %3209 = vmatpush1.xpose.msra.mxu0 0.0
        %3210 = vmatprep.subr.mxu0 0.0
        %3211 = vmatpush1.xpose.msra.mxu0 0.0
        %3212 = vmatprep.subr.mxu0 0.0
        %3213 = vmatpush1.xpose.msra.mxu0 0.0
        %3214 = vmatprep.subr.mxu0 0.0
        %3215 = vmatpush1.xpose.msra.mxu0 0.0
        %3216 = vmatprep.subr.mxu0 0.0
        %3217 = vmatpush1.xpose.msra.mxu0 0.0
        %3218 = vmatprep.subr.mxu0 0.0
        %3219 = vmatpush1.xpose.msra.mxu0 0.0
        %3220 = vmatprep.subr.mxu0 0.0
        %3221 = vmatpush1.xpose.msra.mxu0 0.0
        %3222 = vmatprep.subr.mxu0 0.0
        %3223 = vmatpush1.xpose.msra.mxu0 0.0
        %3224 = vmatprep.subr.mxu0 0.0
        %3225 = vmatpush1.xpose.msra.mxu0 0.0
        %3226 = vmatprep.subr.mxu0 0.0
        %3227 = vmatpush1.xpose.msra.mxu0 0.0
        %3228 = vmatprep.subr.mxu0 0.0
        %3229 = vmatpush1.xpose.msra.mxu0 0.0
        %3230 = vmatprep.subr.mxu0 0.0
        %3231 = vmatpush1.xpose.msra.mxu0 0.0
        %3232 = vmatprep.subr.mxu0 0.0
        %3233 = vmatpush1.xpose.msra.mxu0 0.0
        %3234 = vmatprep.subr.mxu0 0.0
        %3235 = vmatpush1.xpose.msra.mxu0 0.0
        %3236 = vmatprep.subr.mxu0 0.0
        %3237 = vmatpush1.xpose.msra.mxu0 0.0
        %3238 = vmatprep.subr.mxu0 0.0
        %3239 = vmatpush1.xpose.msra.mxu0 0.0
        %3240 = vmatprep.subr.mxu0 0.0
        %3241 = vmatpush1.xpose.msra.mxu0 0.0
        %3242 = vmatprep.subr.mxu0 0.0
        %3243 = vmatpush1.xpose.msra.mxu0 0.0
        %3244 = vmatprep.subr.mxu0 0.0
        %3245 = vmatpush1.xpose.msra.mxu0 0.0
        %3246 = vmatprep.subr.mxu0 0.0
        %3247 = vmatpush1.xpose.msra.mxu0 0.0
        %3248 = vmatprep.subr.mxu0 0.0
        %3249 = vmatpush1.xpose.msra.mxu0 0.0
        %3250 = vmatprep.subr.mxu0 0.0
        %3251 = vmatpush1.xpose.msra.mxu0 0.0
        %3252 = vmatprep.mubr.f32.mxu0 %v601
        %3253 = vmatmul.mubr.f32.gmra.mrb[0].mxu0 %v599
        %v3254 = vpop.f32.mrb[0].mxu0
        %v3255 = vadd.f32 %v3185, %v3254
        %v3256 = vpop.f32.mrb[0].mxu0
        %3257 = vdwg.mxu0
        %v3258 = vadd.f32 %v313, %v3255
        %vm3259 = vcmask 9216
        %3260 = vst.msk [vmem:[#allocation2] sm:$0x3] %vm3259, %v3258
        %p3261 = scmp.eq.s32.totalorder %s29, 3
        // Predicated region
        $region45: #{tpu_custom_call.1} parent=31 // pred_check
          %p3262 = pneg %p3261
        $region46: #{tpu_custom_call.1} parent=31 // pred_check_branch
          %3264 = sbr.rel (%p3262) target = $region48
        $region47: #{tpu_custom_call.1} parent=31 // pred_region
          %v3265 = vld [vmem:[#allocation2] sm:$0x3]
          %v3266 = vld [vmem:[%s2] sm:$0x1]
          %v3268 = vlaneseq
          %v3269 = vshrl.u32 %v3268, 7
          %v3270 = vsub.s32 0, %v3269
          %v3271 = vrot.slane %v3266, %v3270
          %v3273 = vadd.f32 %v3265, %v3271
          %3274 = vst.msk [vmem:[#allocation8] sm:$0x3] %vm3259, %v3273
          %v3275 = vsel %vm3259, %v3273, -inf
          %3276 = vmax.xlane.f32.xlu0 %v3275
          %v3277 = vpop.xlane.xlu0 %3276
          %v3278 = vsub.f32 %v3273, %v3277
          %v3279 = vmul.f32 %v3278, 1.442695
          %v3280 = vpow.pop %v3279
          %v3281 = vsel %vm3259, %v3280, 0.0
          %3282 = vadd.xlane.f32.xlu0 %v3281
          %v3283 = vpop.xlane.xlu0 %3282
          %v3284 = vlog2.pop %v3283
          %v3285 = vmul.f32 %v3284, 0.6931472
          %v3286 = vsub.f32 %v3278, %v3285
          %3287 = vst.msk [vmem:[#allocation9] sm:$0x3] %vm3259, %v3286
        $region48: #{tpu_custom_call.1} parent=31 // pred_fallthru
          _
        // Predicated region
        $region49: #{tpu_custom_call.1} parent=31 // pred_check
          %p3288 = pneg %p129
        $region50: #{tpu_custom_call.1} parent=31 // pred_check_branch
          %3290 = sbr.rel (%p3288) target = $region52
        $region51: #{tpu_custom_call.1} parent=31 // pred_region
          %s3292 = ssub.s32 32, 32
          %3293 = vsyncadd [#allocation5], %s3292
          %s3294 = smul.addr %s28, 32
          %s3295 = scalar_lea.hbm %s3, %s3294
          %s3297 = sshll.u32 [#allocation8], 4
          %s3298 = int_to_ptr.vmem [resolvable:$true] %s3297
          %3300 = dma.vmem_to_hbm [thread:$0]  %s3298, 32, %s3295, [#allocation5]
        $region52: #{tpu_custom_call.1} parent=31 // pred_fallthru
          _
        // Predicated region
        $region53: #{tpu_custom_call.1} parent=31 // pred_check
          %p3301 = pneg %p155
        $region54: #{tpu_custom_call.1} parent=31 // pred_check_branch
          %3303 = sbr.rel (%p3301) target = $region56
        $region55: #{tpu_custom_call.1} parent=31 // pred_region
          %s3305 = ssub.s32 32, 32
          %3306 = vsyncadd [#allocation10], %s3305
          %s3307 = smul.addr %s28, 32
          %s3308 = scalar_lea.hbm %s4, %s3307
          %s3310 = sshll.u32 [#allocation9], 4
          %s3311 = int_to_ptr.vmem [resolvable:$true] %s3310
          %3313 = dma.vmem_to_hbm [thread:$0]  %s3311, 32, %s3308, [#allocation10]
        $region56: #{tpu_custom_call.1} parent=31 // pred_fallthru
          _
        // Predicated region
        $region57: #{tpu_custom_call.1} parent=31 // pred_check
          %p3314 = pneg %p129
        $region58: #{tpu_custom_call.1} parent=31 // pred_check_branch
          %3316 = sbr.rel (%p3314) target = $region60
        $region59: #{tpu_custom_call.1} parent=31 // pred_region
          %3317 = dma.done [#allocation5], 32
        $region60: #{tpu_custom_call.1} parent=31 // pred_fallthru
          _
        // Predicated region
        $region61: #{tpu_custom_call.1} parent=31 // pred_check
          %p3318 = pneg %p155
        $region62: #{tpu_custom_call.1} parent=31 // pred_check_branch
          %3320 = sbr.rel (%p3318) target = $region64
        $region63: #{tpu_custom_call.1} parent=31 // pred_region
          %3321 = dma.done [#allocation10], 32
        $region64: #{tpu_custom_call.1} parent=31 // pred_fallthru
          _
      $region32: #{tpu_custom_call.1} parent=5 // pred_fallthru
        _
      %p3322 = scmp.le.s32.totalorder 2, %s19
      // Predicated region
      $region65: #{tpu_custom_call.1} parent=5 // pred_check
        %p3323 = pneg %p3322
      $region66: #{tpu_custom_call.1} parent=5 // pred_check_branch
        %3325 = sbr.rel (%p3323) target = $region68
      $region67: #{tpu_custom_call.1} parent=5 // pred_region
        %s3326 = ssub.s32 %s19, 2
      $region68: #{tpu_custom_call.1} parent=5 // pred_fallthru
        _
    $region6: #{tpu_custom_call.1} parent=1 // loop_footer
      %s23 = sadd.s32 1, %s19
    $region7: #{tpu_custom_call.1} parent=1 // loop_footer_branch
      %18 = sbr.rel target = $region3
    $region8: #{tpu_custom_call.1} parent=1 // loop_exit
      _
    %3327 = vsyncpa [#allocation4], 1
    %s3328 = scalar_lea.sflag [#allocation4], 1
    %3329 = vsyncpa %s3328, 1
    %3330 = vsyncpa [#allocation7], 1
    %s3331 = scalar_lea.sflag [#allocation7], 1
    %3332 = vsyncpa %s3331, 1
    %3333 = vsyncpa [#allocation5], 1
    %s3334 = scalar_lea.sflag [#allocation5], 1
    %3335 = vsyncpa %s3334, 1
    %3336 = vsyncpa [#allocation10], 1

</llo_original>
